<compile_context>
chip_gen: v6e
topology: v6e:2x2x1
jax: 0.10.0
libtpu: 0.0.40
codegen_flags: <defaults>
</compile_context>

<pallas_src>
import jax
import jax.numpy as jnp
from jax.experimental import pallas as pl
from jax.experimental.pallas import tpu as pltpu

C_IN = 100    # module input_dim / conv channel count
C_PAD = 128   # channel dim padded to the TPU lane width
K = 3         # Conv1d kernel size


def _round_up(x, m):
    return ((x + m - 1) // m) * m


def _pool_out(l):
    # Conv1d(k=3, valid) followed by MaxPool1d(k=3, stride=2)
    return ((l - 2) - 3) // 2 + 1


def _conv_relu_slab(x_bf16, w_ref, b_ref):
    """Valid Conv1d(k=3) + bias + ReLU over a batched (rows, C_PAD) slab.

    x_bf16: (R, C_PAD) bf16 value, samples stacked along rows with a fixed pitch.
    w_ref:  (K, C_PAD, C_PAD) bf16 ref (tap, Cin, Cout).  b_ref: (1, C_PAD) f32 ref.
    Returns (R - 2, C_PAD) f32.  The tap shift is applied to the f32 matmul outputs
    (y_k[j + k]) so the packed bf16 input is only ever consumed whole / offset-0.
    Rows that straddle a sample boundary are garbage and are never read downstream.
    """
    r = x_bf16.shape[0]
    m = r - (K - 1)
    y0 = jnp.dot(x_bf16, w_ref[0], preferred_element_type=jnp.float32)
    y1 = jnp.dot(x_bf16, w_ref[1], preferred_element_type=jnp.float32)
    y2 = jnp.dot(x_bf16, w_ref[2], preferred_element_type=jnp.float32)
    acc = y0[0:m] + y1[1:1 + m] + y2[2:2 + m]
    return jnp.maximum(acc + b_ref[...], 0.0)


def _pool_window_store(h, dst_ref):
    """3-wide sliding max along rows (one batched VPU max) stored into dst_ref[0 : m-2).

    MaxPool1d(3, 2)'s stride-2 downsample is NOT applied here; it is folded into the
    single whole-tile stride-2 read that feeds the next conv layer.
    """
    m = h.shape[0]
    p3 = jnp.maximum(jnp.maximum(h[0:m - 2], h[1:m - 1]), h[2:m])
    dst_ref[pl.ds(0, m - 2), :] = p3


def simple_cnn_kernel(x_ref,
                      w1_ref, b1_ref, w2_ref, b2_ref,
                      w3_ref, b3_ref, w4_ref, b4_ref,
                      wfc_ref, bfc_ref,
                      out_ref,
                      s0_ref, s1_ref):
    """x_ref: (tb*P0, C_PAD) bf16 batch-tile slab (per-sample pitch P0).  out: (tb, 1)."""
    tb = out_ref.shape[0]
    p0 = x_ref.shape[0] // tb      # per-sample pitch at the input (multiple of 8)
    p1 = p0 // 2                   # pitch after pool 1
    p2 = p0 // 4                   # pitch after pool 2

    # ---- layer 1: Conv1d + ReLU over the whole batch tile; pool-window max -> s0 ----
    h = _conv_relu_slab(x_ref[...], w1_ref, b1_ref)
    _pool_window_store(h, s0_ref)

    # ---- layer 2: pool-1's stride-2 downsample folded into ONE whole-tile read ------
    x2 = s0_ref[pl.ds(0, tb * p1, stride=2), :].astype(jnp.bfloat16)
    h = _conv_relu_slab(x2, w2_ref, b2_ref)
    _pool_window_store(h, s1_ref)

    # ---- layer 3 ---------------------------------------------------------------------
    x3 = s1_ref[pl.ds(0, tb * p2, stride=2), :].astype(jnp.bfloat16)
    h = _conv_relu_slab(x3, w3_ref, b3_ref)
    _pool_window_store(h, s0_ref)

    # ---- layer 4 + fc1: only the position-0 conv output feeds Linear(100, 1), so ----
    # gather just the 3 needed pooled rows per sample (stride p2 in s0) and run three
    # (tb, 128) @ (128, 128) matmuls instead of the full slab.
    acc = jnp.dot(s0_ref[pl.ds(0, tb, stride=p2), :].astype(jnp.bfloat16),
                  w4_ref[0], preferred_element_type=jnp.float32)
    acc += jnp.dot(s0_ref[pl.ds(2, tb, stride=p2), :].astype(jnp.bfloat16),
                   w4_ref[1], preferred_element_type=jnp.float32)
    acc += jnp.dot(s0_ref[pl.ds(4, tb, stride=p2), :].astype(jnp.bfloat16),
                   w4_ref[2], preferred_element_type=jnp.float32)
    feats = jnp.maximum(acc + b4_ref[...], 0.0)            # (tb, C_PAD) == flatten()

    # Linear(100, 1): one batched VPU multiply + lane reduction + one (tb, 1) store.
    out_ref[...] = (jnp.sum(feats * wfc_ref[...], axis=-1, keepdims=True)
                    + bfc_ref[...])


def prepare_params(params):
    """One-time re-layout of the PyTorch-style parameters for the kernel (call once).

    * embedding: lane-padded 100 -> 128, one appended all-zero pad-id row, bf16
    * conv weights: (Cout, Cin, K) -> (K, Cin, Cout), zero-padded to 128x128, bf16
    * biases / fc weights: lane-padded, f32
    """
    prep = {"pad_id": int(params["emb"].shape[0])}
    prep["emb"] = jnp.pad(params["emb"].astype(jnp.float32),
                          ((0, 1), (0, C_PAD - C_IN))).astype(jnp.bfloat16)
    for i in range(4):
        w = jnp.transpose(params[f"w{i}"], (2, 1, 0))                  # (K, Cin, Cout)
        w = jnp.pad(w, ((0, 0), (0, C_PAD - C_IN), (0, C_PAD - C_IN)))
        prep[f"w{i}"] = w.astype(jnp.bfloat16)
        prep[f"b{i}"] = jnp.pad(params[f"b{i}"], (0, C_PAD - C_IN)
                                ).reshape(1, C_PAD).astype(jnp.float32)
    prep["wfc"] = jnp.pad(params["wfc"],
                          ((0, 0), (0, C_PAD - C_IN))).astype(jnp.float32)
    prep["bfc"] = params["bfc"].reshape(1, 1).astype(jnp.float32)
    return prep


def simple_cnn_forward(ids, prep, *, batch_tile=None):
    """ids: (B, L) int32 token indices.  Returns (B, 1) float32 (fc1 output)."""
    B, L = ids.shape
    l3 = _pool_out(_pool_out(_pool_out(L)))
    assert l3 - (K - 1) == 1, (
        f"simple_CNN's Linear(100, 1) requires the conv/pool stack to reduce the "
        f"sequence length to exactly 1 (got L={L})")

    # Per-sample row pitch, multiple of 8 so (a) the batch-tile slab is always
    # (8, 128)-aligned for any tb and (b) the pitch stays even through both stride-2
    # pool folds (P0 even, P0/2 even).
    p0 = _round_up(L, 8)

    # Batch tile: large (big MXU M, amortized grid overhead), but >= 2 grid steps when
    # B allows it so v7x can shard the batch over both TensorCores.  Multiple of 8 so
    # the (tb, 1) output block is sublane-aligned.
    if batch_tile is None:
        tb = min(128, _round_up(max(pl.cdiv(B, 2), 1), 8))
    else:
        tb = _round_up(batch_tile, 8)
    nb = pl.cdiv(B, tb)
    b_pad = nb * tb

    # Embedding gather straight out of the once-prepared bf16 table; batch / sequence
    # padding is done on the int32 ids (pad_id -> all-zero embedding row), not on the
    # activations.
    # TODO(synk): fuse this gather into the kernel (PrefetchScalarGridSpec with ids in
    # SMEM driving per-row embedding DMA) to remove the (B, p0, 128) HBM round trip.
    ids_p = jnp.pad(ids.astype(jnp.int32), ((0, b_pad - B), (0, p0 - L)),
                    constant_values=prep["pad_id"])
    x_slab = jnp.take(prep["emb"], ids_p.reshape(-1), axis=0)    # (b_pad*p0, 128) bf16

    def _const(shape):
        return pl.BlockSpec(shape, lambda i: (0,) * len(shape))

    in_specs = [pl.BlockSpec((tb * p0, C_PAD), lambda i: (i, 0))]
    conv_args = []
    for i in range(4):
        in_specs += [_const((K, C_PAD, C_PAD)), _const((1, C_PAD))]
        conv_args += [prep[f"w{i}"], prep[f"b{i}"]]
    in_specs += [_const((1, C_PAD)), _const((1, 1))]

    out = pl.pallas_call(
        simple_cnn_kernel,
        out_shape=jax.ShapeDtypeStruct((b_pad, 1), jnp.float32),
        grid=(nb,),
        in_specs=in_specs,
        out_specs=pl.BlockSpec((tb, 1), lambda i: (i, 0)),
        scratch_shapes=[
            # f32 on purpose: the stride-2 pool reads stay on 32-bit sublane elements.
            pltpu.VMEM((tb * p0, C_PAD), jnp.float32),          # pool slab, layers 1 & 3
            pltpu.VMEM((tb * (p0 // 2), C_PAD), jnp.float32),   # pool slab, layer 2
        ],
        compiler_params=pltpu.CompilerParams(
            dimension_semantics=("parallel",),
            vmem_limit_bytes=48 * 1024 * 1024),
    )(x_slab, *conv_args, prep["wfc"], prep["bfc"])
    return out[:B]


def reference_forward(ids, params):
    """Pure-JAX reference mirroring the PyTorch module exactly (NCL layout, f32)."""
    x = jnp.take(params["emb"], ids, axis=0)          # (B, L, C)
    x = jnp.transpose(x, (0, 2, 1))                   # (B, C, L)  == x_in.transpose(1, 2)
    for i in range(4):
        x = jax.lax.conv_general_dilated(
            x, params[f"w{i}"], window_strides=(1,), padding="VALID",
            dimension_numbers=("NCH", "OIH", "NCH"),
            precision=jax.lax.Precision.HIGHEST)
        x = x + params[f"b{i}"][None, :, None]
        x = jnp.maximum(x, 0.0)
        if i < 3:
            x = jax.lax.reduce_window(x, -jnp.inf, jax.lax.max,
                                      (1, 1, 3), (1, 1, 2), "VALID")
    bsz = x.shape[0]
    x = x.reshape(bsz, -1)                            # (B, 100)
    return x @ params["wfc"].T + params["bfc"]        # Linear(100, 1) -> (B, 1)


def init_params(key):
    ks = jax.random.split(key, 11)
    params = {"emb": 0.5 * jax.random.normal(ks[0], (10002, C_IN), jnp.float32)}
    for i in range(4):
        params[f"w{i}"] = 0.05 * jax.random.normal(ks[1 + 2 * i], (C_IN, C_IN, K),
                                                   jnp.float32)
        params[f"b{i}"] = 0.05 * jax.random.normal(ks[2 + 2 * i], (C_IN,), jnp.float32)
    params["wfc"] = 0.05 * jax.random.normal(ks[9], (1, C_IN), jnp.float32)
    params["bfc"] = 0.05 * jax.random.normal(ks[10], (1,), jnp.float32)
    return params


if __name__ == "__main__":
    key = jax.random.PRNGKey(0)
    kp, kx = jax.random.split(key)
    params = init_params(kp)
    prepared = prepare_params(params)

    # seq length 50: after 4x(conv k=3) and 3x(maxpool k=3, s=2) the length becomes 1,
    # so the flatten produces exactly 100 features for fc1, as the module requires.
    B, L = 2, 50
    ids = jax.random.randint(kx, (B, L), 0, 10002, dtype=jnp.int32)

    out = jax.block_until_ready(simple_cnn_forward(ids, prepared))
    ref = jax.block_until_ready(reference_forward(ids, params))
    assert out.shape == (B, 1), out.shape
    # bf16 MXU inputs (f32 accumulation) vs. the f32 Precision.HIGHEST reference.
    if not jnp.allclose(out, ref, rtol=3e-2, atol=3e-2):
        raise AssertionError(f"kernel/ref mismatch: {out} vs {ref}")

    print("KERNEL_OK")
</pallas_src>

<mosaic_0001>
module attributes {stable_mosaic.version = 11 : i64} {
  func.func @simple_cnn_kernel(%arg0: i32, %arg1: memref<448x128xbf16, #tpu.memory_space<vmem>>, %arg2: memref<3x128x128xbf16, #tpu.memory_space<vmem>>, %arg3: memref<1x128xf32, #tpu.memory_space<vmem>>, %arg4: memref<3x128x128xbf16, #tpu.memory_space<vmem>>, %arg5: memref<1x128xf32, #tpu.memory_space<vmem>>, %arg6: memref<3x128x128xbf16, #tpu.memory_space<vmem>>, %arg7: memref<1x128xf32, #tpu.memory_space<vmem>>, %arg8: memref<3x128x128xbf16, #tpu.memory_space<vmem>>, %arg9: memref<1x128xf32, #tpu.memory_space<vmem>>, %arg10: memref<1x128xf32, #tpu.memory_space<vmem>>, %arg11: memref<1x1xf32, #tpu.memory_space<vmem>>, %arg12: memref<8x1xf32, #tpu.memory_space<vmem>>, %arg13: memref<448x128xf32, #tpu.memory_space<vmem>>, %arg14: memref<224x128xf32, #tpu.memory_space<vmem>>) attributes {dimension_semantics = [#tpu.dimension_semantics<parallel>], iteration_bounds = array<i64: 1>, scalar_prefetch = 0 : i64, scratch_operands = 2 : i64, tpu.core_type = #tpu.core_type<tc>, window_params = [{transform_indices = @transform_0, window_bounds = array<i64: 448, 128>}, {pipeline_mode = #tpu.pipeline_mode<synchronous>, transform_indices = @transform_1, window_bounds = array<i64: 3, 128, 128>}, {pipeline_mode = #tpu.pipeline_mode<synchronous>, transform_indices = @transform_2, window_bounds = array<i64: 1, 128>}, {pipeline_mode = #tpu.pipeline_mode<synchronous>, transform_indices = @transform_3, window_bounds = array<i64: 3, 128, 128>}, {pipeline_mode = #tpu.pipeline_mode<synchronous>, transform_indices = @transform_4, window_bounds = array<i64: 1, 128>}, {pipeline_mode = #tpu.pipeline_mode<synchronous>, transform_indices = @transform_5, window_bounds = array<i64: 3, 128, 128>}, {pipeline_mode = #tpu.pipeline_mode<synchronous>, transform_indices = @transform_6, window_bounds = array<i64: 1, 128>}, {pipeline_mode = #tpu.pipeline_mode<synchronous>, transform_indices = @transform_7, window_bounds = array<i64: 3, 128, 128>}, {pipeline_mode = #tpu.pipeline_mode<synchronous>, transform_indices = @transform_8, window_bounds = array<i64: 1, 128>}, {pipeline_mode = #tpu.pipeline_mode<synchronous>, transform_indices = @transform_9, window_bounds = array<i64: 1, 128>}, {pipeline_mode = #tpu.pipeline_mode<synchronous>, transform_indices = @transform_10, window_bounds = array<i64: 1, 1>}, {transform_indices = @transform_11, window_bounds = array<i64: 8, 1>}]} {
    %c0 = arith.constant 0 : index
    %c0_0 = arith.constant 0 : index
    %0 = vector.load %arg1[%c0, %c0_0] : memref<448x128xbf16, #tpu.memory_space<vmem>>, vector<448x128xbf16>
    %c0_1 = arith.constant 0 : index
    %c0_2 = arith.constant 0 : index
    %c0_3 = arith.constant 0 : index
    %1 = vector.load %arg2[%c0_1, %c0_2, %c0_3] : memref<3x128x128xbf16, #tpu.memory_space<vmem>>, vector<1x128x128xbf16>
    %2 = vector.shape_cast %1 : vector<1x128x128xbf16> to vector<128x128xbf16>
    %cst = arith.constant dense<0.000000e+00> : vector<448x128xf32>
    %3 = tpu.matmul %0, %2, %cst {dimension_numbers = #tpu.dot_dimension_numbers<[1], [0], [0], [1], [0, 0, 1, 1], [], []>} : vector<448x128xbf16>, vector<128x128xbf16>, vector<448x128xf32> -> vector<448x128xf32>
    %c1 = arith.constant 1 : index
    %c0_4 = arith.constant 0 : index
    %c0_5 = arith.constant 0 : index
    %4 = vector.load %arg2[%c1, %c0_4, %c0_5] : memref<3x128x128xbf16, #tpu.memory_space<vmem>>, vector<1x128x128xbf16>
    %5 = vector.shape_cast %4 : vector<1x128x128xbf16> to vector<128x128xbf16>
    %cst_6 = arith.constant dense<0.000000e+00> : vector<448x128xf32>
    %6 = tpu.matmul %0, %5, %cst_6 {dimension_numbers = #tpu.dot_dimension_numbers<[1], [0], [0], [1], [0, 0, 1, 1], [], []>} : vector<448x128xbf16>, vector<128x128xbf16>, vector<448x128xf32> -> vector<448x128xf32>
    %c2 = arith.constant 2 : index
    %c0_7 = arith.constant 0 : index
    %c0_8 = arith.constant 0 : index
    %7 = vector.load %arg2[%c2, %c0_7, %c0_8] : memref<3x128x128xbf16, #tpu.memory_space<vmem>>, vector<1x128x128xbf16>
    %8 = vector.shape_cast %7 : vector<1x128x128xbf16> to vector<128x128xbf16>
    %cst_9 = arith.constant dense<0.000000e+00> : vector<448x128xf32>
    %9 = tpu.matmul %0, %8, %cst_9 {dimension_numbers = #tpu.dot_dimension_numbers<[1], [0], [0], [1], [0, 0, 1, 1], [], []>} : vector<448x128xbf16>, vector<128x128xbf16>, vector<448x128xf32> -> vector<448x128xf32>
    %10 = vector.extract_strided_slice %3 {offsets = [0, 0], sizes = [446, 128], strides = [1, 1]} : vector<448x128xf32> to vector<446x128xf32>
    %11 = vector.extract_strided_slice %6 {offsets = [1, 0], sizes = [446, 128], strides = [1, 1]} : vector<448x128xf32> to vector<446x128xf32>
    %12 = arith.addf %10, %11 : vector<446x128xf32>
    %13 = vector.extract_strided_slice %9 {offsets = [2, 0], sizes = [446, 128], strides = [1, 1]} : vector<448x128xf32> to vector<446x128xf32>
    %14 = arith.addf %12, %13 : vector<446x128xf32>
    %c0_10 = arith.constant 0 : index
    %c0_11 = arith.constant 0 : index
    %15 = vector.load %arg3[%c0_10, %c0_11] : memref<1x128xf32, #tpu.memory_space<vmem>>, vector<1x128xf32>
    %16 = vector.broadcast %15 : vector<1x128xf32> to vector<446x128xf32>
    %17 = arith.addf %14, %16 : vector<446x128xf32>
    %cst_12 = arith.constant 0.000000e+00 : f32
    %18 = vector.broadcast %cst_12 : f32 to vector<446x128xf32>
    %19 = arith.maximumf %17, %18 : vector<446x128xf32>
    %20 = vector.extract_strided_slice %19 {offsets = [0, 0], sizes = [444, 128], strides = [1, 1]} : vector<446x128xf32> to vector<444x128xf32>
    %21 = vector.extract_strided_slice %19 {offsets = [1, 0], sizes = [444, 128], strides = [1, 1]} : vector<446x128xf32> to vector<444x128xf32>
    %22 = arith.maximumf %20, %21 : vector<444x128xf32>
    %23 = vector.extract_strided_slice %19 {offsets = [2, 0], sizes = [444, 128], strides = [1, 1]} : vector<446x128xf32> to vector<444x128xf32>
    %24 = arith.maximumf %22, %23 : vector<444x128xf32>
    %c0_13 = arith.constant 0 : index
    %c0_14 = arith.constant 0 : index
    %25 = vector.load %arg13[%c0_13, %c0_14] : memref<448x128xf32, #tpu.memory_space<vmem>>, vector<444x128xf32>
    tpu.vector_store %arg13[%c0_13, %c0_14], %24 {strides = array<i32>} : memref<448x128xf32, #tpu.memory_space<vmem>>, vector<444x128xf32>,
    %c0_15 = arith.constant 0 : index
    %c0_16 = arith.constant 0 : index
    %26 = tpu.strided_load %arg13[%c0_15, %c0_16] {strides = array<i32: 2, 1>} : memref<448x128xf32, #tpu.memory_space<vmem>>, vector<224x128xf32>
    %27 = arith.truncf %26 : vector<224x128xf32> to vector<224x128xbf16>
    %c0_17 = arith.constant 0 : index
    %c0_18 = arith.constant 0 : index
    %c0_19 = arith.constant 0 : index
    %28 = vector.load %arg4[%c0_17, %c0_18, %c0_19] : memref<3x128x128xbf16, #tpu.memory_space<vmem>>, vector<1x128x128xbf16>
    %29 = vector.shape_cast %28 : vector<1x128x128xbf16> to vector<128x128xbf16>
    %cst_20 = arith.constant dense<0.000000e+00> : vector<224x128xf32>
    %30 = tpu.matmul %27, %29, %cst_20 {dimension_numbers = #tpu.dot_dimension_numbers<[1], [0], [0], [1], [0, 0, 1, 1], [], []>} : vector<224x128xbf16>, vector<128x128xbf16>, vector<224x128xf32> -> vector<224x128xf32>
    %c1_21 = arith.constant 1 : index
    %c0_22 = arith.constant 0 : index
    %c0_23 = arith.constant 0 : index
    %31 = vector.load %arg4[%c1_21, %c0_22, %c0_23] : memref<3x128x128xbf16, #tpu.memory_space<vmem>>, vector<1x128x128xbf16>
    %32 = vector.shape_cast %31 : vector<1x128x128xbf16> to vector<128x128xbf16>
    %cst_24 = arith.constant dense<0.000000e+00> : vector<224x128xf32>
    %33 = tpu.matmul %27, %32, %cst_24 {dimension_numbers = #tpu.dot_dimension_numbers<[1], [0], [0], [1], [0, 0, 1, 1], [], []>} : vector<224x128xbf16>, vector<128x128xbf16>, vector<224x128xf32> -> vector<224x128xf32>
    %c2_25 = arith.constant 2 : index
    %c0_26 = arith.constant 0 : index
    %c0_27 = arith.constant 0 : index
    %34 = vector.load %arg4[%c2_25, %c0_26, %c0_27] : memref<3x128x128xbf16, #tpu.memory_space<vmem>>, vector<1x128x128xbf16>
    %35 = vector.shape_cast %34 : vector<1x128x128xbf16> to vector<128x128xbf16>
    %cst_28 = arith.constant dense<0.000000e+00> : vector<224x128xf32>
    %36 = tpu.matmul %27, %35, %cst_28 {dimension_numbers = #tpu.dot_dimension_numbers<[1], [0], [0], [1], [0, 0, 1, 1], [], []>} : vector<224x128xbf16>, vector<128x128xbf16>, vector<224x128xf32> -> vector<224x128xf32>
    %37 = vector.extract_strided_slice %30 {offsets = [0, 0], sizes = [222, 128], strides = [1, 1]} : vector<224x128xf32> to vector<222x128xf32>
    %38 = vector.extract_strided_slice %33 {offsets = [1, 0], sizes = [222, 128], strides = [1, 1]} : vector<224x128xf32> to vector<222x128xf32>
    %39 = arith.addf %37, %38 : vector<222x128xf32>
    %40 = vector.extract_strided_slice %36 {offsets = [2, 0], sizes = [222, 128], strides = [1, 1]} : vector<224x128xf32> to vector<222x128xf32>
    %41 = arith.addf %39, %40 : vector<222x128xf32>
    %c0_29 = arith.constant 0 : index
    %c0_30 = arith.constant 0 : index
    %42 = vector.load %arg5[%c0_29, %c0_30] : memref<1x128xf32, #tpu.memory_space<vmem>>, vector<1x128xf32>
    %43 = vector.broadcast %42 : vector<1x128xf32> to vector<222x128xf32>
    %44 = arith.addf %41, %43 : vector<222x128xf32>
    %cst_31 = arith.constant 0.000000e+00 : f32
    %45 = vector.broadcast %cst_31 : f32 to vector<222x128xf32>
    %46 = arith.maximumf %44, %45 : vector<222x128xf32>
    %47 = vector.extract_strided_slice %46 {offsets = [0, 0], sizes = [220, 128], strides = [1, 1]} : vector<222x128xf32> to vector<220x128xf32>
    %48 = vector.extract_strided_slice %46 {offsets = [1, 0], sizes = [220, 128], strides = [1, 1]} : vector<222x128xf32> to vector<220x128xf32>
    %49 = arith.maximumf %47, %48 : vector<220x128xf32>
    %50 = vector.extract_strided_slice %46 {offsets = [2, 0], sizes = [220, 128], strides = [1, 1]} : vector<222x128xf32> to vector<220x128xf32>
    %51 = arith.maximumf %49, %50 : vector<220x128xf32>
    %c0_32 = arith.constant 0 : index
    %c0_33 = arith.constant 0 : index
    %52 = vector.load %arg14[%c0_32, %c0_33] : memref<224x128xf32, #tpu.memory_space<vmem>>, vector<220x128xf32>
    tpu.vector_store %arg14[%c0_32, %c0_33], %51 {strides = array<i32>} : memref<224x128xf32, #tpu.memory_space<vmem>>, vector<220x128xf32>,
    %c0_34 = arith.constant 0 : index
    %c0_35 = arith.constant 0 : index
    %53 = tpu.strided_load %arg14[%c0_34, %c0_35] {strides = array<i32: 2, 1>} : memref<224x128xf32, #tpu.memory_space<vmem>>, vector<112x128xf32>
    %54 = arith.truncf %53 : vector<112x128xf32> to vector<112x128xbf16>
    %c0_36 = arith.constant 0 : index
    %c0_37 = arith.constant 0 : index
    %c0_38 = arith.constant 0 : index
    %55 = vector.load %arg6[%c0_36, %c0_37, %c0_38] : memref<3x128x128xbf16, #tpu.memory_space<vmem>>, vector<1x128x128xbf16>
    %56 = vector.shape_cast %55 : vector<1x128x128xbf16> to vector<128x128xbf16>
    %cst_39 = arith.constant dense<0.000000e+00> : vector<112x128xf32>
    %57 = tpu.matmul %54, %56, %cst_39 {dimension_numbers = #tpu.dot_dimension_numbers<[1], [0], [0], [1], [0, 0, 1, 1], [], []>} : vector<112x128xbf16>, vector<128x128xbf16>, vector<112x128xf32> -> vector<112x128xf32>
    %c1_40 = arith.constant 1 : index
    %c0_41 = arith.constant 0 : index
    %c0_42 = arith.constant 0 : index
    %58 = vector.load %arg6[%c1_40, %c0_41, %c0_42] : memref<3x128x128xbf16, #tpu.memory_space<vmem>>, vector<1x128x128xbf16>
    %59 = vector.shape_cast %58 : vector<1x128x128xbf16> to vector<128x128xbf16>
    %cst_43 = arith.constant dense<0.000000e+00> : vector<112x128xf32>
    %60 = tpu.matmul %54, %59, %cst_43 {dimension_numbers = #tpu.dot_dimension_numbers<[1], [0], [0], [1], [0, 0, 1, 1], [], []>} : vector<112x128xbf16>, vector<128x128xbf16>, vector<112x128xf32> -> vector<112x128xf32>
    %c2_44 = arith.constant 2 : index
    %c0_45 = arith.constant 0 : index
    %c0_46 = arith.constant 0 : index
    %61 = vector.load %arg6[%c2_44, %c0_45, %c0_46] : memref<3x128x128xbf16, #tpu.memory_space<vmem>>, vector<1x128x128xbf16>
    %62 = vector.shape_cast %61 : vector<1x128x128xbf16> to vector<128x128xbf16>
    %cst_47 = arith.constant dense<0.000000e+00> : vector<112x128xf32>
    %63 = tpu.matmul %54, %62, %cst_47 {dimension_numbers = #tpu.dot_dimension_numbers<[1], [0], [0], [1], [0, 0, 1, 1], [], []>} : vector<112x128xbf16>, vector<128x128xbf16>, vector<112x128xf32> -> vector<112x128xf32>
    %64 = vector.extract_strided_slice %57 {offsets = [0, 0], sizes = [110, 128], strides = [1, 1]} : vector<112x128xf32> to vector<110x128xf32>
    %65 = vector.extract_strided_slice %60 {offsets = [1, 0], sizes = [110, 128], strides = [1, 1]} : vector<112x128xf32> to vector<110x128xf32>
    %66 = arith.addf %64, %65 : vector<110x128xf32>
    %67 = vector.extract_strided_slice %63 {offsets = [2, 0], sizes = [110, 128], strides = [1, 1]} : vector<112x128xf32> to vector<110x128xf32>
    %68 = arith.addf %66, %67 : vector<110x128xf32>
    %c0_48 = arith.constant 0 : index
    %c0_49 = arith.constant 0 : index
    %69 = vector.load %arg7[%c0_48, %c0_49] : memref<1x128xf32, #tpu.memory_space<vmem>>, vector<1x128xf32>
    %70 = vector.broadcast %69 : vector<1x128xf32> to vector<110x128xf32>
    %71 = arith.addf %68, %70 : vector<110x128xf32>
    %cst_50 = arith.constant 0.000000e+00 : f32
    %72 = vector.broadcast %cst_50 : f32 to vector<110x128xf32>
    %73 = arith.maximumf %71, %72 : vector<110x128xf32>
    %74 = vector.extract_strided_slice %73 {offsets = [0, 0], sizes = [108, 128], strides = [1, 1]} : vector<110x128xf32> to vector<108x128xf32>
    %75 = vector.extract_strided_slice %73 {offsets = [1, 0], sizes = [108, 128], strides = [1, 1]} : vector<110x128xf32> to vector<108x128xf32>
    %76 = arith.maximumf %74, %75 : vector<108x128xf32>
    %77 = vector.extract_strided_slice %73 {offsets = [2, 0], sizes = [108, 128], strides = [1, 1]} : vector<110x128xf32> to vector<108x128xf32>
    %78 = arith.maximumf %76, %77 : vector<108x128xf32>
    %c0_51 = arith.constant 0 : index
    %c0_52 = arith.constant 0 : index
    %79 = vector.load %arg13[%c0_51, %c0_52] : memref<448x128xf32, #tpu.memory_space<vmem>>, vector<108x128xf32>
    tpu.vector_store %arg13[%c0_51, %c0_52], %78 {strides = array<i32>} : memref<448x128xf32, #tpu.memory_space<vmem>>, vector<108x128xf32>,
    %c0_53 = arith.constant 0 : index
    %c0_54 = arith.constant 0 : index
    %80 = tpu.strided_load %arg13[%c0_53, %c0_54] {strides = array<i32: 14, 1>} : memref<448x128xf32, #tpu.memory_space<vmem>>, vector<8x128xf32>
    %81 = arith.truncf %80 : vector<8x128xf32> to vector<8x128xbf16>
    %c0_55 = arith.constant 0 : index
    %c0_56 = arith.constant 0 : index
    %c0_57 = arith.constant 0 : index
    %82 = vector.load %arg8[%c0_55, %c0_56, %c0_57] : memref<3x128x128xbf16, #tpu.memory_space<vmem>>, vector<1x128x128xbf16>
    %83 = vector.shape_cast %82 : vector<1x128x128xbf16> to vector<128x128xbf16>
    %cst_58 = arith.constant dense<0.000000e+00> : vector<8x128xf32>
    %84 = tpu.matmul %81, %83, %cst_58 {dimension_numbers = #tpu.dot_dimension_numbers<[1], [0], [0], [1], [0, 0, 1, 1], [], []>} : vector<8x128xbf16>, vector<128x128xbf16>, vector<8x128xf32> -> vector<8x128xf32>
    %c2_59 = arith.constant 2 : index
    %c0_60 = arith.constant 0 : index
    %85 = tpu.strided_load %arg13[%c2_59, %c0_60] {strides = array<i32: 14, 1>} : memref<448x128xf32, #tpu.memory_space<vmem>>, vector<8x128xf32>
    %86 = arith.truncf %85 : vector<8x128xf32> to vector<8x128xbf16>
    %c1_61 = arith.constant 1 : index
    %c0_62 = arith.constant 0 : index
    %c0_63 = arith.constant 0 : index
    %87 = vector.load %arg8[%c1_61, %c0_62, %c0_63] : memref<3x128x128xbf16, #tpu.memory_space<vmem>>, vector<1x128x128xbf16>
    %88 = vector.shape_cast %87 : vector<1x128x128xbf16> to vector<128x128xbf16>
    %cst_64 = arith.constant dense<0.000000e+00> : vector<8x128xf32>
    %89 = tpu.matmul %86, %88, %cst_64 {dimension_numbers = #tpu.dot_dimension_numbers<[1], [0], [0], [1], [0, 0, 1, 1], [], []>} : vector<8x128xbf16>, vector<128x128xbf16>, vector<8x128xf32> -> vector<8x128xf32>
    %90 = arith.addf %84, %89 : vector<8x128xf32>
    %c4 = arith.constant 4 : index
    %c0_65 = arith.constant 0 : index
    %91 = tpu.strided_load %arg13[%c4, %c0_65] {strides = array<i32: 14, 1>} : memref<448x128xf32, #tpu.memory_space<vmem>>, vector<8x128xf32>
    %92 = arith.truncf %91 : vector<8x128xf32> to vector<8x128xbf16>
    %c2_66 = arith.constant 2 : index
    %c0_67 = arith.constant 0 : index
    %c0_68 = arith.constant 0 : index
    %93 = vector.load %arg8[%c2_66, %c0_67, %c0_68] : memref<3x128x128xbf16, #tpu.memory_space<vmem>>, vector<1x128x128xbf16>
    %94 = vector.shape_cast %93 : vector<1x128x128xbf16> to vector<128x128xbf16>
    %cst_69 = arith.constant dense<0.000000e+00> : vector<8x128xf32>
    %95 = tpu.matmul %92, %94, %cst_69 {dimension_numbers = #tpu.dot_dimension_numbers<[1], [0], [0], [1], [0, 0, 1, 1], [], []>} : vector<8x128xbf16>, vector<128x128xbf16>, vector<8x128xf32> -> vector<8x128xf32>
    %96 = arith.addf %90, %95 : vector<8x128xf32>
    %c0_70 = arith.constant 0 : index
    %c0_71 = arith.constant 0 : index
    %97 = vector.load %arg9[%c0_70, %c0_71] : memref<1x128xf32, #tpu.memory_space<vmem>>, vector<1x128xf32>
    %98 = vector.broadcast %97 : vector<1x128xf32> to vector<8x128xf32>
    %99 = arith.addf %96, %98 : vector<8x128xf32>
    %cst_72 = arith.constant 0.000000e+00 : f32
    %100 = vector.broadcast %cst_72 : f32 to vector<8x128xf32>
    %101 = arith.maximumf %99, %100 : vector<8x128xf32>
    %c0_73 = arith.constant 0 : index
    %c0_74 = arith.constant 0 : index
    %102 = vector.load %arg10[%c0_73, %c0_74] : memref<1x128xf32, #tpu.memory_space<vmem>>, vector<1x128xf32>
    %103 = vector.broadcast %102 : vector<1x128xf32> to vector<8x128xf32>
    %104 = arith.mulf %101, %103 : vector<8x128xf32>
    %cst_75 = arith.constant dense<0.000000e+00> : vector<8xf32>
    %105 = vector.multi_reduction <add>, %104, %cst_75 [1] : vector<8x128xf32> to vector<8xf32>
    %106 = vector.shape_cast %105 : vector<8xf32> to vector<8x1xf32>
    %c0_76 = arith.constant 0 : index
    %c0_77 = arith.constant 0 : index
    %107 = vector.load %arg11[%c0_76, %c0_77] : memref<1x1xf32, #tpu.memory_space<vmem>>, vector<1x1xf32>
    %108 = vector.broadcast %107 : vector<1x1xf32> to vector<8x1xf32>
    %109 = arith.addf %106, %108 : vector<8x1xf32>
    %c0_78 = arith.constant 0 : index
    %c0_79 = arith.constant 0 : index
    %110 = vector.load %arg12[%c0_78, %c0_79] : memref<8x1xf32, #tpu.memory_space<vmem>>, vector<8x1xf32>
    tpu.vector_store %arg12[%c0_78, %c0_79], %109 {strides = array<i32>} : memref<8x1xf32, #tpu.memory_space<vmem>>, vector<8x1xf32>,
    return
  }
  func.func @transform_0(%arg0: i32) -> (i32, i32) {
    %c0_i32 = arith.constant 0 : i32
    %c0_i32_0 = arith.constant 0 : i32
    return %arg0, %c0_i32 : i32, i32
  }
  func.func @transform_1(%arg0: i32) -> (i32, i32, i32) {
    %c0_i32 = arith.constant 0 : i32
    %c0_i32_0 = arith.constant 0 : i32
    %c0_i32_1 = arith.constant 0 : i32
    %c0_i32_2 = arith.constant 0 : i32
    return %c0_i32, %c0_i32_0, %c0_i32_1 : i32, i32, i32
  }
  func.func @transform_2(%arg0: i32) -> (i32, i32) {
    %c0_i32 = arith.constant 0 : i32
    %c0_i32_0 = arith.constant 0 : i32
    %c0_i32_1 = arith.constant 0 : i32
    return %c0_i32, %c0_i32_0 : i32, i32
  }
  func.func @transform_3(%arg0: i32) -> (i32, i32, i32) {
    %c0_i32 = arith.constant 0 : i32
    %c0_i32_0 = arith.constant 0 : i32
    %c0_i32_1 = arith.constant 0 : i32
    %c0_i32_2 = arith.constant 0 : i32
    return %c0_i32, %c0_i32_0, %c0_i32_1 : i32, i32, i32
  }
  func.func @transform_4(%arg0: i32) -> (i32, i32) {
    %c0_i32 = arith.constant 0 : i32
    %c0_i32_0 = arith.constant 0 : i32
    %c0_i32_1 = arith.constant 0 : i32
    return %c0_i32, %c0_i32_0 : i32, i32
  }
  func.func @transform_5(%arg0: i32) -> (i32, i32, i32) {
    %c0_i32 = arith.constant 0 : i32
    %c0_i32_0 = arith.constant 0 : i32
    %c0_i32_1 = arith.constant 0 : i32
    %c0_i32_2 = arith.constant 0 : i32
    return %c0_i32, %c0_i32_0, %c0_i32_1 : i32, i32, i32
  }
  func.func @transform_6(%arg0: i32) -> (i32, i32) {
    %c0_i32 = arith.constant 0 : i32
    %c0_i32_0 = arith.constant 0 : i32
    %c0_i32_1 = arith.constant 0 : i32
    return %c0_i32, %c0_i32_0 : i32, i32
  }
  func.func @transform_7(%arg0: i32) -> (i32, i32, i32) {
    %c0_i32 = arith.constant 0 : i32
    %c0_i32_0 = arith.constant 0 : i32
    %c0_i32_1 = arith.constant 0 : i32
    %c0_i32_2 = arith.constant 0 : i32
    return %c0_i32, %c0_i32_0, %c0_i32_1 : i32, i32, i32
  }
  func.func @transform_8(%arg0: i32) -> (i32, i32) {
    %c0_i32 = arith.constant 0 : i32
    %c0_i32_0 = arith.constant 0 : i32
    %c0_i32_1 = arith.constant 0 : i32
    return %c0_i32, %c0_i32_0 : i32, i32
  }
  func.func @transform_9(%arg0: i32) -> (i32, i32) {
    %c0_i32 = arith.constant 0 : i32
    %c0_i32_0 = arith.constant 0 : i32
    %c0_i32_1 = arith.constant 0 : i32
    return %c0_i32, %c0_i32_0 : i32, i32
  }
  func.func @transform_10(%arg0: i32) -> (i32, i32) {
    %c0_i32 = arith.constant 0 : i32
    %c0_i32_0 = arith.constant 0 : i32
    %c0_i32_1 = arith.constant 0 : i32
    return %c0_i32, %c0_i32_0 : i32, i32
  }
  func.func @transform_11(%arg0: i32) -> (i32, i32) {
    %c0_i32 = arith.constant 0 : i32
    %c0_i32_0 = arith.constant 0 : i32
    return %arg0, %c0_i32 : i32, i32
  }
}

</mosaic_0001>

<llo_original>
// kernel: tpu_custom_call.1
$region0: #{tpu_custom_call.1}
  #allocation0 [shape = 'u32[]', space=smem, size = 0x4, offset = 0x4, fixed_abs, tag = 'smem constant byte address 0x4 - core index']
  #allocation1 [shape = 'u32[144,128]{1,0:T(1,128)}', space=vmem, size = 0x12000, scoped, tag = 'internal scratch']
  #allocation2 [shape = 'f32[448,128]{1,0:T(8,128)}', space=vmem, size = 0x38000, scoped, tag = 'scratch operand']
  #allocation3 [shape = 'f32[224,128]{1,0:T(8,128)}', space=vmem, size = 0x1c000, scoped, tag = 'scratch operand']
  #allocation4 [shape = 'f32[1,1]{1,0:T(1,128)S(1)}', space=vmem, size = 0x200, scoped, tag = 'scoped memory for tpu_custom_call.1']
  %s0 = inlined_call_operand.hbm [shape: bf16[448,128], index: 0, kind: input, shape index: {}]
  %s1 = inlined_call_operand.hbm [shape: bf16[3,128,128], index: 1, kind: input, shape index: {}]
  %s2 = inlined_call_operand.vmem [shape: f32[1,128], index: 2, kind: input, shape index: {}]
  %s3 = inlined_call_operand.hbm [shape: bf16[3,128,128], index: 3, kind: input, shape index: {}]
  %s4 = inlined_call_operand.vmem [shape: f32[1,128], index: 4, kind: input, shape index: {}]
  %s5 = inlined_call_operand.hbm [shape: bf16[3,128,128], index: 5, kind: input, shape index: {}]
  %s6 = inlined_call_operand.vmem [shape: f32[1,128], index: 6, kind: input, shape index: {}]
  %s7 = inlined_call_operand.hbm [shape: bf16[3,128,128], index: 7, kind: input, shape index: {}]
  %s8 = inlined_call_operand.vmem [shape: f32[1,128], index: 8, kind: input, shape index: {}]
  %s9 = inlined_call_operand.vmem [shape: f32[1,128], index: 9, kind: input, shape index: {}]
  %s10 = inlined_call_operand.<no memory space> [shape: f32[1,1], index: 10, kind: input, shape index: {}]
  %s11 = inlined_call_operand.vmem [shape: f32[8,1], index: 11, kind: output, shape index: {}]
  %s12 = sld [smem:[#allocation0]]
  $region74: #{tpu_custom_call.1} parent=0
    _
  %s14 = ssub.s32 1, %s12
  %s15 = scalar_select 0, %s14, %s12
  %v16 = vstv %s10
  %17 = vst [vmem:[#allocation4] sm:$0x1] %v16
  $region1: #{tpu_custom_call.1} parent=0
    #allocation5 [shape = 'u8[114688]{0}', space=vmem, size = 0x1c000, scoped, tag = 'input window, operand 0, single buffered']
    #allocation6 [shape = 's32[1]{0}', space=sflag, size = 0x4, scoped, tag = 'scoped memory for tpu_custom_call.1']
    #allocation7 [shape = 'u8[98304]{0}', space=vmem, size = 0x18000, scoped, tag = 'input window, operand 1, single buffered']
    #allocation8 [shape = 's32[1]{0}', space=sflag, size = 0x4, scoped, tag = 'scoped memory for tpu_custom_call.1']
    #allocation9 [shape = 'u8[98304]{0}', space=vmem, size = 0x18000, scoped, tag = 'input window, operand 3, single buffered']
    #allocation10 [shape = 'u8[98304]{0}', space=vmem, size = 0x18000, scoped, tag = 'input window, operand 5, single buffered']
    #allocation11 [shape = 's32[1]{0}', space=sflag, size = 0x4, scoped, tag = 'scoped memory for tpu_custom_call.1']
    #allocation12 [shape = 'u8[98304]{0}', space=vmem, size = 0x18000, scoped, tag = 'input window, operand 7, single buffered']
    %18 = vsyncpa [#allocation6], 0
    %19 = vsyncpa [#allocation8], 0
    %20 = vsyncpa [#allocation11], 0
    // Predicated region
    $region2: #{tpu_custom_call.1} parent=1 // pred_check
      _
    $region3: #{tpu_custom_call.1} parent=1 // pred_check_branch
      %22 = sbr.rel (0) target = $region5
    $region4: #{tpu_custom_call.1} parent=1 // pred_region
      %s24 = ssub.s32 3584, 3584
      %25 = vsyncadd [#allocation6], %s24
      %s26 = sshll.u32 [#allocation5], 4
      %s27 = int_to_ptr.vmem [resolvable:$true] %s26
      %32 = dma.hbm_to_vmem [thread:$0]  %s0, 3584, %s27, [#allocation6], 64, 64, 4
    $region5: #{tpu_custom_call.1} parent=1 // pred_fallthru
      _
    // Predicated region
    $region6: #{tpu_custom_call.1} parent=1 // pred_check
      _
    $region7: #{tpu_custom_call.1} parent=1 // pred_check_branch
      %34 = sbr.rel (0) target = $region9
    $region8: #{tpu_custom_call.1} parent=1 // pred_region
      %s36 = ssub.s32 3072, 3072
      %37 = vsyncadd [#allocation8], %s36
      %s38 = sshll.u32 [#allocation7], 4
      %s39 = int_to_ptr.vmem [resolvable:$true] %s38
      %44 = dma.hbm_to_vmem [thread:$0]  %s1, 3072, %s39, [#allocation8], 64, 64, 4
    $region9: #{tpu_custom_call.1} parent=1 // pred_fallthru
      _
    // Predicated region
    $region10: #{tpu_custom_call.1} parent=1 // pred_check
      _
    $region11: #{tpu_custom_call.1} parent=1 // pred_check_branch
      %46 = sbr.rel (0) target = $region13
    $region12: #{tpu_custom_call.1} parent=1 // pred_region
      _
    $region13: #{tpu_custom_call.1} parent=1 // pred_fallthru
      _
    // Predicated region
    $region14: #{tpu_custom_call.1} parent=1 // pred_check
      _
    $region15: #{tpu_custom_call.1} parent=1 // pred_check_branch
      %48 = sbr.rel (0) target = $region17
    $region16: #{tpu_custom_call.1} parent=1 // pred_region
      %s50 = ssub.s32 3072, 3072
      %51 = vsyncadd [#allocation8], %s50
      %s52 = sshll.u32 [#allocation9], 4
      %s53 = int_to_ptr.vmem [resolvable:$true] %s52
      %58 = dma.hbm_to_vmem [thread:$0]  %s3, 3072, %s53, [#allocation8], 64, 64, 4
    $region17: #{tpu_custom_call.1} parent=1 // pred_fallthru
      _
    // Predicated region
    $region18: #{tpu_custom_call.1} parent=1 // pred_check
      _
    $region19: #{tpu_custom_call.1} parent=1 // pred_check_branch
      %60 = sbr.rel (0) target = $region21
    $region20: #{tpu_custom_call.1} parent=1 // pred_region
      _
    $region21: #{tpu_custom_call.1} parent=1 // pred_fallthru
      _
    // Predicated region
    $region22: #{tpu_custom_call.1} parent=1 // pred_check
      _
    $region23: #{tpu_custom_call.1} parent=1 // pred_check_branch
      %62 = sbr.rel (0) target = $region25
    $region24: #{tpu_custom_call.1} parent=1 // pred_region
      %s64 = ssub.s32 3072, 3072
      %65 = vsyncadd [#allocation11], %s64
      %s66 = sshll.u32 [#allocation10], 4
      %s67 = int_to_ptr.vmem [resolvable:$true] %s66
      %72 = dma.hbm_to_vmem [thread:$0]  %s5, 3072, %s67, [#allocation11], 64, 64, 4
    $region25: #{tpu_custom_call.1} parent=1 // pred_fallthru
      _
    // Predicated region
    $region26: #{tpu_custom_call.1} parent=1 // pred_check
      _
    $region27: #{tpu_custom_call.1} parent=1 // pred_check_branch
      %74 = sbr.rel (0) target = $region29
    $region28: #{tpu_custom_call.1} parent=1 // pred_region
      _
    $region29: #{tpu_custom_call.1} parent=1 // pred_fallthru
      _
    // Predicated region
    $region30: #{tpu_custom_call.1} parent=1 // pred_check
      _
    $region31: #{tpu_custom_call.1} parent=1 // pred_check_branch
      %76 = sbr.rel (0) target = $region33
    $region32: #{tpu_custom_call.1} parent=1 // pred_region
      %s78 = ssub.s32 3072, 3072
      %79 = vsyncadd [#allocation11], %s78
      %s80 = sshll.u32 [#allocation12], 4
      %s81 = int_to_ptr.vmem [resolvable:$true] %s80
      %86 = dma.hbm_to_vmem [thread:$0]  %s7, 3072, %s81, [#allocation11], 64, 64, 4
    $region33: #{tpu_custom_call.1} parent=1 // pred_fallthru
      _
    // Predicated region
    $region34: #{tpu_custom_call.1} parent=1 // pred_check
      _
    $region35: #{tpu_custom_call.1} parent=1 // pred_check_branch
      %88 = sbr.rel (0) target = $region37
    $region36: #{tpu_custom_call.1} parent=1 // pred_region
      _
    $region37: #{tpu_custom_call.1} parent=1 // pred_fallthru
      _
    // Predicated region
    $region38: #{tpu_custom_call.1} parent=1 // pred_check
      _
    $region39: #{tpu_custom_call.1} parent=1 // pred_check_branch
      %90 = sbr.rel (0) target = $region41
    $region40: #{tpu_custom_call.1} parent=1 // pred_region
      _
    $region41: #{tpu_custom_call.1} parent=1 // pred_fallthru
      _
    // Predicated region
    $region42: #{tpu_custom_call.1} parent=1 // pred_check
      _
    $region43: #{tpu_custom_call.1} parent=1 // pred_check_branch
      %92 = sbr.rel (0) target = $region45
    $region44: #{tpu_custom_call.1} parent=1 // pred_region
      _
    $region45: #{tpu_custom_call.1} parent=1 // pred_fallthru
      _
    // Predicated region
    $region46: #{tpu_custom_call.1} parent=1 // pred_check
      _
    $region47: #{tpu_custom_call.1} parent=1 // pred_check_branch
      %94 = sbr.rel (0) target = $region49
    $region48: #{tpu_custom_call.1} parent=1 // pred_region
      %95 = dma.done [#allocation6], 3584
    $region49: #{tpu_custom_call.1} parent=1 // pred_fallthru
      _
    // Predicated region
    $region50: #{tpu_custom_call.1} parent=1 // pred_check
      _
    $region51: #{tpu_custom_call.1} parent=1 // pred_check_branch
      %97 = sbr.rel (0) target = $region53
    $region52: #{tpu_custom_call.1} parent=1 // pred_region
      %98 = dma.done [#allocation8], 3072
    $region53: #{tpu_custom_call.1} parent=1 // pred_fallthru
      _
    // Predicated region
    $region54: #{tpu_custom_call.1} parent=1 // pred_check
      _
    $region55: #{tpu_custom_call.1} parent=1 // pred_check_branch
      %100 = sbr.rel (0) target = $region57
    $region56: #{tpu_custom_call.1} parent=1 // pred_region
      %101 = dma.done [#allocation8], 3072
    $region57: #{tpu_custom_call.1} parent=1 // pred_fallthru
      _
    // Predicated region
    $region58: #{tpu_custom_call.1} parent=1 // pred_check
      _
    $region59: #{tpu_custom_call.1} parent=1 // pred_check_branch
      %103 = sbr.rel (0) target = $region61
    $region60: #{tpu_custom_call.1} parent=1 // pred_region
      %104 = dma.done [#allocation11], 3072
    $region61: #{tpu_custom_call.1} parent=1 // pred_fallthru
      _
    // Predicated region
    $region62: #{tpu_custom_call.1} parent=1 // pred_check
      _
    $region63: #{tpu_custom_call.1} parent=1 // pred_check_branch
      %106 = sbr.rel (0) target = $region65
    $region64: #{tpu_custom_call.1} parent=1 // pred_region
      %107 = dma.done [#allocation11], 3072
    $region65: #{tpu_custom_call.1} parent=1 // pred_fallthru
      _
    %v109 = vld [vmem:[#allocation5] sm:$0xf]
    %v110 = vld [vmem:[#allocation5 + $0x4] sm:$0xf]
    %v111 = vld [vmem:[#allocation5 + $0x8] sm:$0xf]
    %v112 = vld [vmem:[#allocation5 + $0xc] sm:$0xf]
    %v113 = vld [vmem:[#allocation5 + $0x10] sm:$0xf]
    %v114 = vld [vmem:[#allocation5 + $0x14] sm:$0xf]
    %v115 = vld [vmem:[#allocation5 + $0x18] sm:$0xf]
    %v116 = vld [vmem:[#allocation5 + $0x1c] sm:$0xf]
    %v117 = vld [vmem:[#allocation5 + $0x20] sm:$0xf]
    %v118 = vld [vmem:[#allocation5 + $0x24] sm:$0xf]
    %v119 = vld [vmem:[#allocation5 + $0x28] sm:$0xf]
    %v120 = vld [vmem:[#allocation5 + $0x2c] sm:$0xf]
    %v121 = vld [vmem:[#allocation5 + $0x30] sm:$0xf]
    %v122 = vld [vmem:[#allocation5 + $0x34] sm:$0xf]
    %v123 = vld [vmem:[#allocation5 + $0x38] sm:$0xf]
    %v124 = vld [vmem:[#allocation5 + $0x3c] sm:$0xf]
    %v125 = vld [vmem:[#allocation5 + $0x40] sm:$0xf]
    %v126 = vld [vmem:[#allocation5 + $0x44] sm:$0xf]
    %v127 = vld [vmem:[#allocation5 + $0x48] sm:$0xf]
    %v128 = vld [vmem:[#allocation5 + $0x4c] sm:$0xf]
    %v129 = vld [vmem:[#allocation5 + $0x50] sm:$0xf]
    %v130 = vld [vmem:[#allocation5 + $0x54] sm:$0xf]
    %v131 = vld [vmem:[#allocation5 + $0x58] sm:$0xf]
    %v132 = vld [vmem:[#allocation5 + $0x5c] sm:$0xf]
    %v133 = vld [vmem:[#allocation5 + $0x60] sm:$0xf]
    %v134 = vld [vmem:[#allocation5 + $0x64] sm:$0xf]
    %v135 = vld [vmem:[#allocation5 + $0x68] sm:$0xf]
    %v136 = vld [vmem:[#allocation5 + $0x6c] sm:$0xf]
    %v137 = vld [vmem:[#allocation5 + $0x70] sm:$0xf]
    %v138 = vld [vmem:[#allocation5 + $0x74] sm:$0xf]
    %v139 = vld [vmem:[#allocation5 + $0x78] sm:$0xf]
    %v140 = vld [vmem:[#allocation5 + $0x7c] sm:$0xf]
    %v141 = vld [vmem:[#allocation5 + $0x80] sm:$0xf]
    %v142 = vld [vmem:[#allocation5 + $0x84] sm:$0xf]
    %v143 = vld [vmem:[#allocation5 + $0x88] sm:$0xf]
    %v144 = vld [vmem:[#allocation5 + $0x8c] sm:$0xf]
    %v145 = vld [vmem:[#allocation5 + $0x90] sm:$0xf]
    %v146 = vld [vmem:[#allocation5 + $0x94] sm:$0xf]
    %v147 = vld [vmem:[#allocation5 + $0x98] sm:$0xf]
    %v148 = vld [vmem:[#allocation5 + $0x9c] sm:$0xf]
    %v149 = vld [vmem:[#allocation5 + $0xa0] sm:$0xf]
    %v150 = vld [vmem:[#allocation5 + $0xa4] sm:$0xf]
    %v151 = vld [vmem:[#allocation5 + $0xa8] sm:$0xf]
    %v152 = vld [vmem:[#allocation5 + $0xac] sm:$0xf]
    %v153 = vld [vmem:[#allocation5 + $0xb0] sm:$0xf]
    %v154 = vld [vmem:[#allocation5 + $0xb4] sm:$0xf]
    %v155 = vld [vmem:[#allocation5 + $0xb8] sm:$0xf]
    %v156 = vld [vmem:[#allocation5 + $0xbc] sm:$0xf]
    %v157 = vld [vmem:[#allocation5 + $0xc0] sm:$0xf]
    %v158 = vld [vmem:[#allocation5 + $0xc4] sm:$0xf]
    %v159 = vld [vmem:[#allocation5 + $0xc8] sm:$0xf]
    %v160 = vld [vmem:[#allocation5 + $0xcc] sm:$0xf]
    %v161 = vld [vmem:[#allocation5 + $0xd0] sm:$0xf]
    %v162 = vld [vmem:[#allocation5 + $0xd4] sm:$0xf]
    %v163 = vld [vmem:[#allocation5 + $0xd8] sm:$0xf]
    %v164 = vld [vmem:[#allocation5 + $0xdc] sm:$0xf]
    %v165 = vld [vmem:[#allocation7] sm:$0xf]
    %v166 = vld [vmem:[#allocation7 + $0x4] sm:$0xf]
    %v167 = vld [vmem:[#allocation7 + $0x8] sm:$0xf]
    %v168 = vld [vmem:[#allocation7 + $0xc] sm:$0xf]
    %v169 = vld [vmem:[#allocation7 + $0x10] sm:$0xf]
    %v170 = vld [vmem:[#allocation7 + $0x14] sm:$0xf]
    %v171 = vld [vmem:[#allocation7 + $0x18] sm:$0xf]
    %v172 = vld [vmem:[#allocation7 + $0x1c] sm:$0xf]
    %v173 = vld [vmem:[#allocation7 + $0x20] sm:$0xf]
    %v174 = vld [vmem:[#allocation7 + $0x24] sm:$0xf]
    %v175 = vld [vmem:[#allocation7 + $0x28] sm:$0xf]
    %v176 = vld [vmem:[#allocation7 + $0x2c] sm:$0xf]
    %v177 = vld [vmem:[#allocation7 + $0x30] sm:$0xf]
    %v178 = vld [vmem:[#allocation7 + $0x34] sm:$0xf]
    %v179 = vld [vmem:[#allocation7 + $0x38] sm:$0xf]
    %v180 = vld [vmem:[#allocation7 + $0x3c] sm:$0xf]
    %v237 = vunpack.c.l.b16 %v109
    %v238 = vunpack.c.l.b16 %v110
    %v239 = vunpack.c.l.b16 %v111
    %v240 = vunpack.c.l.b16 %v112
    %v241 = vunpack.c.l.b16 %v113
    %v242 = vunpack.c.l.b16 %v114
    %v243 = vunpack.c.l.b16 %v115
    %v244 = vunpack.c.l.b16 %v116
    %v245 = vunpack.c.l.b16 %v117
    %v246 = vunpack.c.l.b16 %v118
    %v247 = vunpack.c.l.b16 %v119
    %v248 = vunpack.c.l.b16 %v120
    %v249 = vunpack.c.l.b16 %v121
    %v250 = vunpack.c.l.b16 %v122
    %v251 = vunpack.c.l.b16 %v123
    %v252 = vunpack.c.l.b16 %v124
    %v253 = vunpack.c.l.b16 %v125
    %v254 = vunpack.c.l.b16 %v126
    %v255 = vunpack.c.l.b16 %v127
    %v256 = vunpack.c.l.b16 %v128
    %v257 = vunpack.c.l.b16 %v129
    %v258 = vunpack.c.l.b16 %v130
    %v259 = vunpack.c.l.b16 %v131
    %v260 = vunpack.c.l.b16 %v132
    %v261 = vunpack.c.l.b16 %v133
    %v262 = vunpack.c.l.b16 %v134
    %v263 = vunpack.c.l.b16 %v135
    %v264 = vunpack.c.l.b16 %v136
    %v265 = vunpack.c.l.b16 %v137
    %v266 = vunpack.c.l.b16 %v138
    %v267 = vunpack.c.l.b16 %v139
    %v268 = vunpack.c.l.b16 %v140
    %v269 = vunpack.c.l.b16 %v141
    %v270 = vunpack.c.l.b16 %v142
    %v271 = vunpack.c.l.b16 %v143
    %v272 = vunpack.c.l.b16 %v144
    %v273 = vunpack.c.l.b16 %v145
    %v274 = vunpack.c.l.b16 %v146
    %v275 = vunpack.c.l.b16 %v147
    %v276 = vunpack.c.l.b16 %v148
    %v277 = vunpack.c.l.b16 %v149
    %v278 = vunpack.c.l.b16 %v150
    %v279 = vunpack.c.l.b16 %v151
    %v280 = vunpack.c.l.b16 %v152
    %v281 = vunpack.c.l.b16 %v153
    %v282 = vunpack.c.l.b16 %v154
    %v283 = vunpack.c.l.b16 %v155
    %v284 = vunpack.c.l.b16 %v156
    %v285 = vunpack.c.l.b16 %v157
    %v286 = vunpack.c.l.b16 %v158
    %v287 = vunpack.c.l.b16 %v159
    %v288 = vunpack.c.l.b16 %v160
    %v289 = vunpack.c.l.b16 %v161
    %v290 = vunpack.c.l.b16 %v162
    %v291 = vunpack.c.l.b16 %v163
    %v292 = vunpack.c.l.b16 %v164
    %v293 = vpack.c.b16 %v238, %v237
    %v294 = vpack.c.b16 %v240, %v239
    %v295 = vpack.c.b16 %v242, %v241
    %v296 = vpack.c.b16 %v244, %v243
    %v297 = vpack.c.b16 %v246, %v245
    %v298 = vpack.c.b16 %v248, %v247
    %v299 = vpack.c.b16 %v250, %v249
    %v300 = vpack.c.b16 %v252, %v251
    %v301 = vpack.c.b16 %v254, %v253
    %v302 = vpack.c.b16 %v256, %v255
    %v303 = vpack.c.b16 %v258, %v257
    %v304 = vpack.c.b16 %v260, %v259
    %v305 = vpack.c.b16 %v262, %v261
    %v306 = vpack.c.b16 %v264, %v263
    %v307 = vpack.c.b16 %v266, %v265
    %v308 = vpack.c.b16 %v268, %v267
    %v309 = vpack.c.b16 %v270, %v269
    %v310 = vpack.c.b16 %v272, %v271
    %v311 = vpack.c.b16 %v274, %v273
    %v312 = vpack.c.b16 %v276, %v275
    %v313 = vpack.c.b16 %v278, %v277
    %v314 = vpack.c.b16 %v280, %v279
    %v315 = vpack.c.b16 %v282, %v281
    %v316 = vpack.c.b16 %v284, %v283
    %v317 = vpack.c.b16 %v286, %v285
    %v318 = vpack.c.b16 %v288, %v287
    %v319 = vpack.c.b16 %v290, %v289
    %v320 = vpack.c.b16 %v292, %v291
    %v365 = vunpack.c.l.b16 %v165
    %v366 = vunpack.c.l.b16 %v166
    %v367 = vunpack.c.l.b16 %v167
    %v368 = vunpack.c.l.b16 %v168
    %v369 = vunpack.c.l.b16 %v169
    %v370 = vunpack.c.l.b16 %v170
    %v371 = vunpack.c.l.b16 %v171
    %v372 = vunpack.c.l.b16 %v172
    %v373 = vunpack.c.l.b16 %v173
    %v374 = vunpack.c.l.b16 %v174
    %v375 = vunpack.c.l.b16 %v175
    %v376 = vunpack.c.l.b16 %v176
    %v377 = vunpack.c.l.b16 %v177
    %v378 = vunpack.c.l.b16 %v178
    %v379 = vunpack.c.l.b16 %v179
    %v380 = vunpack.c.l.b16 %v180
    %v381 = vpack.c.b16 %v366, %v365
    %v382 = vpack.c.b16 %v368, %v367
    %v383 = vpack.c.b16 %v370, %v369
    %v384 = vpack.c.b16 %v372, %v371
    %v385 = vpack.c.b16 %v374, %v373
    %v386 = vpack.c.b16 %v376, %v375
    %v387 = vpack.c.b16 %v378, %v377
    %v388 = vpack.c.b16 %v380, %v379
    %397 = vmatprep.subr.bf16.mxu0 0
    %398 = vmatpush1.bf16.msra.mxu0 %v388
    %399 = vmatprep.subr.bf16.mxu0 0
    %400 = vmatpush1.bf16.msra.mxu0 %v387
    %401 = vmatprep.subr.bf16.mxu0 0
    %402 = vmatpush1.bf16.msra.mxu0 %v386
    %403 = vmatprep.subr.bf16.mxu0 0
    %404 = vmatpush1.bf16.msra.mxu0 %v385
    %405 = vmatprep.subr.bf16.mxu0 0
    %406 = vmatpush1.bf16.msra.mxu0 %v384
    %407 = vmatprep.subr.bf16.mxu0 0
    %408 = vmatpush1.bf16.msra.mxu0 %v383
    %409 = vmatprep.subr.bf16.mxu0 0
    %410 = vmatpush1.bf16.msra.mxu0 %v382
    %411 = vmatprep.subr.bf16.mxu0 0
    %412 = vmatpush1.bf16.msra.mxu0 %v381
    %413 = vmatprep.subr.bf16.mxu0 0
    %414 = vmatpush2.bf16.msra.mxu0 0
    %415 = vmatprep.subr.bf16.mxu0 0
    %416 = vmatpush2.bf16.msra.mxu0 0
    %417 = vmatprep.subr.bf16.mxu0 0
    %418 = vmatpush2.bf16.msra.mxu0 0
    %419 = vmatprep.subr.bf16.mxu0 0
    %420 = vmatpush2.bf16.msra.mxu0 0
    %421 = vmatprep.subr.bf16.mxu0 0
    %422 = vmatpush2.bf16.msra.mxu0 0
    %423 = vmatprep.subr.bf16.mxu0 0
    %424 = vmatpush2.bf16.msra.mxu0 0
    %425 = vmatprep.subr.bf16.mxu0 0
    %426 = vmatpush2.bf16.msra.mxu0 0
    %427 = vmatprep.subr.bf16.mxu0 0
    %428 = vmatpush2.bf16.msra.mxu0 0
    %429 = vmatprep.mubr.bf16.mxu0 0
    %430 = vmatmul.mubr.bf16.gmra.mxu0 %v293
    %v431 = vpop.f32.mrf.mxu0
    %v432 = vadd.f32 0.0, %v431
    %v433 = vpop.f32.mrf.mxu0
    %v434 = vpop.f32.mrf.mxu0
    %v435 = vadd.f32 0.0, %v434
    %v436 = vpop.f32.mrf.mxu0
    %437 = vmatprep.mubr.bf16.mxu0 0
    %438 = vmatmul.mubr.bf16.gmra.mxu0 %v294
    %v439 = vpop.f32.mrf.mxu0
    %v440 = vadd.f32 0.0, %v439
    %v441 = vpop.f32.mrf.mxu0
    %v442 = vpop.f32.mrf.mxu0
    %v443 = vadd.f32 0.0, %v442
    %v444 = vpop.f32.mrf.mxu0
    %445 = vmatprep.mubr.bf16.mxu0 0
    %446 = vmatmul.mubr.bf16.gmra.mxu0 %v295
    %v447 = vpop.f32.mrf.mxu0
    %v448 = vadd.f32 0.0, %v447
    %v449 = vpop.f32.mrf.mxu0
    %v450 = vpop.f32.mrf.mxu0
    %v451 = vadd.f32 0.0, %v450
    %v452 = vpop.f32.mrf.mxu0
    %453 = vmatprep.mubr.bf16.mxu0 0
    %454 = vmatmul.mubr.bf16.gmra.mxu0 %v296
    %v455 = vpop.f32.mrf.mxu0
    %v456 = vadd.f32 0.0, %v455
    %v457 = vpop.f32.mrf.mxu0
    %v458 = vpop.f32.mrf.mxu0
    %v459 = vadd.f32 0.0, %v458
    %v460 = vpop.f32.mrf.mxu0
    %461 = vmatprep.mubr.bf16.mxu0 0
    %462 = vmatmul.mubr.bf16.gmra.mxu0 %v297
    %v463 = vpop.f32.mrf.mxu0
    %v464 = vadd.f32 0.0, %v463
    %v465 = vpop.f32.mrf.mxu0
    %v466 = vpop.f32.mrf.mxu0
    %v467 = vadd.f32 0.0, %v466
    %v468 = vpop.f32.mrf.mxu0
    %469 = vmatprep.mubr.bf16.mxu0 0
    %470 = vmatmul.mubr.bf16.gmra.mxu0 %v298
    %v471 = vpop.f32.mrf.mxu0
    %v472 = vadd.f32 0.0, %v471
    %v473 = vpop.f32.mrf.mxu0
    %v474 = vpop.f32.mrf.mxu0
    %v475 = vadd.f32 0.0, %v474
    %v476 = vpop.f32.mrf.mxu0
    %477 = vmatprep.mubr.bf16.mxu0 0
    %478 = vmatmul.mubr.bf16.gmra.mxu0 %v299
    %v479 = vpop.f32.mrf.mxu0
    %v480 = vadd.f32 0.0, %v479
    %v481 = vpop.f32.mrf.mxu0
    %v482 = vpop.f32.mrf.mxu0
    %v483 = vadd.f32 0.0, %v482
    %v484 = vpop.f32.mrf.mxu0
    %485 = vmatprep.mubr.bf16.mxu0 0
    %486 = vmatmul.mubr.bf16.gmra.mxu0 %v300
    %v487 = vpop.f32.mrf.mxu0
    %v488 = vadd.f32 0.0, %v487
    %v489 = vpop.f32.mrf.mxu0
    %v490 = vpop.f32.mrf.mxu0
    %v491 = vadd.f32 0.0, %v490
    %v492 = vpop.f32.mrf.mxu0
    %493 = vmatprep.mubr.bf16.mxu0 0
    %494 = vmatmul.mubr.bf16.gmra.mxu0 %v301
    %v495 = vpop.f32.mrf.mxu0
    %v496 = vadd.f32 0.0, %v495
    %v497 = vpop.f32.mrf.mxu0
    %v498 = vpop.f32.mrf.mxu0
    %v499 = vadd.f32 0.0, %v498
    %v500 = vpop.f32.mrf.mxu0
    %501 = vmatprep.mubr.bf16.mxu0 0
    %502 = vmatmul.mubr.bf16.gmra.mxu0 %v302
    %v503 = vpop.f32.mrf.mxu0
    %v504 = vadd.f32 0.0, %v503
    %v505 = vpop.f32.mrf.mxu0
    %v506 = vpop.f32.mrf.mxu0
    %v507 = vadd.f32 0.0, %v506
    %v508 = vpop.f32.mrf.mxu0
    %509 = vmatprep.mubr.bf16.mxu0 0
    %510 = vmatmul.mubr.bf16.gmra.mxu0 %v303
    %v511 = vpop.f32.mrf.mxu0
    %v512 = vadd.f32 0.0, %v511
    %v513 = vpop.f32.mrf.mxu0
    %v514 = vpop.f32.mrf.mxu0
    %v515 = vadd.f32 0.0, %v514
    %v516 = vpop.f32.mrf.mxu0
    %517 = vmatprep.mubr.bf16.mxu0 0
    %518 = vmatmul.mubr.bf16.gmra.mxu0 %v304
    %v519 = vpop.f32.mrf.mxu0
    %v520 = vadd.f32 0.0, %v519
    %v521 = vpop.f32.mrf.mxu0
    %v522 = vpop.f32.mrf.mxu0
    %v523 = vadd.f32 0.0, %v522
    %v524 = vpop.f32.mrf.mxu0
    %525 = vmatprep.mubr.bf16.mxu0 0
    %526 = vmatmul.mubr.bf16.gmra.mxu0 %v305
    %v527 = vpop.f32.mrf.mxu0
    %v528 = vadd.f32 0.0, %v527
    %v529 = vpop.f32.mrf.mxu0
    %v530 = vpop.f32.mrf.mxu0
    %v531 = vadd.f32 0.0, %v530
    %v532 = vpop.f32.mrf.mxu0
    %533 = vmatprep.mubr.bf16.mxu0 0
    %534 = vmatmul.mubr.bf16.gmra.mxu0 %v306
    %v535 = vpop.f32.mrf.mxu0
    %v536 = vadd.f32 0.0, %v535
    %v537 = vpop.f32.mrf.mxu0
    %v538 = vpop.f32.mrf.mxu0
    %v539 = vadd.f32 0.0, %v538
    %v540 = vpop.f32.mrf.mxu0
    %541 = vmatprep.mubr.bf16.mxu0 0
    %542 = vmatmul.mubr.bf16.gmra.mxu0 %v307
    %v543 = vpop.f32.mrf.mxu0
    %v544 = vadd.f32 0.0, %v543
    %v545 = vpop.f32.mrf.mxu0
    %v546 = vpop.f32.mrf.mxu0
    %v547 = vadd.f32 0.0, %v546
    %v548 = vpop.f32.mrf.mxu0
    %549 = vmatprep.mubr.bf16.mxu0 0
    %550 = vmatmul.mubr.bf16.gmra.mxu0 %v308
    %v551 = vpop.f32.mrf.mxu0
    %v552 = vadd.f32 0.0, %v551
    %v553 = vpop.f32.mrf.mxu0
    %v554 = vpop.f32.mrf.mxu0
    %v555 = vadd.f32 0.0, %v554
    %v556 = vpop.f32.mrf.mxu0
    %557 = vmatprep.mubr.bf16.mxu0 0
    %558 = vmatmul.mubr.bf16.gmra.mxu0 %v309
    %v559 = vpop.f32.mrf.mxu0
    %v560 = vadd.f32 0.0, %v559
    %v561 = vpop.f32.mrf.mxu0
    %v562 = vpop.f32.mrf.mxu0
    %v563 = vadd.f32 0.0, %v562
    %v564 = vpop.f32.mrf.mxu0
    %565 = vmatprep.mubr.bf16.mxu0 0
    %566 = vmatmul.mubr.bf16.gmra.mxu0 %v310
    %v567 = vpop.f32.mrf.mxu0
    %v568 = vadd.f32 0.0, %v567
    %v569 = vpop.f32.mrf.mxu0
    %v570 = vpop.f32.mrf.mxu0
    %v571 = vadd.f32 0.0, %v570
    %v572 = vpop.f32.mrf.mxu0
    %573 = vmatprep.mubr.bf16.mxu0 0
    %574 = vmatmul.mubr.bf16.gmra.mxu0 %v311
    %v575 = vpop.f32.mrf.mxu0
    %v576 = vadd.f32 0.0, %v575
    %v577 = vpop.f32.mrf.mxu0
    %v578 = vpop.f32.mrf.mxu0
    %v579 = vadd.f32 0.0, %v578
    %v580 = vpop.f32.mrf.mxu0
    %581 = vmatprep.mubr.bf16.mxu0 0
    %582 = vmatmul.mubr.bf16.gmra.mxu0 %v312
    %v583 = vpop.f32.mrf.mxu0
    %v584 = vadd.f32 0.0, %v583
    %v585 = vpop.f32.mrf.mxu0
    %v586 = vpop.f32.mrf.mxu0
    %v587 = vadd.f32 0.0, %v586
    %v588 = vpop.f32.mrf.mxu0
    %589 = vmatprep.mubr.bf16.mxu0 0
    %590 = vmatmul.mubr.bf16.gmra.mxu0 %v313
    %v591 = vpop.f32.mrf.mxu0
    %v592 = vadd.f32 0.0, %v591
    %v593 = vpop.f32.mrf.mxu0
    %v594 = vpop.f32.mrf.mxu0
    %v595 = vadd.f32 0.0, %v594
    %v596 = vpop.f32.mrf.mxu0
    %597 = vmatprep.mubr.bf16.mxu0 0
    %598 = vmatmul.mubr.bf16.gmra.mxu0 %v314
    %v599 = vpop.f32.mrf.mxu0
    %v600 = vadd.f32 0.0, %v599
    %v601 = vpop.f32.mrf.mxu0
    %v602 = vpop.f32.mrf.mxu0
    %v603 = vadd.f32 0.0, %v602
    %v604 = vpop.f32.mrf.mxu0
    %605 = vmatprep.mubr.bf16.mxu0 0
    %606 = vmatmul.mubr.bf16.gmra.mxu0 %v315
    %v607 = vpop.f32.mrf.mxu0
    %v608 = vadd.f32 0.0, %v607
    %v609 = vpop.f32.mrf.mxu0
    %v610 = vpop.f32.mrf.mxu0
    %v611 = vadd.f32 0.0, %v610
    %v612 = vpop.f32.mrf.mxu0
    %613 = vmatprep.mubr.bf16.mxu0 0
    %614 = vmatmul.mubr.bf16.gmra.mxu0 %v316
    %v615 = vpop.f32.mrf.mxu0
    %v616 = vadd.f32 0.0, %v615
    %v617 = vpop.f32.mrf.mxu0
    %v618 = vpop.f32.mrf.mxu0
    %v619 = vadd.f32 0.0, %v618
    %v620 = vpop.f32.mrf.mxu0
    %621 = vmatprep.mubr.bf16.mxu0 0
    %622 = vmatmul.mubr.bf16.gmra.mxu0 %v317
    %v623 = vpop.f32.mrf.mxu0
    %v624 = vadd.f32 0.0, %v623
    %v625 = vpop.f32.mrf.mxu0
    %v626 = vpop.f32.mrf.mxu0
    %v627 = vadd.f32 0.0, %v626
    %v628 = vpop.f32.mrf.mxu0
    %629 = vmatprep.mubr.bf16.mxu0 0
    %630 = vmatmul.mubr.bf16.gmra.mxu0 %v318
    %v631 = vpop.f32.mrf.mxu0
    %v632 = vadd.f32 0.0, %v631
    %v633 = vpop.f32.mrf.mxu0
    %v634 = vpop.f32.mrf.mxu0
    %v635 = vadd.f32 0.0, %v634
    %v636 = vpop.f32.mrf.mxu0
    %637 = vmatprep.mubr.bf16.mxu0 0
    %638 = vmatmul.mubr.bf16.gmra.mxu0 %v319
    %v639 = vpop.f32.mrf.mxu0
    %v640 = vadd.f32 0.0, %v639
    %v641 = vpop.f32.mrf.mxu0
    %v642 = vpop.f32.mrf.mxu0
    %v643 = vadd.f32 0.0, %v642
    %v644 = vpop.f32.mrf.mxu0
    %645 = vmatprep.mubr.bf16.mxu0 0
    %646 = vmatmul.mubr.bf16.gmra.mxu0 %v320
    %v647 = vpop.f32.mrf.mxu0
    %v648 = vadd.f32 0.0, %v647
    %v649 = vpop.f32.mrf.mxu0
    %v650 = vpop.f32.mrf.mxu0
    %v651 = vadd.f32 0.0, %v650
    %v652 = vpop.f32.mrf.mxu0
    %653 = vdwg.mxu0
    %s654 = scalar_lea.vmem [#allocation7], 64
    %v655 = vld [vmem:[%s654] sm:$0xf]
    %v656 = vld [vmem:[%s654 + $0x4] sm:$0xf]
    %v657 = vld [vmem:[%s654 + $0x8] sm:$0xf]
    %v658 = vld [vmem:[%s654 + $0xc] sm:$0xf]
    %v659 = vld [vmem:[%s654 + $0x10] sm:$0xf]
    %v660 = vld [vmem:[%s654 + $0x14] sm:$0xf]
    %v661 = vld [vmem:[%s654 + $0x18] sm:$0xf]
    %v662 = vld [vmem:[%s654 + $0x1c] sm:$0xf]
    %v663 = vld [vmem:[%s654 + $0x20] sm:$0xf]
    %v664 = vld [vmem:[%s654 + $0x24] sm:$0xf]
    %v665 = vld [vmem:[%s654 + $0x28] sm:$0xf]
    %v666 = vld [vmem:[%s654 + $0x2c] sm:$0xf]
    %v667 = vld [vmem:[%s654 + $0x30] sm:$0xf]
    %v668 = vld [vmem:[%s654 + $0x34] sm:$0xf]
    %v669 = vld [vmem:[%s654 + $0x38] sm:$0xf]
    %v670 = vld [vmem:[%s654 + $0x3c] sm:$0xf]
    %v687 = vunpack.c.l.b16 %v655
    %v688 = vunpack.c.l.b16 %v656
    %v689 = vunpack.c.l.b16 %v657
    %v690 = vunpack.c.l.b16 %v658
    %v691 = vunpack.c.l.b16 %v659
    %v692 = vunpack.c.l.b16 %v660
    %v693 = vunpack.c.l.b16 %v661
    %v694 = vunpack.c.l.b16 %v662
    %v695 = vunpack.c.l.b16 %v663
    %v696 = vunpack.c.l.b16 %v664
    %v697 = vunpack.c.l.b16 %v665
    %v698 = vunpack.c.l.b16 %v666
    %v699 = vunpack.c.l.b16 %v667
    %v700 = vunpack.c.l.b16 %v668
    %v701 = vunpack.c.l.b16 %v669
    %v702 = vunpack.c.l.b16 %v670
    %v703 = vpack.c.b16 %v688, %v687
    %v704 = vpack.c.b16 %v690, %v689
    %v705 = vpack.c.b16 %v692, %v691
    %v706 = vpack.c.b16 %v694, %v693
    %v707 = vpack.c.b16 %v696, %v695
    %v708 = vpack.c.b16 %v698, %v697
    %v709 = vpack.c.b16 %v700, %v699
    %v710 = vpack.c.b16 %v702, %v701
    %719 = vmatprep.subr.bf16.mxu0 0
    %720 = vmatpush1.bf16.msra.mxu0 %v710
    %721 = vmatprep.subr.bf16.mxu0 0
    %722 = vmatpush1.bf16.msra.mxu0 %v709
    %723 = vmatprep.subr.bf16.mxu0 0
    %724 = vmatpush1.bf16.msra.mxu0 %v708
    %725 = vmatprep.subr.bf16.mxu0 0
    %726 = vmatpush1.bf16.msra.mxu0 %v707
    %727 = vmatprep.subr.bf16.mxu0 0
    %728 = vmatpush1.bf16.msra.mxu0 %v706
    %729 = vmatprep.subr.bf16.mxu0 0
    %730 = vmatpush1.bf16.msra.mxu0 %v705
    %731 = vmatprep.subr.bf16.mxu0 0
    %732 = vmatpush1.bf16.msra.mxu0 %v704
    %733 = vmatprep.subr.bf16.mxu0 0
    %734 = vmatpush1.bf16.msra.mxu0 %v703
    %735 = vmatprep.subr.bf16.mxu0 0
    %736 = vmatpush2.bf16.msra.mxu0 0
    %737 = vmatprep.subr.bf16.mxu0 0
    %738 = vmatpush2.bf16.msra.mxu0 0
    %739 = vmatprep.subr.bf16.mxu0 0
    %740 = vmatpush2.bf16.msra.mxu0 0
    %741 = vmatprep.subr.bf16.mxu0 0
    %742 = vmatpush2.bf16.msra.mxu0 0
    %743 = vmatprep.subr.bf16.mxu0 0
    %744 = vmatpush2.bf16.msra.mxu0 0
    %745 = vmatprep.subr.bf16.mxu0 0
    %746 = vmatpush2.bf16.msra.mxu0 0
    %747 = vmatprep.subr.bf16.mxu0 0
    %748 = vmatpush2.bf16.msra.mxu0 0
    %749 = vmatprep.subr.bf16.mxu0 0
    %750 = vmatpush2.bf16.msra.mxu0 0
    %751 = vmatprep.mubr.bf16.mxu0 0
    %752 = vmatmul.mubr.bf16.gmra.mxu0 %v293
    %v753 = vpop.f32.mrf.mxu0
    %v754 = vadd.f32 0.0, %v753
    %v755 = vpop.f32.mrf.mxu0
    %v756 = vpop.f32.mrf.mxu0
    %v757 = vadd.f32 0.0, %v756
    %v758 = vpop.f32.mrf.mxu0
    %759 = vmatprep.mubr.bf16.mxu0 0
    %760 = vmatmul.mubr.bf16.gmra.mxu0 %v294
    %v761 = vpop.f32.mrf.mxu0
    %v762 = vadd.f32 0.0, %v761
    %v763 = vpop.f32.mrf.mxu0
    %v764 = vpop.f32.mrf.mxu0
    %v765 = vadd.f32 0.0, %v764
    %v766 = vpop.f32.mrf.mxu0
    %767 = vmatprep.mubr.bf16.mxu0 0
    %768 = vmatmul.mubr.bf16.gmra.mxu0 %v295
    %v769 = vpop.f32.mrf.mxu0
    %v770 = vadd.f32 0.0, %v769
    %v771 = vpop.f32.mrf.mxu0
    %v772 = vpop.f32.mrf.mxu0
    %v773 = vadd.f32 0.0, %v772
    %v774 = vpop.f32.mrf.mxu0
    %775 = vmatprep.mubr.bf16.mxu0 0
    %776 = vmatmul.mubr.bf16.gmra.mxu0 %v296
    %v777 = vpop.f32.mrf.mxu0
    %v778 = vadd.f32 0.0, %v777
    %v779 = vpop.f32.mrf.mxu0
    %v780 = vpop.f32.mrf.mxu0
    %v781 = vadd.f32 0.0, %v780
    %v782 = vpop.f32.mrf.mxu0
    %783 = vmatprep.mubr.bf16.mxu0 0
    %784 = vmatmul.mubr.bf16.gmra.mxu0 %v297
    %v785 = vpop.f32.mrf.mxu0
    %v786 = vadd.f32 0.0, %v785
    %v787 = vpop.f32.mrf.mxu0
    %v788 = vpop.f32.mrf.mxu0
    %v789 = vadd.f32 0.0, %v788
    %v790 = vpop.f32.mrf.mxu0
    %791 = vmatprep.mubr.bf16.mxu0 0
    %792 = vmatmul.mubr.bf16.gmra.mxu0 %v298
    %v793 = vpop.f32.mrf.mxu0
    %v794 = vadd.f32 0.0, %v793
    %v795 = vpop.f32.mrf.mxu0
    %v796 = vpop.f32.mrf.mxu0
    %v797 = vadd.f32 0.0, %v796
    %v798 = vpop.f32.mrf.mxu0
    %799 = vmatprep.mubr.bf16.mxu0 0
    %800 = vmatmul.mubr.bf16.gmra.mxu0 %v299
    %v801 = vpop.f32.mrf.mxu0
    %v802 = vadd.f32 0.0, %v801
    %v803 = vpop.f32.mrf.mxu0
    %v804 = vpop.f32.mrf.mxu0
    %v805 = vadd.f32 0.0, %v804
    %v806 = vpop.f32.mrf.mxu0
    %807 = vmatprep.mubr.bf16.mxu0 0
    %808 = vmatmul.mubr.bf16.gmra.mxu0 %v300
    %v809 = vpop.f32.mrf.mxu0
    %v810 = vadd.f32 0.0, %v809
    %v811 = vpop.f32.mrf.mxu0
    %v812 = vpop.f32.mrf.mxu0
    %v813 = vadd.f32 0.0, %v812
    %v814 = vpop.f32.mrf.mxu0
    %815 = vmatprep.mubr.bf16.mxu0 0
    %816 = vmatmul.mubr.bf16.gmra.mxu0 %v301
    %v817 = vpop.f32.mrf.mxu0
    %v818 = vadd.f32 0.0, %v817
    %v819 = vpop.f32.mrf.mxu0
    %v820 = vpop.f32.mrf.mxu0
    %v821 = vadd.f32 0.0, %v820
    %v822 = vpop.f32.mrf.mxu0
    %823 = vmatprep.mubr.bf16.mxu0 0
    %824 = vmatmul.mubr.bf16.gmra.mxu0 %v302
    %v825 = vpop.f32.mrf.mxu0
    %v826 = vadd.f32 0.0, %v825
    %v827 = vpop.f32.mrf.mxu0
    %v828 = vpop.f32.mrf.mxu0
    %v829 = vadd.f32 0.0, %v828
    %v830 = vpop.f32.mrf.mxu0
    %831 = vmatprep.mubr.bf16.mxu0 0
    %832 = vmatmul.mubr.bf16.gmra.mxu0 %v303
    %v833 = vpop.f32.mrf.mxu0
    %v834 = vadd.f32 0.0, %v833
    %v835 = vpop.f32.mrf.mxu0
    %v836 = vpop.f32.mrf.mxu0
    %v837 = vadd.f32 0.0, %v836
    %v838 = vpop.f32.mrf.mxu0
    %839 = vmatprep.mubr.bf16.mxu0 0
    %840 = vmatmul.mubr.bf16.gmra.mxu0 %v304
    %v841 = vpop.f32.mrf.mxu0
    %v842 = vadd.f32 0.0, %v841
    %v843 = vpop.f32.mrf.mxu0
    %v844 = vpop.f32.mrf.mxu0
    %v845 = vadd.f32 0.0, %v844
    %v846 = vpop.f32.mrf.mxu0
    %847 = vmatprep.mubr.bf16.mxu0 0
    %848 = vmatmul.mubr.bf16.gmra.mxu0 %v305
    %v849 = vpop.f32.mrf.mxu0
    %v850 = vadd.f32 0.0, %v849
    %v851 = vpop.f32.mrf.mxu0
    %v852 = vpop.f32.mrf.mxu0
    %v853 = vadd.f32 0.0, %v852
    %v854 = vpop.f32.mrf.mxu0
    %855 = vmatprep.mubr.bf16.mxu0 0
    %856 = vmatmul.mubr.bf16.gmra.mxu0 %v306
    %v857 = vpop.f32.mrf.mxu0
    %v858 = vadd.f32 0.0, %v857
    %v859 = vpop.f32.mrf.mxu0
    %v860 = vpop.f32.mrf.mxu0
    %v861 = vadd.f32 0.0, %v860
    %v862 = vpop.f32.mrf.mxu0
    %863 = vmatprep.mubr.bf16.mxu0 0
    %864 = vmatmul.mubr.bf16.gmra.mxu0 %v307
    %v865 = vpop.f32.mrf.mxu0
    %v866 = vadd.f32 0.0, %v865
    %v867 = vpop.f32.mrf.mxu0
    %v868 = vpop.f32.mrf.mxu0
    %v869 = vadd.f32 0.0, %v868
    %v870 = vpop.f32.mrf.mxu0
    %871 = vmatprep.mubr.bf16.mxu0 0
    %872 = vmatmul.mubr.bf16.gmra.mxu0 %v308
    %v873 = vpop.f32.mrf.mxu0
    %v874 = vadd.f32 0.0, %v873
    %v875 = vpop.f32.mrf.mxu0
    %v876 = vpop.f32.mrf.mxu0
    %v877 = vadd.f32 0.0, %v876
    %v878 = vpop.f32.mrf.mxu0
    %879 = vmatprep.mubr.bf16.mxu0 0
    %880 = vmatmul.mubr.bf16.gmra.mxu0 %v309
    %v881 = vpop.f32.mrf.mxu0
    %v882 = vadd.f32 0.0, %v881
    %v883 = vpop.f32.mrf.mxu0
    %v884 = vpop.f32.mrf.mxu0
    %v885 = vadd.f32 0.0, %v884
    %v886 = vpop.f32.mrf.mxu0
    %887 = vmatprep.mubr.bf16.mxu0 0
    %888 = vmatmul.mubr.bf16.gmra.mxu0 %v310
    %v889 = vpop.f32.mrf.mxu0
    %v890 = vadd.f32 0.0, %v889
    %v891 = vpop.f32.mrf.mxu0
    %v892 = vpop.f32.mrf.mxu0
    %v893 = vadd.f32 0.0, %v892
    %v894 = vpop.f32.mrf.mxu0
    %895 = vmatprep.mubr.bf16.mxu0 0
    %896 = vmatmul.mubr.bf16.gmra.mxu0 %v311
    %v897 = vpop.f32.mrf.mxu0
    %v898 = vadd.f32 0.0, %v897
    %v899 = vpop.f32.mrf.mxu0
    %v900 = vpop.f32.mrf.mxu0
    %v901 = vadd.f32 0.0, %v900
    %v902 = vpop.f32.mrf.mxu0
    %903 = vmatprep.mubr.bf16.mxu0 0
    %904 = vmatmul.mubr.bf16.gmra.mxu0 %v312
    %v905 = vpop.f32.mrf.mxu0
    %v906 = vadd.f32 0.0, %v905
    %v907 = vpop.f32.mrf.mxu0
    %v908 = vpop.f32.mrf.mxu0
    %v909 = vadd.f32 0.0, %v908
    %v910 = vpop.f32.mrf.mxu0
    %911 = vmatprep.mubr.bf16.mxu0 0
    %912 = vmatmul.mubr.bf16.gmra.mxu0 %v313
    %v913 = vpop.f32.mrf.mxu0
    %v914 = vadd.f32 0.0, %v913
    %v915 = vpop.f32.mrf.mxu0
    %v916 = vpop.f32.mrf.mxu0
    %v917 = vadd.f32 0.0, %v916
    %v918 = vpop.f32.mrf.mxu0
    %919 = vmatprep.mubr.bf16.mxu0 0
    %920 = vmatmul.mubr.bf16.gmra.mxu0 %v314
    %v921 = vpop.f32.mrf.mxu0
    %v922 = vadd.f32 0.0, %v921
    %v923 = vpop.f32.mrf.mxu0
    %v924 = vpop.f32.mrf.mxu0
    %v925 = vadd.f32 0.0, %v924
    %v926 = vpop.f32.mrf.mxu0
    %927 = vmatprep.mubr.bf16.mxu0 0
    %928 = vmatmul.mubr.bf16.gmra.mxu0 %v315
    %v929 = vpop.f32.mrf.mxu0
    %v930 = vadd.f32 0.0, %v929
    %v931 = vpop.f32.mrf.mxu0
    %v932 = vpop.f32.mrf.mxu0
    %v933 = vadd.f32 0.0, %v932
    %v934 = vpop.f32.mrf.mxu0
    %935 = vmatprep.mubr.bf16.mxu0 0
    %936 = vmatmul.mubr.bf16.gmra.mxu0 %v316
    %v937 = vpop.f32.mrf.mxu0
    %v938 = vadd.f32 0.0, %v937
    %v939 = vpop.f32.mrf.mxu0
    %v940 = vpop.f32.mrf.mxu0
    %v941 = vadd.f32 0.0, %v940
    %v942 = vpop.f32.mrf.mxu0
    %943 = vmatprep.mubr.bf16.mxu0 0
    %944 = vmatmul.mubr.bf16.gmra.mxu0 %v317
    %v945 = vpop.f32.mrf.mxu0
    %v946 = vadd.f32 0.0, %v945
    %v947 = vpop.f32.mrf.mxu0
    %v948 = vpop.f32.mrf.mxu0
    %v949 = vadd.f32 0.0, %v948
    %v950 = vpop.f32.mrf.mxu0
    %951 = vmatprep.mubr.bf16.mxu0 0
    %952 = vmatmul.mubr.bf16.gmra.mxu0 %v318
    %v953 = vpop.f32.mrf.mxu0
    %v954 = vadd.f32 0.0, %v953
    %v955 = vpop.f32.mrf.mxu0
    %v956 = vpop.f32.mrf.mxu0
    %v957 = vadd.f32 0.0, %v956
    %v958 = vpop.f32.mrf.mxu0
    %959 = vmatprep.mubr.bf16.mxu0 0
    %960 = vmatmul.mubr.bf16.gmra.mxu0 %v319
    %v961 = vpop.f32.mrf.mxu0
    %v962 = vadd.f32 0.0, %v961
    %v963 = vpop.f32.mrf.mxu0
    %v964 = vpop.f32.mrf.mxu0
    %v965 = vadd.f32 0.0, %v964
    %v966 = vpop.f32.mrf.mxu0
    %967 = vmatprep.mubr.bf16.mxu0 0
    %968 = vmatmul.mubr.bf16.gmra.mxu0 %v320
    %v969 = vpop.f32.mrf.mxu0
    %v970 = vadd.f32 0.0, %v969
    %v971 = vpop.f32.mrf.mxu0
    %v972 = vpop.f32.mrf.mxu0
    %v973 = vadd.f32 0.0, %v972
    %v974 = vpop.f32.mrf.mxu0
    %975 = vdwg.mxu0
    %s976 = scalar_lea.vmem [#allocation7], 128
    %v977 = vld [vmem:[%s976] sm:$0xf]
    %v978 = vld [vmem:[%s976 + $0x4] sm:$0xf]
    %v979 = vld [vmem:[%s976 + $0x8] sm:$0xf]
    %v980 = vld [vmem:[%s976 + $0xc] sm:$0xf]
    %v981 = vld [vmem:[%s976 + $0x10] sm:$0xf]
    %v982 = vld [vmem:[%s976 + $0x14] sm:$0xf]
    %v983 = vld [vmem:[%s976 + $0x18] sm:$0xf]
    %v984 = vld [vmem:[%s976 + $0x1c] sm:$0xf]
    %v985 = vld [vmem:[%s976 + $0x20] sm:$0xf]
    %v986 = vld [vmem:[%s976 + $0x24] sm:$0xf]
    %v987 = vld [vmem:[%s976 + $0x28] sm:$0xf]
    %v988 = vld [vmem:[%s976 + $0x2c] sm:$0xf]
    %v989 = vld [vmem:[%s976 + $0x30] sm:$0xf]
    %v990 = vld [vmem:[%s976 + $0x34] sm:$0xf]
    %v991 = vld [vmem:[%s976 + $0x38] sm:$0xf]
    %v992 = vld [vmem:[%s976 + $0x3c] sm:$0xf]
    %v1009 = vunpack.c.l.b16 %v977
    %v1010 = vunpack.c.l.b16 %v978
    %v1011 = vunpack.c.l.b16 %v979
    %v1012 = vunpack.c.l.b16 %v980
    %v1013 = vunpack.c.l.b16 %v981
    %v1014 = vunpack.c.l.b16 %v982
    %v1015 = vunpack.c.l.b16 %v983
    %v1016 = vunpack.c.l.b16 %v984
    %v1017 = vunpack.c.l.b16 %v985
    %v1018 = vunpack.c.l.b16 %v986
    %v1019 = vunpack.c.l.b16 %v987
    %v1020 = vunpack.c.l.b16 %v988
    %v1021 = vunpack.c.l.b16 %v989
    %v1022 = vunpack.c.l.b16 %v990
    %v1023 = vunpack.c.l.b16 %v991
    %v1024 = vunpack.c.l.b16 %v992
    %v1025 = vpack.c.b16 %v1010, %v1009
    %v1026 = vpack.c.b16 %v1012, %v1011
    %v1027 = vpack.c.b16 %v1014, %v1013
    %v1028 = vpack.c.b16 %v1016, %v1015
    %v1029 = vpack.c.b16 %v1018, %v1017
    %v1030 = vpack.c.b16 %v1020, %v1019
    %v1031 = vpack.c.b16 %v1022, %v1021
    %v1032 = vpack.c.b16 %v1024, %v1023
    %1041 = vmatprep.subr.bf16.mxu0 0
    %1042 = vmatpush1.bf16.msra.mxu0 %v1032
    %1043 = vmatprep.subr.bf16.mxu0 0
    %1044 = vmatpush1.bf16.msra.mxu0 %v1031
    %1045 = vmatprep.subr.bf16.mxu0 0
    %1046 = vmatpush1.bf16.msra.mxu0 %v1030
    %1047 = vmatprep.subr.bf16.mxu0 0
    %1048 = vmatpush1.bf16.msra.mxu0 %v1029
    %1049 = vmatprep.subr.bf16.mxu0 0
    %1050 = vmatpush1.bf16.msra.mxu0 %v1028
    %1051 = vmatprep.subr.bf16.mxu0 0
    %1052 = vmatpush1.bf16.msra.mxu0 %v1027
    %1053 = vmatprep.subr.bf16.mxu0 0
    %1054 = vmatpush1.bf16.msra.mxu0 %v1026
    %1055 = vmatprep.subr.bf16.mxu0 0
    %1056 = vmatpush1.bf16.msra.mxu0 %v1025
    %1057 = vmatprep.subr.bf16.mxu0 0
    %1058 = vmatpush2.bf16.msra.mxu0 0
    %1059 = vmatprep.subr.bf16.mxu0 0
    %1060 = vmatpush2.bf16.msra.mxu0 0
    %1061 = vmatprep.subr.bf16.mxu0 0
    %1062 = vmatpush2.bf16.msra.mxu0 0
    %1063 = vmatprep.subr.bf16.mxu0 0
    %1064 = vmatpush2.bf16.msra.mxu0 0
    %1065 = vmatprep.subr.bf16.mxu0 0
    %1066 = vmatpush2.bf16.msra.mxu0 0
    %1067 = vmatprep.subr.bf16.mxu0 0
    %1068 = vmatpush2.bf16.msra.mxu0 0
    %1069 = vmatprep.subr.bf16.mxu0 0
    %1070 = vmatpush2.bf16.msra.mxu0 0
    %1071 = vmatprep.subr.bf16.mxu0 0
    %1072 = vmatpush2.bf16.msra.mxu0 0
    %1073 = vmatprep.mubr.bf16.mxu0 0
    %1074 = vmatmul.mubr.bf16.gmra.mxu0 %v293
    %v1075 = vpop.f32.mrf.mxu0
    %v1076 = vadd.f32 0.0, %v1075
    %v1077 = vpop.f32.mrf.mxu0
    %v1078 = vpop.f32.mrf.mxu0
    %v1079 = vadd.f32 0.0, %v1078
    %v1080 = vpop.f32.mrf.mxu0
    %1081 = vmatprep.mubr.bf16.mxu0 0
    %1082 = vmatmul.mubr.bf16.gmra.mxu0 %v294
    %v1083 = vpop.f32.mrf.mxu0
    %v1084 = vadd.f32 0.0, %v1083
    %v1085 = vpop.f32.mrf.mxu0
    %v1086 = vpop.f32.mrf.mxu0
    %v1087 = vadd.f32 0.0, %v1086
    %v1088 = vpop.f32.mrf.mxu0
    %1089 = vmatprep.mubr.bf16.mxu0 0
    %1090 = vmatmul.mubr.bf16.gmra.mxu0 %v295
    %v1091 = vpop.f32.mrf.mxu0
    %v1092 = vadd.f32 0.0, %v1091
    %v1093 = vpop.f32.mrf.mxu0
    %v1094 = vpop.f32.mrf.mxu0
    %v1095 = vadd.f32 0.0, %v1094
    %v1096 = vpop.f32.mrf.mxu0
    %1097 = vmatprep.mubr.bf16.mxu0 0
    %1098 = vmatmul.mubr.bf16.gmra.mxu0 %v296
    %v1099 = vpop.f32.mrf.mxu0
    %v1100 = vadd.f32 0.0, %v1099
    %v1101 = vpop.f32.mrf.mxu0
    %v1102 = vpop.f32.mrf.mxu0
    %v1103 = vadd.f32 0.0, %v1102
    %v1104 = vpop.f32.mrf.mxu0
    %1105 = vmatprep.mubr.bf16.mxu0 0
    %1106 = vmatmul.mubr.bf16.gmra.mxu0 %v297
    %v1107 = vpop.f32.mrf.mxu0
    %v1108 = vadd.f32 0.0, %v1107
    %v1109 = vpop.f32.mrf.mxu0
    %v1110 = vpop.f32.mrf.mxu0
    %v1111 = vadd.f32 0.0, %v1110
    %v1112 = vpop.f32.mrf.mxu0
    %1113 = vmatprep.mubr.bf16.mxu0 0
    %1114 = vmatmul.mubr.bf16.gmra.mxu0 %v298
    %v1115 = vpop.f32.mrf.mxu0
    %v1116 = vadd.f32 0.0, %v1115
    %v1117 = vpop.f32.mrf.mxu0
    %v1118 = vpop.f32.mrf.mxu0
    %v1119 = vadd.f32 0.0, %v1118
    %v1120 = vpop.f32.mrf.mxu0
    %1121 = vmatprep.mubr.bf16.mxu0 0
    %1122 = vmatmul.mubr.bf16.gmra.mxu0 %v299
    %v1123 = vpop.f32.mrf.mxu0
    %v1124 = vadd.f32 0.0, %v1123
    %v1125 = vpop.f32.mrf.mxu0
    %v1126 = vpop.f32.mrf.mxu0
    %v1127 = vadd.f32 0.0, %v1126
    %v1128 = vpop.f32.mrf.mxu0
    %1129 = vmatprep.mubr.bf16.mxu0 0
    %1130 = vmatmul.mubr.bf16.gmra.mxu0 %v300
    %v1131 = vpop.f32.mrf.mxu0
    %v1132 = vadd.f32 0.0, %v1131
    %v1133 = vpop.f32.mrf.mxu0
    %v1134 = vpop.f32.mrf.mxu0
    %v1135 = vadd.f32 0.0, %v1134
    %v1136 = vpop.f32.mrf.mxu0
    %1137 = vmatprep.mubr.bf16.mxu0 0
    %1138 = vmatmul.mubr.bf16.gmra.mxu0 %v301
    %v1139 = vpop.f32.mrf.mxu0
    %v1140 = vadd.f32 0.0, %v1139
    %v1141 = vpop.f32.mrf.mxu0
    %v1142 = vpop.f32.mrf.mxu0
    %v1143 = vadd.f32 0.0, %v1142
    %v1144 = vpop.f32.mrf.mxu0
    %1145 = vmatprep.mubr.bf16.mxu0 0
    %1146 = vmatmul.mubr.bf16.gmra.mxu0 %v302
    %v1147 = vpop.f32.mrf.mxu0
    %v1148 = vadd.f32 0.0, %v1147
    %v1149 = vpop.f32.mrf.mxu0
    %v1150 = vpop.f32.mrf.mxu0
    %v1151 = vadd.f32 0.0, %v1150
    %v1152 = vpop.f32.mrf.mxu0
    %1153 = vmatprep.mubr.bf16.mxu0 0
    %1154 = vmatmul.mubr.bf16.gmra.mxu0 %v303
    %v1155 = vpop.f32.mrf.mxu0
    %v1156 = vadd.f32 0.0, %v1155
    %v1157 = vpop.f32.mrf.mxu0
    %v1158 = vpop.f32.mrf.mxu0
    %v1159 = vadd.f32 0.0, %v1158
    %v1160 = vpop.f32.mrf.mxu0
    %1161 = vmatprep.mubr.bf16.mxu0 0
    %1162 = vmatmul.mubr.bf16.gmra.mxu0 %v304
    %v1163 = vpop.f32.mrf.mxu0
    %v1164 = vadd.f32 0.0, %v1163
    %v1165 = vpop.f32.mrf.mxu0
    %v1166 = vpop.f32.mrf.mxu0
    %v1167 = vadd.f32 0.0, %v1166
    %v1168 = vpop.f32.mrf.mxu0
    %1169 = vmatprep.mubr.bf16.mxu0 0
    %1170 = vmatmul.mubr.bf16.gmra.mxu0 %v305
    %v1171 = vpop.f32.mrf.mxu0
    %v1172 = vadd.f32 0.0, %v1171
    %v1173 = vpop.f32.mrf.mxu0
    %v1174 = vpop.f32.mrf.mxu0
    %v1175 = vadd.f32 0.0, %v1174
    %v1176 = vpop.f32.mrf.mxu0
    %1177 = vmatprep.mubr.bf16.mxu0 0
    %1178 = vmatmul.mubr.bf16.gmra.mxu0 %v306
    %v1179 = vpop.f32.mrf.mxu0
    %v1180 = vadd.f32 0.0, %v1179
    %v1181 = vpop.f32.mrf.mxu0
    %v1182 = vpop.f32.mrf.mxu0
    %v1183 = vadd.f32 0.0, %v1182
    %v1184 = vpop.f32.mrf.mxu0
    %1185 = vmatprep.mubr.bf16.mxu0 0
    %1186 = vmatmul.mubr.bf16.gmra.mxu0 %v307
    %v1187 = vpop.f32.mrf.mxu0
    %v1188 = vadd.f32 0.0, %v1187
    %v1189 = vpop.f32.mrf.mxu0
    %v1190 = vpop.f32.mrf.mxu0
    %v1191 = vadd.f32 0.0, %v1190
    %v1192 = vpop.f32.mrf.mxu0
    %1193 = vmatprep.mubr.bf16.mxu0 0
    %1194 = vmatmul.mubr.bf16.gmra.mxu0 %v308
    %v1195 = vpop.f32.mrf.mxu0
    %v1196 = vadd.f32 0.0, %v1195
    %v1197 = vpop.f32.mrf.mxu0
    %v1198 = vpop.f32.mrf.mxu0
    %v1199 = vadd.f32 0.0, %v1198
    %v1200 = vpop.f32.mrf.mxu0
    %1201 = vmatprep.mubr.bf16.mxu0 0
    %1202 = vmatmul.mubr.bf16.gmra.mxu0 %v309
    %v1203 = vpop.f32.mrf.mxu0
    %v1204 = vadd.f32 0.0, %v1203
    %v1205 = vpop.f32.mrf.mxu0
    %v1206 = vpop.f32.mrf.mxu0
    %v1207 = vadd.f32 0.0, %v1206
    %v1208 = vpop.f32.mrf.mxu0
    %1209 = vmatprep.mubr.bf16.mxu0 0
    %1210 = vmatmul.mubr.bf16.gmra.mxu0 %v310
    %v1211 = vpop.f32.mrf.mxu0
    %v1212 = vadd.f32 0.0, %v1211
    %v1213 = vpop.f32.mrf.mxu0
    %v1214 = vpop.f32.mrf.mxu0
    %v1215 = vadd.f32 0.0, %v1214
    %v1216 = vpop.f32.mrf.mxu0
    %1217 = vmatprep.mubr.bf16.mxu0 0
    %1218 = vmatmul.mubr.bf16.gmra.mxu0 %v311
    %v1219 = vpop.f32.mrf.mxu0
    %v1220 = vadd.f32 0.0, %v1219
    %v1221 = vpop.f32.mrf.mxu0
    %v1222 = vpop.f32.mrf.mxu0
    %v1223 = vadd.f32 0.0, %v1222
    %v1224 = vpop.f32.mrf.mxu0
    %1225 = vmatprep.mubr.bf16.mxu0 0
    %1226 = vmatmul.mubr.bf16.gmra.mxu0 %v312
    %v1227 = vpop.f32.mrf.mxu0
    %v1228 = vadd.f32 0.0, %v1227
    %v1229 = vpop.f32.mrf.mxu0
    %v1230 = vpop.f32.mrf.mxu0
    %v1231 = vadd.f32 0.0, %v1230
    %v1232 = vpop.f32.mrf.mxu0
    %1233 = vmatprep.mubr.bf16.mxu0 0
    %1234 = vmatmul.mubr.bf16.gmra.mxu0 %v313
    %v1235 = vpop.f32.mrf.mxu0
    %v1236 = vadd.f32 0.0, %v1235
    %v1237 = vpop.f32.mrf.mxu0
    %v1238 = vpop.f32.mrf.mxu0
    %v1239 = vadd.f32 0.0, %v1238
    %v1240 = vpop.f32.mrf.mxu0
    %1241 = vmatprep.mubr.bf16.mxu0 0
    %1242 = vmatmul.mubr.bf16.gmra.mxu0 %v314
    %v1243 = vpop.f32.mrf.mxu0
    %v1244 = vadd.f32 0.0, %v1243
    %v1245 = vpop.f32.mrf.mxu0
    %v1246 = vpop.f32.mrf.mxu0
    %v1247 = vadd.f32 0.0, %v1246
    %v1248 = vpop.f32.mrf.mxu0
    %1249 = vmatprep.mubr.bf16.mxu0 0
    %1250 = vmatmul.mubr.bf16.gmra.mxu0 %v315
    %v1251 = vpop.f32.mrf.mxu0
    %v1252 = vadd.f32 0.0, %v1251
    %v1253 = vpop.f32.mrf.mxu0
    %v1254 = vpop.f32.mrf.mxu0
    %v1255 = vadd.f32 0.0, %v1254
    %v1256 = vpop.f32.mrf.mxu0
    %1257 = vmatprep.mubr.bf16.mxu0 0
    %1258 = vmatmul.mubr.bf16.gmra.mxu0 %v316
    %v1259 = vpop.f32.mrf.mxu0
    %v1260 = vadd.f32 0.0, %v1259
    %v1261 = vpop.f32.mrf.mxu0
    %v1262 = vpop.f32.mrf.mxu0
    %v1263 = vadd.f32 0.0, %v1262
    %v1264 = vpop.f32.mrf.mxu0
    %1265 = vmatprep.mubr.bf16.mxu0 0
    %1266 = vmatmul.mubr.bf16.gmra.mxu0 %v317
    %v1267 = vpop.f32.mrf.mxu0
    %v1268 = vadd.f32 0.0, %v1267
    %v1269 = vpop.f32.mrf.mxu0
    %v1270 = vpop.f32.mrf.mxu0
    %v1271 = vadd.f32 0.0, %v1270
    %v1272 = vpop.f32.mrf.mxu0
    %1273 = vmatprep.mubr.bf16.mxu0 0
    %1274 = vmatmul.mubr.bf16.gmra.mxu0 %v318
    %v1275 = vpop.f32.mrf.mxu0
    %v1276 = vadd.f32 0.0, %v1275
    %v1277 = vpop.f32.mrf.mxu0
    %v1278 = vpop.f32.mrf.mxu0
    %v1279 = vadd.f32 0.0, %v1278
    %v1280 = vpop.f32.mrf.mxu0
    %1281 = vmatprep.mubr.bf16.mxu0 0
    %1282 = vmatmul.mubr.bf16.gmra.mxu0 %v319
    %v1283 = vpop.f32.mrf.mxu0
    %v1284 = vadd.f32 0.0, %v1283
    %v1285 = vpop.f32.mrf.mxu0
    %v1286 = vpop.f32.mrf.mxu0
    %v1287 = vadd.f32 0.0, %v1286
    %v1288 = vpop.f32.mrf.mxu0
    %1289 = vmatprep.mubr.bf16.mxu0 0
    %1290 = vmatmul.mubr.bf16.gmra.mxu0 %v320
    %v1291 = vpop.f32.mrf.mxu0
    %v1292 = vadd.f32 0.0, %v1291
    %v1293 = vpop.f32.mrf.mxu0
    %v1294 = vpop.f32.mrf.mxu0
    %v1295 = vadd.f32 0.0, %v1294
    %v1296 = vpop.f32.mrf.mxu0
    %1297 = vdwg.mxu0
    %vm1354 = vcmask 1046528
    %v1355 = vrot.slane %v754, 1
    %v1356 = vrot.slane %v757, 1
    %v1357 = vsel %vm1354, %v1355, %v1356
    %v1358 = vrot.slane %v762, 1
    %v1359 = vsel %vm1354, %v1356, %v1358
    %v1360 = vrot.slane %v765, 1
    %v1361 = vsel %vm1354, %v1358, %v1360
    %v1362 = vrot.slane %v770, 1
    %v1363 = vsel %vm1354, %v1360, %v1362
    %v1364 = vrot.slane %v773, 1
    %v1365 = vsel %vm1354, %v1362, %v1364
    %v1366 = vrot.slane %v778, 1
    %v1367 = vsel %vm1354, %v1364, %v1366
    %v1368 = vrot.slane %v781, 1
    %v1369 = vsel %vm1354, %v1366, %v1368
    %v1370 = vrot.slane %v786, 1
    %v1371 = vsel %vm1354, %v1368, %v1370
    %v1372 = vrot.slane %v789, 1
    %v1373 = vsel %vm1354, %v1370, %v1372
    %v1374 = vrot.slane %v794, 1
    %v1375 = vsel %vm1354, %v1372, %v1374
    %v1376 = vrot.slane %v797, 1
    %v1377 = vsel %vm1354, %v1374, %v1376
    %v1378 = vrot.slane %v802, 1
    %v1379 = vsel %vm1354, %v1376, %v1378
    %v1380 = vrot.slane %v805, 1
    %v1381 = vsel %vm1354, %v1378, %v1380
    %v1382 = vrot.slane %v810, 1
    %v1383 = vsel %vm1354, %v1380, %v1382
    %v1384 = vrot.slane %v813, 1
    %v1385 = vsel %vm1354, %v1382, %v1384
    %v1386 = vrot.slane %v818, 1
    %v1387 = vsel %vm1354, %v1384, %v1386
    %v1388 = vrot.slane %v821, 1
    %v1389 = vsel %vm1354, %v1386, %v1388
    %v1390 = vrot.slane %v826, 1
    %v1391 = vsel %vm1354, %v1388, %v1390
    %v1392 = vrot.slane %v829, 1
    %v1393 = vsel %vm1354, %v1390, %v1392
    %v1394 = vrot.slane %v834, 1
    %v1395 = vsel %vm1354, %v1392, %v1394
    %v1396 = vrot.slane %v837, 1
    %v1397 = vsel %vm1354, %v1394, %v1396
    %v1398 = vrot.slane %v842, 1
    %v1399 = vsel %vm1354, %v1396, %v1398
    %v1400 = vrot.slane %v845, 1
    %v1401 = vsel %vm1354, %v1398, %v1400
    %v1402 = vrot.slane %v850, 1
    %v1403 = vsel %vm1354, %v1400, %v1402
    %v1404 = vrot.slane %v853, 1
    %v1405 = vsel %vm1354, %v1402, %v1404
    %v1406 = vrot.slane %v858, 1
    %v1407 = vsel %vm1354, %v1404, %v1406
    %v1408 = vrot.slane %v861, 1
    %v1409 = vsel %vm1354, %v1406, %v1408
    %v1410 = vrot.slane %v866, 1
    %v1411 = vsel %vm1354, %v1408, %v1410
    %v1412 = vrot.slane %v869, 1
    %v1413 = vsel %vm1354, %v1410, %v1412
    %v1414 = vrot.slane %v874, 1
    %v1415 = vsel %vm1354, %v1412, %v1414
    %v1416 = vrot.slane %v877, 1
    %v1417 = vsel %vm1354, %v1414, %v1416
    %v1418 = vrot.slane %v882, 1
    %v1419 = vsel %vm1354, %v1416, %v1418
    %v1420 = vrot.slane %v885, 1
    %v1421 = vsel %vm1354, %v1418, %v1420
    %v1422 = vrot.slane %v890, 1
    %v1423 = vsel %vm1354, %v1420, %v1422
    %v1424 = vrot.slane %v893, 1
    %v1425 = vsel %vm1354, %v1422, %v1424
    %v1426 = vrot.slane %v898, 1
    %v1427 = vsel %vm1354, %v1424, %v1426
    %v1428 = vrot.slane %v901, 1
    %v1429 = vsel %vm1354, %v1426, %v1428
    %v1430 = vrot.slane %v906, 1
    %v1431 = vsel %vm1354, %v1428, %v1430
    %v1432 = vrot.slane %v909, 1
    %v1433 = vsel %vm1354, %v1430, %v1432
    %v1434 = vrot.slane %v914, 1
    %v1435 = vsel %vm1354, %v1432, %v1434
    %v1436 = vrot.slane %v917, 1
    %v1437 = vsel %vm1354, %v1434, %v1436
    %v1438 = vrot.slane %v922, 1
    %v1439 = vsel %vm1354, %v1436, %v1438
    %v1440 = vrot.slane %v925, 1
    %v1441 = vsel %vm1354, %v1438, %v1440
    %v1442 = vrot.slane %v930, 1
    %v1443 = vsel %vm1354, %v1440, %v1442
    %v1444 = vrot.slane %v933, 1
    %v1445 = vsel %vm1354, %v1442, %v1444
    %v1446 = vrot.slane %v938, 1
    %v1447 = vsel %vm1354, %v1444, %v1446
    %v1448 = vrot.slane %v941, 1
    %v1449 = vsel %vm1354, %v1446, %v1448
    %v1450 = vrot.slane %v946, 1
    %v1451 = vsel %vm1354, %v1448, %v1450
    %v1452 = vrot.slane %v949, 1
    %v1453 = vsel %vm1354, %v1450, %v1452
    %v1454 = vrot.slane %v954, 1
    %v1455 = vsel %vm1354, %v1452, %v1454
    %v1456 = vrot.slane %v957, 1
    %v1457 = vsel %vm1354, %v1454, %v1456
    %v1458 = vrot.slane %v962, 1
    %v1459 = vsel %vm1354, %v1456, %v1458
    %v1460 = vrot.slane %v965, 1
    %v1461 = vsel %vm1354, %v1458, %v1460
    %v1462 = vrot.slane %v970, 1
    %v1463 = vsel %vm1354, %v1460, %v1462
    %v1464 = vrot.slane %v973, 1
    %v1465 = vsel %vm1354, %v1462, %v1464
    %v1522 = vadd.f32 %v432, %v1357
    %v1523 = vadd.f32 %v435, %v1359
    %v1524 = vadd.f32 %v440, %v1361
    %v1525 = vadd.f32 %v443, %v1363
    %v1526 = vadd.f32 %v448, %v1365
    %v1527 = vadd.f32 %v451, %v1367
    %v1528 = vadd.f32 %v456, %v1369
    %v1529 = vadd.f32 %v459, %v1371
    %v1530 = vadd.f32 %v464, %v1373
    %v1531 = vadd.f32 %v467, %v1375
    %v1532 = vadd.f32 %v472, %v1377
    %v1533 = vadd.f32 %v475, %v1379
    %v1534 = vadd.f32 %v480, %v1381
    %v1535 = vadd.f32 %v483, %v1383
    %v1536 = vadd.f32 %v488, %v1385
    %v1537 = vadd.f32 %v491, %v1387
    %v1538 = vadd.f32 %v496, %v1389
    %v1539 = vadd.f32 %v499, %v1391
    %v1540 = vadd.f32 %v504, %v1393
    %v1541 = vadd.f32 %v507, %v1395
    %v1542 = vadd.f32 %v512, %v1397
    %v1543 = vadd.f32 %v515, %v1399
    %v1544 = vadd.f32 %v520, %v1401
    %v1545 = vadd.f32 %v523, %v1403
    %v1546 = vadd.f32 %v528, %v1405
    %v1547 = vadd.f32 %v531, %v1407
    %v1548 = vadd.f32 %v536, %v1409
    %v1549 = vadd.f32 %v539, %v1411
    %v1550 = vadd.f32 %v544, %v1413
    %v1551 = vadd.f32 %v547, %v1415
    %v1552 = vadd.f32 %v552, %v1417
    %v1553 = vadd.f32 %v555, %v1419
    %v1554 = vadd.f32 %v560, %v1421
    %v1555 = vadd.f32 %v563, %v1423
    %v1556 = vadd.f32 %v568, %v1425
    %v1557 = vadd.f32 %v571, %v1427
    %v1558 = vadd.f32 %v576, %v1429
    %v1559 = vadd.f32 %v579, %v1431
    %v1560 = vadd.f32 %v584, %v1433
    %v1561 = vadd.f32 %v587, %v1435
    %v1562 = vadd.f32 %v592, %v1437
    %v1563 = vadd.f32 %v595, %v1439
    %v1564 = vadd.f32 %v600, %v1441
    %v1565 = vadd.f32 %v603, %v1443
    %v1566 = vadd.f32 %v608, %v1445
    %v1567 = vadd.f32 %v611, %v1447
    %v1568 = vadd.f32 %v616, %v1449
    %v1569 = vadd.f32 %v619, %v1451
    %v1570 = vadd.f32 %v624, %v1453
    %v1571 = vadd.f32 %v627, %v1455
    %v1572 = vadd.f32 %v632, %v1457
    %v1573 = vadd.f32 %v635, %v1459
    %v1574 = vadd.f32 %v640, %v1461
    %v1575 = vadd.f32 %v643, %v1463
    %v1576 = vadd.f32 %v648, %v1465
    %v1577 = vadd.f32 %v651, %v1464
    %vm1634 = vcmask 1045504
    %v1635 = vrot.slane %v1076, 2
    %v1636 = vrot.slane %v1079, 2
    %v1637 = vsel %vm1634, %v1635, %v1636
    %v1638 = vrot.slane %v1084, 2
    %v1639 = vsel %vm1634, %v1636, %v1638
    %v1640 = vrot.slane %v1087, 2
    %v1641 = vsel %vm1634, %v1638, %v1640
    %v1642 = vrot.slane %v1092, 2
    %v1643 = vsel %vm1634, %v1640, %v1642
    %v1644 = vrot.slane %v1095, 2
    %v1645 = vsel %vm1634, %v1642, %v1644
    %v1646 = vrot.slane %v1100, 2
    %v1647 = vsel %vm1634, %v1644, %v1646
    %v1648 = vrot.slane %v1103, 2
    %v1649 = vsel %vm1634, %v1646, %v1648
    %v1650 = vrot.slane %v1108, 2
    %v1651 = vsel %vm1634, %v1648, %v1650
    %v1652 = vrot.slane %v1111, 2
    %v1653 = vsel %vm1634, %v1650, %v1652
    %v1654 = vrot.slane %v1116, 2
    %v1655 = vsel %vm1634, %v1652, %v1654
    %v1656 = vrot.slane %v1119, 2
    %v1657 = vsel %vm1634, %v1654, %v1656
    %v1658 = vrot.slane %v1124, 2
    %v1659 = vsel %vm1634, %v1656, %v1658
    %v1660 = vrot.slane %v1127, 2
    %v1661 = vsel %vm1634, %v1658, %v1660
    %v1662 = vrot.slane %v1132, 2
    %v1663 = vsel %vm1634, %v1660, %v1662
    %v1664 = vrot.slane %v1135, 2
    %v1665 = vsel %vm1634, %v1662, %v1664
    %v1666 = vrot.slane %v1140, 2
    %v1667 = vsel %vm1634, %v1664, %v1666
    %v1668 = vrot.slane %v1143, 2
    %v1669 = vsel %vm1634, %v1666, %v1668
    %v1670 = vrot.slane %v1148, 2
    %v1671 = vsel %vm1634, %v1668, %v1670
    %v1672 = vrot.slane %v1151, 2
    %v1673 = vsel %vm1634, %v1670, %v1672
    %v1674 = vrot.slane %v1156, 2
    %v1675 = vsel %vm1634, %v1672, %v1674
    %v1676 = vrot.slane %v1159, 2
    %v1677 = vsel %vm1634, %v1674, %v1676
    %v1678 = vrot.slane %v1164, 2
    %v1679 = vsel %vm1634, %v1676, %v1678
    %v1680 = vrot.slane %v1167, 2
    %v1681 = vsel %vm1634, %v1678, %v1680
    %v1682 = vrot.slane %v1172, 2
    %v1683 = vsel %vm1634, %v1680, %v1682
    %v1684 = vrot.slane %v1175, 2
    %v1685 = vsel %vm1634, %v1682, %v1684
    %v1686 = vrot.slane %v1180, 2
    %v1687 = vsel %vm1634, %v1684, %v1686
    %v1688 = vrot.slane %v1183, 2
    %v1689 = vsel %vm1634, %v1686, %v1688
    %v1690 = vrot.slane %v1188, 2
    %v1691 = vsel %vm1634, %v1688, %v1690
    %v1692 = vrot.slane %v1191, 2
    %v1693 = vsel %vm1634, %v1690, %v1692
    %v1694 = vrot.slane %v1196, 2
    %v1695 = vsel %vm1634, %v1692, %v1694
    %v1696 = vrot.slane %v1199, 2
    %v1697 = vsel %vm1634, %v1694, %v1696
    %v1698 = vrot.slane %v1204, 2
    %v1699 = vsel %vm1634, %v1696, %v1698
    %v1700 = vrot.slane %v1207, 2
    %v1701 = vsel %vm1634, %v1698, %v1700
    %v1702 = vrot.slane %v1212, 2
    %v1703 = vsel %vm1634, %v1700, %v1702
    %v1704 = vrot.slane %v1215, 2
    %v1705 = vsel %vm1634, %v1702, %v1704
    %v1706 = vrot.slane %v1220, 2
    %v1707 = vsel %vm1634, %v1704, %v1706
    %v1708 = vrot.slane %v1223, 2
    %v1709 = vsel %vm1634, %v1706, %v1708
    %v1710 = vrot.slane %v1228, 2
    %v1711 = vsel %vm1634, %v1708, %v1710
    %v1712 = vrot.slane %v1231, 2
    %v1713 = vsel %vm1634, %v1710, %v1712
    %v1714 = vrot.slane %v1236, 2
    %v1715 = vsel %vm1634, %v1712, %v1714
    %v1716 = vrot.slane %v1239, 2
    %v1717 = vsel %vm1634, %v1714, %v1716
    %v1718 = vrot.slane %v1244, 2
    %v1719 = vsel %vm1634, %v1716, %v1718
    %v1720 = vrot.slane %v1247, 2
    %v1721 = vsel %vm1634, %v1718, %v1720
    %v1722 = vrot.slane %v1252, 2
    %v1723 = vsel %vm1634, %v1720, %v1722
    %v1724 = vrot.slane %v1255, 2
    %v1725 = vsel %vm1634, %v1722, %v1724
    %v1726 = vrot.slane %v1260, 2
    %v1727 = vsel %vm1634, %v1724, %v1726
    %v1728 = vrot.slane %v1263, 2
    %v1729 = vsel %vm1634, %v1726, %v1728
    %v1730 = vrot.slane %v1268, 2
    %v1731 = vsel %vm1634, %v1728, %v1730
    %v1732 = vrot.slane %v1271, 2
    %v1733 = vsel %vm1634, %v1730, %v1732
    %v1734 = vrot.slane %v1276, 2
    %v1735 = vsel %vm1634, %v1732, %v1734
    %v1736 = vrot.slane %v1279, 2
    %v1737 = vsel %vm1634, %v1734, %v1736
    %v1738 = vrot.slane %v1284, 2
    %v1739 = vsel %vm1634, %v1736, %v1738
    %v1740 = vrot.slane %v1287, 2
    %v1741 = vsel %vm1634, %v1738, %v1740
    %v1742 = vrot.slane %v1292, 2
    %v1743 = vsel %vm1634, %v1740, %v1742
    %v1744 = vrot.slane %v1295, 2
    %v1745 = vsel %vm1634, %v1742, %v1744
    %v1802 = vadd.f32 %v1522, %v1637
    %v1803 = vadd.f32 %v1523, %v1639
    %v1804 = vadd.f32 %v1524, %v1641
    %v1805 = vadd.f32 %v1525, %v1643
    %v1806 = vadd.f32 %v1526, %v1645
    %v1807 = vadd.f32 %v1527, %v1647
    %v1808 = vadd.f32 %v1528, %v1649
    %v1809 = vadd.f32 %v1529, %v1651
    %v1810 = vadd.f32 %v1530, %v1653
    %v1811 = vadd.f32 %v1531, %v1655
    %v1812 = vadd.f32 %v1532, %v1657
    %v1813 = vadd.f32 %v1533, %v1659
    %v1814 = vadd.f32 %v1534, %v1661
    %v1815 = vadd.f32 %v1535, %v1663
    %v1816 = vadd.f32 %v1536, %v1665
    %v1817 = vadd.f32 %v1537, %v1667
    %v1818 = vadd.f32 %v1538, %v1669
    %v1819 = vadd.f32 %v1539, %v1671
    %v1820 = vadd.f32 %v1540, %v1673
    %v1821 = vadd.f32 %v1541, %v1675
    %v1822 = vadd.f32 %v1542, %v1677
    %v1823 = vadd.f32 %v1543, %v1679
    %v1824 = vadd.f32 %v1544, %v1681
    %v1825 = vadd.f32 %v1545, %v1683
    %v1826 = vadd.f32 %v1546, %v1685
    %v1827 = vadd.f32 %v1547, %v1687
    %v1828 = vadd.f32 %v1548, %v1689
    %v1829 = vadd.f32 %v1549, %v1691
    %v1830 = vadd.f32 %v1550, %v1693
    %v1831 = vadd.f32 %v1551, %v1695
    %v1832 = vadd.f32 %v1552, %v1697
    %v1833 = vadd.f32 %v1553, %v1699
    %v1834 = vadd.f32 %v1554, %v1701
    %v1835 = vadd.f32 %v1555, %v1703
    %v1836 = vadd.f32 %v1556, %v1705
    %v1837 = vadd.f32 %v1557, %v1707
    %v1838 = vadd.f32 %v1558, %v1709
    %v1839 = vadd.f32 %v1559, %v1711
    %v1840 = vadd.f32 %v1560, %v1713
    %v1841 = vadd.f32 %v1561, %v1715
    %v1842 = vadd.f32 %v1562, %v1717
    %v1843 = vadd.f32 %v1563, %v1719
    %v1844 = vadd.f32 %v1564, %v1721
    %v1845 = vadd.f32 %v1565, %v1723
    %v1846 = vadd.f32 %v1566, %v1725
    %v1847 = vadd.f32 %v1567, %v1727
    %v1848 = vadd.f32 %v1568, %v1729
    %v1849 = vadd.f32 %v1569, %v1731
    %v1850 = vadd.f32 %v1570, %v1733
    %v1851 = vadd.f32 %v1571, %v1735
    %v1852 = vadd.f32 %v1572, %v1737
    %v1853 = vadd.f32 %v1573, %v1739
    %v1854 = vadd.f32 %v1574, %v1741
    %v1855 = vadd.f32 %v1575, %v1743
    %v1856 = vadd.f32 %v1576, %v1745
    %v1857 = vadd.f32 %v1577, %v1744
    %v1858 = vld [vmem:[%s2] sm:$0x1]
    %v1860 = vlaneseq
    %v1861 = vshrl.u32 %v1860, 7
    %v1862 = vsub.s32 0, %v1861
    %v1863 = vrot.slane %v1858, %v1862
    %v1865 = vadd.f32 %v1802, %v1863
    %v1866 = vadd.f32 %v1803, %v1863
    %v1867 = vadd.f32 %v1804, %v1863
    %v1868 = vadd.f32 %v1805, %v1863
    %v1869 = vadd.f32 %v1806, %v1863
    %v1870 = vadd.f32 %v1807, %v1863
    %v1871 = vadd.f32 %v1808, %v1863
    %v1872 = vadd.f32 %v1809, %v1863
    %v1873 = vadd.f32 %v1810, %v1863
    %v1874 = vadd.f32 %v1811, %v1863
    %v1875 = vadd.f32 %v1812, %v1863
    %v1876 = vadd.f32 %v1813, %v1863
    %v1877 = vadd.f32 %v1814, %v1863
    %v1878 = vadd.f32 %v1815, %v1863
    %v1879 = vadd.f32 %v1816, %v1863
    %v1880 = vadd.f32 %v1817, %v1863
    %v1881 = vadd.f32 %v1818, %v1863
    %v1882 = vadd.f32 %v1819, %v1863
    %v1883 = vadd.f32 %v1820, %v1863
    %v1884 = vadd.f32 %v1821, %v1863
    %v1885 = vadd.f32 %v1822, %v1863
    %v1886 = vadd.f32 %v1823, %v1863
    %v1887 = vadd.f32 %v1824, %v1863
    %v1888 = vadd.f32 %v1825, %v1863
    %v1889 = vadd.f32 %v1826, %v1863
    %v1890 = vadd.f32 %v1827, %v1863
    %v1891 = vadd.f32 %v1828, %v1863
    %v1892 = vadd.f32 %v1829, %v1863
    %v1893 = vadd.f32 %v1830, %v1863
    %v1894 = vadd.f32 %v1831, %v1863
    %v1895 = vadd.f32 %v1832, %v1863
    %v1896 = vadd.f32 %v1833, %v1863
    %v1897 = vadd.f32 %v1834, %v1863
    %v1898 = vadd.f32 %v1835, %v1863
    %v1899 = vadd.f32 %v1836, %v1863
    %v1900 = vadd.f32 %v1837, %v1863
    %v1901 = vadd.f32 %v1838, %v1863
    %v1902 = vadd.f32 %v1839, %v1863
    %v1903 = vadd.f32 %v1840, %v1863
    %v1904 = vadd.f32 %v1841, %v1863
    %v1905 = vadd.f32 %v1842, %v1863
    %v1906 = vadd.f32 %v1843, %v1863
    %v1907 = vadd.f32 %v1844, %v1863
    %v1908 = vadd.f32 %v1845, %v1863
    %v1909 = vadd.f32 %v1846, %v1863
    %v1910 = vadd.f32 %v1847, %v1863
    %v1911 = vadd.f32 %v1848, %v1863
    %v1912 = vadd.f32 %v1849, %v1863
    %v1913 = vadd.f32 %v1850, %v1863
    %v1914 = vadd.f32 %v1851, %v1863
    %v1915 = vadd.f32 %v1852, %v1863
    %v1916 = vadd.f32 %v1853, %v1863
    %v1917 = vadd.f32 %v1854, %v1863
    %v1918 = vadd.f32 %v1855, %v1863
    %v1919 = vadd.f32 %v1856, %v1863
    %v1920 = vadd.f32 %v1857, %v1863
    %v1921 = vmax.f32 %v1865, 0.0
    %v1922 = vmax.f32 %v1866, 0.0
    %v1923 = vmax.f32 %v1867, 0.0
    %v1924 = vmax.f32 %v1868, 0.0
    %v1925 = vmax.f32 %v1869, 0.0
    %v1926 = vmax.f32 %v1870, 0.0
    %v1927 = vmax.f32 %v1871, 0.0
    %v1928 = vmax.f32 %v1872, 0.0
    %v1929 = vmax.f32 %v1873, 0.0
    %v1930 = vmax.f32 %v1874, 0.0
    %v1931 = vmax.f32 %v1875, 0.0
    %v1932 = vmax.f32 %v1876, 0.0
    %v1933 = vmax.f32 %v1877, 0.0
    %v1934 = vmax.f32 %v1878, 0.0
    %v1935 = vmax.f32 %v1879, 0.0
    %v1936 = vmax.f32 %v1880, 0.0
    %v1937 = vmax.f32 %v1881, 0.0
    %v1938 = vmax.f32 %v1882, 0.0
    %v1939 = vmax.f32 %v1883, 0.0
    %v1940 = vmax.f32 %v1884, 0.0
    %v1941 = vmax.f32 %v1885, 0.0
    %v1942 = vmax.f32 %v1886, 0.0
    %v1943 = vmax.f32 %v1887, 0.0
    %v1944 = vmax.f32 %v1888, 0.0
    %v1945 = vmax.f32 %v1889, 0.0
    %v1946 = vmax.f32 %v1890, 0.0
    %v1947 = vmax.f32 %v1891, 0.0
    %v1948 = vmax.f32 %v1892, 0.0
    %v1949 = vmax.f32 %v1893, 0.0
    %v1950 = vmax.f32 %v1894, 0.0
    %v1951 = vmax.f32 %v1895, 0.0
    %v1952 = vmax.f32 %v1896, 0.0
    %v1953 = vmax.f32 %v1897, 0.0
    %v1954 = vmax.f32 %v1898, 0.0
    %v1955 = vmax.f32 %v1899, 0.0
    %v1956 = vmax.f32 %v1900, 0.0
    %v1957 = vmax.f32 %v1901, 0.0
    %v1958 = vmax.f32 %v1902, 0.0
    %v1959 = vmax.f32 %v1903, 0.0
    %v1960 = vmax.f32 %v1904, 0.0
    %v1961 = vmax.f32 %v1905, 0.0
    %v1962 = vmax.f32 %v1906, 0.0
    %v1963 = vmax.f32 %v1907, 0.0
    %v1964 = vmax.f32 %v1908, 0.0
    %v1965 = vmax.f32 %v1909, 0.0
    %v1966 = vmax.f32 %v1910, 0.0
    %v1967 = vmax.f32 %v1911, 0.0
    %v1968 = vmax.f32 %v1912, 0.0
    %v1969 = vmax.f32 %v1913, 0.0
    %v1970 = vmax.f32 %v1914, 0.0
    %v1971 = vmax.f32 %v1915, 0.0
    %v1972 = vmax.f32 %v1916, 0.0
    %v1973 = vmax.f32 %v1917, 0.0
    %v1974 = vmax.f32 %v1918, 0.0
    %v1975 = vmax.f32 %v1919, 0.0
    %v1976 = vmax.f32 %v1920, 0.0
    %v2033 = vrot.slane %v1921, 1
    %v2034 = vrot.slane %v1922, 1
    %v2035 = vsel %vm1354, %v2033, %v2034
    %v2036 = vrot.slane %v1923, 1
    %v2037 = vsel %vm1354, %v2034, %v2036
    %v2038 = vrot.slane %v1924, 1
    %v2039 = vsel %vm1354, %v2036, %v2038
    %v2040 = vrot.slane %v1925, 1
    %v2041 = vsel %vm1354, %v2038, %v2040
    %v2042 = vrot.slane %v1926, 1
    %v2043 = vsel %vm1354, %v2040, %v2042
    %v2044 = vrot.slane %v1927, 1
    %v2045 = vsel %vm1354, %v2042, %v2044
    %v2046 = vrot.slane %v1928, 1
    %v2047 = vsel %vm1354, %v2044, %v2046
    %v2048 = vrot.slane %v1929, 1
    %v2049 = vsel %vm1354, %v2046, %v2048
    %v2050 = vrot.slane %v1930, 1
    %v2051 = vsel %vm1354, %v2048, %v2050
    %v2052 = vrot.slane %v1931, 1
    %v2053 = vsel %vm1354, %v2050, %v2052
    %v2054 = vrot.slane %v1932, 1
    %v2055 = vsel %vm1354, %v2052, %v2054
    %v2056 = vrot.slane %v1933, 1
    %v2057 = vsel %vm1354, %v2054, %v2056
    %v2058 = vrot.slane %v1934, 1
    %v2059 = vsel %vm1354, %v2056, %v2058
    %v2060 = vrot.slane %v1935, 1
    %v2061 = vsel %vm1354, %v2058, %v2060
    %v2062 = vrot.slane %v1936, 1
    %v2063 = vsel %vm1354, %v2060, %v2062
    %v2064 = vrot.slane %v1937, 1
    %v2065 = vsel %vm1354, %v2062, %v2064
    %v2066 = vrot.slane %v1938, 1
    %v2067 = vsel %vm1354, %v2064, %v2066
    %v2068 = vrot.slane %v1939, 1
    %v2069 = vsel %vm1354, %v2066, %v2068
    %v2070 = vrot.slane %v1940, 1
    %v2071 = vsel %vm1354, %v2068, %v2070
    %v2072 = vrot.slane %v1941, 1
    %v2073 = vsel %vm1354, %v2070, %v2072
    %v2074 = vrot.slane %v1942, 1
    %v2075 = vsel %vm1354, %v2072, %v2074
    %v2076 = vrot.slane %v1943, 1
    %v2077 = vsel %vm1354, %v2074, %v2076
    %v2078 = vrot.slane %v1944, 1
    %v2079 = vsel %vm1354, %v2076, %v2078
    %v2080 = vrot.slane %v1945, 1
    %v2081 = vsel %vm1354, %v2078, %v2080
    %v2082 = vrot.slane %v1946, 1
    %v2083 = vsel %vm1354, %v2080, %v2082
    %v2084 = vrot.slane %v1947, 1
    %v2085 = vsel %vm1354, %v2082, %v2084
    %v2086 = vrot.slane %v1948, 1
    %v2087 = vsel %vm1354, %v2084, %v2086
    %v2088 = vrot.slane %v1949, 1
    %v2089 = vsel %vm1354, %v2086, %v2088
    %v2090 = vrot.slane %v1950, 1
    %v2091 = vsel %vm1354, %v2088, %v2090
    %v2092 = vrot.slane %v1951, 1
    %v2093 = vsel %vm1354, %v2090, %v2092
    %v2094 = vrot.slane %v1952, 1
    %v2095 = vsel %vm1354, %v2092, %v2094
    %v2096 = vrot.slane %v1953, 1
    %v2097 = vsel %vm1354, %v2094, %v2096
    %v2098 = vrot.slane %v1954, 1
    %v2099 = vsel %vm1354, %v2096, %v2098
    %v2100 = vrot.slane %v1955, 1
    %v2101 = vsel %vm1354, %v2098, %v2100
    %v2102 = vrot.slane %v1956, 1
    %v2103 = vsel %vm1354, %v2100, %v2102
    %v2104 = vrot.slane %v1957, 1
    %v2105 = vsel %vm1354, %v2102, %v2104
    %v2106 = vrot.slane %v1958, 1
    %v2107 = vsel %vm1354, %v2104, %v2106
    %v2108 = vrot.slane %v1959, 1
    %v2109 = vsel %vm1354, %v2106, %v2108
    %v2110 = vrot.slane %v1960, 1
    %v2111 = vsel %vm1354, %v2108, %v2110
    %v2112 = vrot.slane %v1961, 1
    %v2113 = vsel %vm1354, %v2110, %v2112
    %v2114 = vrot.slane %v1962, 1
    %v2115 = vsel %vm1354, %v2112, %v2114
    %v2116 = vrot.slane %v1963, 1
    %v2117 = vsel %vm1354, %v2114, %v2116
    %v2118 = vrot.slane %v1964, 1
    %v2119 = vsel %vm1354, %v2116, %v2118
    %v2120 = vrot.slane %v1965, 1
    %v2121 = vsel %vm1354, %v2118, %v2120
    %v2122 = vrot.slane %v1966, 1
    %v2123 = vsel %vm1354, %v2120, %v2122
    %v2124 = vrot.slane %v1967, 1
    %v2125 = vsel %vm1354, %v2122, %v2124
    %v2126 = vrot.slane %v1968, 1
    %v2127 = vsel %vm1354, %v2124, %v2126
    %v2128 = vrot.slane %v1969, 1
    %v2129 = vsel %vm1354, %v2126, %v2128
    %v2130 = vrot.slane %v1970, 1
    %v2131 = vsel %vm1354, %v2128, %v2130
    %v2132 = vrot.slane %v1971, 1
    %v2133 = vsel %vm1354, %v2130, %v2132
    %v2134 = vrot.slane %v1972, 1
    %v2135 = vsel %vm1354, %v2132, %v2134
    %v2136 = vrot.slane %v1973, 1
    %v2137 = vsel %vm1354, %v2134, %v2136
    %v2138 = vrot.slane %v1974, 1
    %v2139 = vsel %vm1354, %v2136, %v2138
    %v2140 = vrot.slane %v1975, 1
    %v2141 = vsel %vm1354, %v2138, %v2140
    %v2142 = vrot.slane %v1976, 1
    %v2143 = vsel %vm1354, %v2140, %v2142
    %v2200 = vmax.f32 %v1921, %v2035
    %v2201 = vmax.f32 %v1922, %v2037
    %v2202 = vmax.f32 %v1923, %v2039
    %v2203 = vmax.f32 %v1924, %v2041
    %v2204 = vmax.f32 %v1925, %v2043
    %v2205 = vmax.f32 %v1926, %v2045
    %v2206 = vmax.f32 %v1927, %v2047
    %v2207 = vmax.f32 %v1928, %v2049
    %v2208 = vmax.f32 %v1929, %v2051
    %v2209 = vmax.f32 %v1930, %v2053
    %v2210 = vmax.f32 %v1931, %v2055
    %v2211 = vmax.f32 %v1932, %v2057
    %v2212 = vmax.f32 %v1933, %v2059
    %v2213 = vmax.f32 %v1934, %v2061
    %v2214 = vmax.f32 %v1935, %v2063
    %v2215 = vmax.f32 %v1936, %v2065
    %v2216 = vmax.f32 %v1937, %v2067
    %v2217 = vmax.f32 %v1938, %v2069
    %v2218 = vmax.f32 %v1939, %v2071
    %v2219 = vmax.f32 %v1940, %v2073
    %v2220 = vmax.f32 %v1941, %v2075
    %v2221 = vmax.f32 %v1942, %v2077
    %v2222 = vmax.f32 %v1943, %v2079
    %v2223 = vmax.f32 %v1944, %v2081
    %v2224 = vmax.f32 %v1945, %v2083
    %v2225 = vmax.f32 %v1946, %v2085
    %v2226 = vmax.f32 %v1947, %v2087
    %v2227 = vmax.f32 %v1948, %v2089
    %v2228 = vmax.f32 %v1949, %v2091
    %v2229 = vmax.f32 %v1950, %v2093
    %v2230 = vmax.f32 %v1951, %v2095
    %v2231 = vmax.f32 %v1952, %v2097
    %v2232 = vmax.f32 %v1953, %v2099
    %v2233 = vmax.f32 %v1954, %v2101
    %v2234 = vmax.f32 %v1955, %v2103
    %v2235 = vmax.f32 %v1956, %v2105
    %v2236 = vmax.f32 %v1957, %v2107
    %v2237 = vmax.f32 %v1958, %v2109
    %v2238 = vmax.f32 %v1959, %v2111
    %v2239 = vmax.f32 %v1960, %v2113
    %v2240 = vmax.f32 %v1961, %v2115
    %v2241 = vmax.f32 %v1962, %v2117
    %v2242 = vmax.f32 %v1963, %v2119
    %v2243 = vmax.f32 %v1964, %v2121
    %v2244 = vmax.f32 %v1965, %v2123
    %v2245 = vmax.f32 %v1966, %v2125
    %v2246 = vmax.f32 %v1967, %v2127
    %v2247 = vmax.f32 %v1968, %v2129
    %v2248 = vmax.f32 %v1969, %v2131
    %v2249 = vmax.f32 %v1970, %v2133
    %v2250 = vmax.f32 %v1971, %v2135
    %v2251 = vmax.f32 %v1972, %v2137
    %v2252 = vmax.f32 %v1973, %v2139
    %v2253 = vmax.f32 %v1974, %v2141
    %v2254 = vmax.f32 %v1975, %v2143
    %v2255 = vmax.f32 %v1976, %v2142
    %v2256 = vrot.slane %v1921, 2
    %v2257 = vrot.slane %v1922, 2
    %v2258 = vsel %vm1634, %v2256, %v2257
    %v2259 = vrot.slane %v1923, 2
    %v2260 = vsel %vm1634, %v2257, %v2259
    %v2261 = vrot.slane %v1924, 2
    %v2262 = vsel %vm1634, %v2259, %v2261
    %v2263 = vrot.slane %v1925, 2
    %v2264 = vsel %vm1634, %v2261, %v2263
    %v2265 = vrot.slane %v1926, 2
    %v2266 = vsel %vm1634, %v2263, %v2265
    %v2267 = vrot.slane %v1927, 2
    %v2268 = vsel %vm1634, %v2265, %v2267
    %v2269 = vrot.slane %v1928, 2
    %v2270 = vsel %vm1634, %v2267, %v2269
    %v2271 = vrot.slane %v1929, 2
    %v2272 = vsel %vm1634, %v2269, %v2271
    %v2273 = vrot.slane %v1930, 2
    %v2274 = vsel %vm1634, %v2271, %v2273
    %v2275 = vrot.slane %v1931, 2
    %v2276 = vsel %vm1634, %v2273, %v2275
    %v2277 = vrot.slane %v1932, 2
    %v2278 = vsel %vm1634, %v2275, %v2277
    %v2279 = vrot.slane %v1933, 2
    %v2280 = vsel %vm1634, %v2277, %v2279
    %v2281 = vrot.slane %v1934, 2
    %v2282 = vsel %vm1634, %v2279, %v2281
    %v2283 = vrot.slane %v1935, 2
    %v2284 = vsel %vm1634, %v2281, %v2283
    %v2285 = vrot.slane %v1936, 2
    %v2286 = vsel %vm1634, %v2283, %v2285
    %v2287 = vrot.slane %v1937, 2
    %v2288 = vsel %vm1634, %v2285, %v2287
    %v2289 = vrot.slane %v1938, 2
    %v2290 = vsel %vm1634, %v2287, %v2289
    %v2291 = vrot.slane %v1939, 2
    %v2292 = vsel %vm1634, %v2289, %v2291
    %v2293 = vrot.slane %v1940, 2
    %v2294 = vsel %vm1634, %v2291, %v2293
    %v2295 = vrot.slane %v1941, 2
    %v2296 = vsel %vm1634, %v2293, %v2295
    %v2297 = vrot.slane %v1942, 2
    %v2298 = vsel %vm1634, %v2295, %v2297
    %v2299 = vrot.slane %v1943, 2
    %v2300 = vsel %vm1634, %v2297, %v2299
    %v2301 = vrot.slane %v1944, 2
    %v2302 = vsel %vm1634, %v2299, %v2301
    %v2303 = vrot.slane %v1945, 2
    %v2304 = vsel %vm1634, %v2301, %v2303
    %v2305 = vrot.slane %v1946, 2
    %v2306 = vsel %vm1634, %v2303, %v2305
    %v2307 = vrot.slane %v1947, 2
    %v2308 = vsel %vm1634, %v2305, %v2307
    %v2309 = vrot.slane %v1948, 2
    %v2310 = vsel %vm1634, %v2307, %v2309
    %v2311 = vrot.slane %v1949, 2
    %v2312 = vsel %vm1634, %v2309, %v2311
    %v2313 = vrot.slane %v1950, 2
    %v2314 = vsel %vm1634, %v2311, %v2313
    %v2315 = vrot.slane %v1951, 2
    %v2316 = vsel %vm1634, %v2313, %v2315
    %v2317 = vrot.slane %v1952, 2
    %v2318 = vsel %vm1634, %v2315, %v2317
    %v2319 = vrot.slane %v1953, 2
    %v2320 = vsel %vm1634, %v2317, %v2319
    %v2321 = vrot.slane %v1954, 2
    %v2322 = vsel %vm1634, %v2319, %v2321
    %v2323 = vrot.slane %v1955, 2
    %v2324 = vsel %vm1634, %v2321, %v2323
    %v2325 = vrot.slane %v1956, 2
    %v2326 = vsel %vm1634, %v2323, %v2325
    %v2327 = vrot.slane %v1957, 2
    %v2328 = vsel %vm1634, %v2325, %v2327
    %v2329 = vrot.slane %v1958, 2
    %v2330 = vsel %vm1634, %v2327, %v2329
    %v2331 = vrot.slane %v1959, 2
    %v2332 = vsel %vm1634, %v2329, %v2331
    %v2333 = vrot.slane %v1960, 2
    %v2334 = vsel %vm1634, %v2331, %v2333
    %v2335 = vrot.slane %v1961, 2
    %v2336 = vsel %vm1634, %v2333, %v2335
    %v2337 = vrot.slane %v1962, 2
    %v2338 = vsel %vm1634, %v2335, %v2337
    %v2339 = vrot.slane %v1963, 2
    %v2340 = vsel %vm1634, %v2337, %v2339
    %v2341 = vrot.slane %v1964, 2
    %v2342 = vsel %vm1634, %v2339, %v2341
    %v2343 = vrot.slane %v1965, 2
    %v2344 = vsel %vm1634, %v2341, %v2343
    %v2345 = vrot.slane %v1966, 2
    %v2346 = vsel %vm1634, %v2343, %v2345
    %v2347 = vrot.slane %v1967, 2
    %v2348 = vsel %vm1634, %v2345, %v2347
    %v2349 = vrot.slane %v1968, 2
    %v2350 = vsel %vm1634, %v2347, %v2349
    %v2351 = vrot.slane %v1969, 2
    %v2352 = vsel %vm1634, %v2349, %v2351
    %v2353 = vrot.slane %v1970, 2
    %v2354 = vsel %vm1634, %v2351, %v2353
    %v2355 = vrot.slane %v1971, 2
    %v2356 = vsel %vm1634, %v2353, %v2355
    %v2357 = vrot.slane %v1972, 2
    %v2358 = vsel %vm1634, %v2355, %v2357
    %v2359 = vrot.slane %v1973, 2
    %v2360 = vsel %vm1634, %v2357, %v2359
    %v2361 = vrot.slane %v1974, 2
    %v2362 = vsel %vm1634, %v2359, %v2361
    %v2363 = vrot.slane %v1975, 2
    %v2364 = vsel %vm1634, %v2361, %v2363
    %v2365 = vrot.slane %v1976, 2
    %v2366 = vsel %vm1634, %v2363, %v2365
    %v2423 = vmax.f32 %v2200, %v2258
    %v2424 = vmax.f32 %v2201, %v2260
    %v2425 = vmax.f32 %v2202, %v2262
    %v2426 = vmax.f32 %v2203, %v2264
    %v2427 = vmax.f32 %v2204, %v2266
    %v2428 = vmax.f32 %v2205, %v2268
    %v2429 = vmax.f32 %v2206, %v2270
    %v2430 = vmax.f32 %v2207, %v2272
    %v2431 = vmax.f32 %v2208, %v2274
    %v2432 = vmax.f32 %v2209, %v2276
    %v2433 = vmax.f32 %v2210, %v2278
    %v2434 = vmax.f32 %v2211, %v2280
    %v2435 = vmax.f32 %v2212, %v2282
    %v2436 = vmax.f32 %v2213, %v2284
    %v2437 = vmax.f32 %v2214, %v2286
    %v2438 = vmax.f32 %v2215, %v2288
    %v2439 = vmax.f32 %v2216, %v2290
    %v2440 = vmax.f32 %v2217, %v2292
    %v2441 = vmax.f32 %v2218, %v2294
    %v2442 = vmax.f32 %v2219, %v2296
    %v2443 = vmax.f32 %v2220, %v2298
    %v2444 = vmax.f32 %v2221, %v2300
    %v2445 = vmax.f32 %v2222, %v2302
    %v2446 = vmax.f32 %v2223, %v2304
    %v2447 = vmax.f32 %v2224, %v2306
    %v2448 = vmax.f32 %v2225, %v2308
    %v2449 = vmax.f32 %v2226, %v2310
    %v2450 = vmax.f32 %v2227, %v2312
    %v2451 = vmax.f32 %v2228, %v2314
    %v2452 = vmax.f32 %v2229, %v2316
    %v2453 = vmax.f32 %v2230, %v2318
    %v2454 = vmax.f32 %v2231, %v2320
    %v2455 = vmax.f32 %v2232, %v2322
    %v2456 = vmax.f32 %v2233, %v2324
    %v2457 = vmax.f32 %v2234, %v2326
    %v2458 = vmax.f32 %v2235, %v2328
    %v2459 = vmax.f32 %v2236, %v2330
    %v2460 = vmax.f32 %v2237, %v2332
    %v2461 = vmax.f32 %v2238, %v2334
    %v2462 = vmax.f32 %v2239, %v2336
    %v2463 = vmax.f32 %v2240, %v2338
    %v2464 = vmax.f32 %v2241, %v2340
    %v2465 = vmax.f32 %v2242, %v2342
    %v2466 = vmax.f32 %v2243, %v2344
    %v2467 = vmax.f32 %v2244, %v2346
    %v2468 = vmax.f32 %v2245, %v2348
    %v2469 = vmax.f32 %v2246, %v2350
    %v2470 = vmax.f32 %v2247, %v2352
    %v2471 = vmax.f32 %v2248, %v2354
    %v2472 = vmax.f32 %v2249, %v2356
    %v2473 = vmax.f32 %v2250, %v2358
    %v2474 = vmax.f32 %v2251, %v2360
    %v2475 = vmax.f32 %v2252, %v2362
    %v2476 = vmax.f32 %v2253, %v2364
    %v2477 = vmax.f32 %v2254, %v2366
    %v2478 = vmax.f32 %v2255, %v2365
    %2479 = vst [vmem:[#allocation2] sm:$0xff] %v2423
    %2480 = vst [vmem:[#allocation2 + $0x8] sm:$0xff] %v2424
    %2481 = vst [vmem:[#allocation2 + $0x10] sm:$0xff] %v2425
    %2482 = vst [vmem:[#allocation2 + $0x18] sm:$0xff] %v2426
    %2483 = vst [vmem:[#allocation2 + $0x20] sm:$0xff] %v2427
    %2484 = vst [vmem:[#allocation2 + $0x28] sm:$0xff] %v2428
    %2485 = vst [vmem:[#allocation2 + $0x30] sm:$0xff] %v2429
    %2486 = vst [vmem:[#allocation2 + $0x38] sm:$0xff] %v2430
    %2487 = vst [vmem:[#allocation2 + $0x40] sm:$0xff] %v2431
    %2488 = vst [vmem:[#allocation2 + $0x48] sm:$0xff] %v2432
    %2489 = vst [vmem:[#allocation2 + $0x50] sm:$0xff] %v2433
    %2490 = vst [vmem:[#allocation2 + $0x58] sm:$0xff] %v2434
    %2491 = vst [vmem:[#allocation2 + $0x60] sm:$0xff] %v2435
    %2492 = vst [vmem:[#allocation2 + $0x68] sm:$0xff] %v2436
    %2493 = vst [vmem:[#allocation2 + $0x70] sm:$0xff] %v2437
    %2494 = vst [vmem:[#allocation2 + $0x78] sm:$0xff] %v2438
    %2495 = vst [vmem:[#allocation2 + $0x80] sm:$0xff] %v2439
    %2496 = vst [vmem:[#allocation2 + $0x88] sm:$0xff] %v2440
    %2497 = vst [vmem:[#allocation2 + $0x90] sm:$0xff] %v2441
    %2498 = vst [vmem:[#allocation2 + $0x98] sm:$0xff] %v2442
    %2499 = vst [vmem:[#allocation2 + $0xa0] sm:$0xff] %v2443
    %2500 = vst [vmem:[#allocation2 + $0xa8] sm:$0xff] %v2444
    %2501 = vst [vmem:[#allocation2 + $0xb0] sm:$0xff] %v2445
    %2502 = vst [vmem:[#allocation2 + $0xb8] sm:$0xff] %v2446
    %2503 = vst [vmem:[#allocation2 + $0xc0] sm:$0xff] %v2447
    %2504 = vst [vmem:[#allocation2 + $0xc8] sm:$0xff] %v2448
    %2505 = vst [vmem:[#allocation2 + $0xd0] sm:$0xff] %v2449
    %2506 = vst [vmem:[#allocation2 + $0xd8] sm:$0xff] %v2450
    %2507 = vst [vmem:[#allocation2 + $0xe0] sm:$0xff] %v2451
    %2508 = vst [vmem:[#allocation2 + $0xe8] sm:$0xff] %v2452
    %2509 = vst [vmem:[#allocation2 + $0xf0] sm:$0xff] %v2453
    %2510 = vst [vmem:[#allocation2 + $0xf8] sm:$0xff] %v2454
    %2511 = vst [vmem:[#allocation2 + $0x100] sm:$0xff] %v2455
    %2512 = vst [vmem:[#allocation2 + $0x108] sm:$0xff] %v2456
    %2513 = vst [vmem:[#allocation2 + $0x110] sm:$0xff] %v2457
    %2514 = vst [vmem:[#allocation2 + $0x118] sm:$0xff] %v2458
    %2515 = vst [vmem:[#allocation2 + $0x120] sm:$0xff] %v2459
    %2516 = vst [vmem:[#allocation2 + $0x128] sm:$0xff] %v2460
    %2517 = vst [vmem:[#allocation2 + $0x130] sm:$0xff] %v2461
    %2518 = vst [vmem:[#allocation2 + $0x138] sm:$0xff] %v2462
    %2519 = vst [vmem:[#allocation2 + $0x140] sm:$0xff] %v2463
    %2520 = vst [vmem:[#allocation2 + $0x148] sm:$0xff] %v2464
    %2521 = vst [vmem:[#allocation2 + $0x150] sm:$0xff] %v2465
    %2522 = vst [vmem:[#allocation2 + $0x158] sm:$0xff] %v2466
    %2523 = vst [vmem:[#allocation2 + $0x160] sm:$0xff] %v2467
    %2524 = vst [vmem:[#allocation2 + $0x168] sm:$0xff] %v2468
    %2525 = vst [vmem:[#allocation2 + $0x170] sm:$0xff] %v2469
    %2526 = vst [vmem:[#allocation2 + $0x178] sm:$0xff] %v2470
    %2527 = vst [vmem:[#allocation2 + $0x180] sm:$0xff] %v2471
    %2528 = vst [vmem:[#allocation2 + $0x188] sm:$0xff] %v2472
    %2529 = vst [vmem:[#allocation2 + $0x190] sm:$0xff] %v2473
    %2530 = vst [vmem:[#allocation2 + $0x198] sm:$0xff] %v2474
    %2531 = vst [vmem:[#allocation2 + $0x1a0] sm:$0xff] %v2475
    %2532 = vst [vmem:[#allocation2 + $0x1a8] sm:$0xff] %v2476
    %2533 = vst [vmem:[#allocation2 + $0x1b0] sm:$0xff] %v2477
    %2534 = vst [vmem:[#allocation2 + $0x1b8] sm:$0xf] %v2478
    %v2535 = vld [vmem:[#allocation2] ss:$2 sm:$0xff]
    %s2536 = scalar_lea.vmem [#allocation2], 16
    %v2537 = vld [vmem:[%s2536] ss:$2 sm:$0xff]
    %s2538 = scalar_lea.vmem [#allocation2], 32
    %v2539 = vld [vmem:[%s2538] ss:$2 sm:$0xff]
    %s2540 = scalar_lea.vmem [#allocation2], 48
    %v2541 = vld [vmem:[%s2540] ss:$2 sm:$0xff]
    %s2542 = scalar_lea.vmem [#allocation2], 64
    %v2543 = vld [vmem:[%s2542] ss:$2 sm:$0xff]
    %s2544 = scalar_lea.vmem [#allocation2], 80
    %v2545 = vld [vmem:[%s2544] ss:$2 sm:$0xff]
    %s2546 = scalar_lea.vmem [#allocation2], 96
    %v2547 = vld [vmem:[%s2546] ss:$2 sm:$0xff]
    %s2548 = scalar_lea.vmem [#allocation2], 112
    %v2549 = vld [vmem:[%s2548] ss:$2 sm:$0xff]
    %s2550 = scalar_lea.vmem [#allocation2], 128
    %v2551 = vld [vmem:[%s2550] ss:$2 sm:$0xff]
    %s2552 = scalar_lea.vmem [#allocation2], 144
    %v2553 = vld [vmem:[%s2552] ss:$2 sm:$0xff]
    %s2554 = scalar_lea.vmem [#allocation2], 160
    %v2555 = vld [vmem:[%s2554] ss:$2 sm:$0xff]
    %s2556 = scalar_lea.vmem [#allocation2], 176
    %v2557 = vld [vmem:[%s2556] ss:$2 sm:$0xff]
    %s2558 = scalar_lea.vmem [#allocation2], 192
    %v2559 = vld [vmem:[%s2558] ss:$2 sm:$0xff]
    %s2560 = scalar_lea.vmem [#allocation2], 208
    %v2561 = vld [vmem:[%s2560] ss:$2 sm:$0xff]
    %s2562 = scalar_lea.vmem [#allocation2], 224
    %v2563 = vld [vmem:[%s2562] ss:$2 sm:$0xff]
    %s2564 = scalar_lea.vmem [#allocation2], 240
    %v2565 = vld [vmem:[%s2564] ss:$2 sm:$0xff]
    %s2566 = scalar_lea.vmem [#allocation2], 256
    %v2567 = vld [vmem:[%s2566] ss:$2 sm:$0xff]
    %s2568 = scalar_lea.vmem [#allocation2], 272
    %v2569 = vld [vmem:[%s2568] ss:$2 sm:$0xff]
    %s2570 = scalar_lea.vmem [#allocation2], 288
    %v2571 = vld [vmem:[%s2570] ss:$2 sm:$0xff]
    %s2572 = scalar_lea.vmem [#allocation2], 304
    %v2573 = vld [vmem:[%s2572] ss:$2 sm:$0xff]
    %s2574 = scalar_lea.vmem [#allocation2], 320
    %v2575 = vld [vmem:[%s2574] ss:$2 sm:$0xff]
    %s2576 = scalar_lea.vmem [#allocation2], 336
    %v2577 = vld [vmem:[%s2576] ss:$2 sm:$0xff]
    %s2578 = scalar_lea.vmem [#allocation2], 352
    %v2579 = vld [vmem:[%s2578] ss:$2 sm:$0xff]
    %s2580 = scalar_lea.vmem [#allocation2], 368
    %v2581 = vld [vmem:[%s2580] ss:$2 sm:$0xff]
    %s2582 = scalar_lea.vmem [#allocation2], 384
    %v2583 = vld [vmem:[%s2582] ss:$2 sm:$0xff]
    %s2584 = scalar_lea.vmem [#allocation2], 400
    %v2585 = vld [vmem:[%s2584] ss:$2 sm:$0xff]
    %s2586 = scalar_lea.vmem [#allocation2], 416
    %v2587 = vld [vmem:[%s2586] ss:$2 sm:$0xff]
    %s2588 = scalar_lea.vmem [#allocation2], 432
    %v2589 = vld [vmem:[%s2588] ss:$2 sm:$0xff]
    %v2590 = vpack.c.bf16 %v2537, %v2535
    %v2591 = vpack.c.bf16 %v2541, %v2539
    %v2592 = vpack.c.bf16 %v2545, %v2543
    %v2593 = vpack.c.bf16 %v2549, %v2547
    %v2594 = vpack.c.bf16 %v2553, %v2551
    %v2595 = vpack.c.bf16 %v2557, %v2555
    %v2596 = vpack.c.bf16 %v2561, %v2559
    %v2597 = vpack.c.bf16 %v2565, %v2563
    %v2598 = vpack.c.bf16 %v2569, %v2567
    %v2599 = vpack.c.bf16 %v2573, %v2571
    %v2600 = vpack.c.bf16 %v2577, %v2575
    %v2601 = vpack.c.bf16 %v2581, %v2579
    %v2602 = vpack.c.bf16 %v2585, %v2583
    %v2603 = vpack.c.bf16 %v2589, %v2587
    %v2604 = vld [vmem:[#allocation9] sm:$0xf]
    %v2605 = vld [vmem:[#allocation9 + $0x4] sm:$0xf]
    %v2606 = vld [vmem:[#allocation9 + $0x8] sm:$0xf]
    %v2607 = vld [vmem:[#allocation9 + $0xc] sm:$0xf]
    %v2608 = vld [vmem:[#allocation9 + $0x10] sm:$0xf]
    %v2609 = vld [vmem:[#allocation9 + $0x14] sm:$0xf]
    %v2610 = vld [vmem:[#allocation9 + $0x18] sm:$0xf]
    %v2611 = vld [vmem:[#allocation9 + $0x1c] sm:$0xf]
    %v2612 = vld [vmem:[#allocation9 + $0x20] sm:$0xf]
    %v2613 = vld [vmem:[#allocation9 + $0x24] sm:$0xf]
    %v2614 = vld [vmem:[#allocation9 + $0x28] sm:$0xf]
    %v2615 = vld [vmem:[#allocation9 + $0x2c] sm:$0xf]
    %v2616 = vld [vmem:[#allocation9 + $0x30] sm:$0xf]
    %v2617 = vld [vmem:[#allocation9 + $0x34] sm:$0xf]
    %v2618 = vld [vmem:[#allocation9 + $0x38] sm:$0xf]
    %v2619 = vld [vmem:[#allocation9 + $0x3c] sm:$0xf]
    %v2636 = vunpack.c.l.b16 %v2604
    %v2637 = vunpack.c.l.b16 %v2605
    %v2638 = vunpack.c.l.b16 %v2606
    %v2639 = vunpack.c.l.b16 %v2607
    %v2640 = vunpack.c.l.b16 %v2608
    %v2641 = vunpack.c.l.b16 %v2609
    %v2642 = vunpack.c.l.b16 %v2610
    %v2643 = vunpack.c.l.b16 %v2611
    %v2644 = vunpack.c.l.b16 %v2612
    %v2645 = vunpack.c.l.b16 %v2613
    %v2646 = vunpack.c.l.b16 %v2614
    %v2647 = vunpack.c.l.b16 %v2615
    %v2648 = vunpack.c.l.b16 %v2616
    %v2649 = vunpack.c.l.b16 %v2617
    %v2650 = vunpack.c.l.b16 %v2618
    %v2651 = vunpack.c.l.b16 %v2619
    %v2652 = vpack.c.b16 %v2637, %v2636
    %v2653 = vpack.c.b16 %v2639, %v2638
    %v2654 = vpack.c.b16 %v2641, %v2640
    %v2655 = vpack.c.b16 %v2643, %v2642
    %v2656 = vpack.c.b16 %v2645, %v2644
    %v2657 = vpack.c.b16 %v2647, %v2646
    %v2658 = vpack.c.b16 %v2649, %v2648
    %v2659 = vpack.c.b16 %v2651, %v2650
    %2668 = vmatprep.subr.bf16.mxu0 0
    %2669 = vmatpush1.bf16.msra.mxu0 %v2659
    %2670 = vmatprep.subr.bf16.mxu0 0
    %2671 = vmatpush1.bf16.msra.mxu0 %v2658
    %2672 = vmatprep.subr.bf16.mxu0 0
    %2673 = vmatpush1.bf16.msra.mxu0 %v2657
    %2674 = vmatprep.subr.bf16.mxu0 0
    %2675 = vmatpush1.bf16.msra.mxu0 %v2656
    %2676 = vmatprep.subr.bf16.mxu0 0
    %2677 = vmatpush1.bf16.msra.mxu0 %v2655
    %2678 = vmatprep.subr.bf16.mxu0 0
    %2679 = vmatpush1.bf16.msra.mxu0 %v2654
    %2680 = vmatprep.subr.bf16.mxu0 0
    %2681 = vmatpush1.bf16.msra.mxu0 %v2653
    %2682 = vmatprep.subr.bf16.mxu0 0
    %2683 = vmatpush1.bf16.msra.mxu0 %v2652
    %2684 = vmatprep.subr.bf16.mxu0 0
    %2685 = vmatpush2.bf16.msra.mxu0 0
    %2686 = vmatprep.subr.bf16.mxu0 0
    %2687 = vmatpush2.bf16.msra.mxu0 0
    %2688 = vmatprep.subr.bf16.mxu0 0
    %2689 = vmatpush2.bf16.msra.mxu0 0
    %2690 = vmatprep.subr.bf16.mxu0 0
    %2691 = vmatpush2.bf16.msra.mxu0 0
    %2692 = vmatprep.subr.bf16.mxu0 0
    %2693 = vmatpush2.bf16.msra.mxu0 0
    %2694 = vmatprep.subr.bf16.mxu0 0
    %2695 = vmatpush2.bf16.msra.mxu0 0
    %2696 = vmatprep.subr.bf16.mxu0 0
    %2697 = vmatpush2.bf16.msra.mxu0 0
    %2698 = vmatprep.subr.bf16.mxu0 0
    %2699 = vmatpush2.bf16.msra.mxu0 0
    %2700 = vmatprep.mubr.bf16.mxu0 0
    %2701 = vmatmul.mubr.bf16.gmra.mxu0 %v2590
    %v2702 = vpop.f32.mrf.mxu0
    %v2703 = vadd.f32 0.0, %v2702
    %v2704 = vpop.f32.mrf.mxu0
    %v2705 = vpop.f32.mrf.mxu0
    %v2706 = vadd.f32 0.0, %v2705
    %v2707 = vpop.f32.mrf.mxu0
    %2708 = vmatprep.mubr.bf16.mxu0 0
    %2709 = vmatmul.mubr.bf16.gmra.mxu0 %v2591
    %v2710 = vpop.f32.mrf.mxu0
    %v2711 = vadd.f32 0.0, %v2710
    %v2712 = vpop.f32.mrf.mxu0
    %v2713 = vpop.f32.mrf.mxu0
    %v2714 = vadd.f32 0.0, %v2713
    %v2715 = vpop.f32.mrf.mxu0
    %2716 = vmatprep.mubr.bf16.mxu0 0
    %2717 = vmatmul.mubr.bf16.gmra.mxu0 %v2592
    %v2718 = vpop.f32.mrf.mxu0
    %v2719 = vadd.f32 0.0, %v2718
    %v2720 = vpop.f32.mrf.mxu0
    %v2721 = vpop.f32.mrf.mxu0
    %v2722 = vadd.f32 0.0, %v2721
    %v2723 = vpop.f32.mrf.mxu0
    %2724 = vmatprep.mubr.bf16.mxu0 0
    %2725 = vmatmul.mubr.bf16.gmra.mxu0 %v2593
    %v2726 = vpop.f32.mrf.mxu0
    %v2727 = vadd.f32 0.0, %v2726
    %v2728 = vpop.f32.mrf.mxu0
    %v2729 = vpop.f32.mrf.mxu0
    %v2730 = vadd.f32 0.0, %v2729
    %v2731 = vpop.f32.mrf.mxu0
    %2732 = vmatprep.mubr.bf16.mxu0 0
    %2733 = vmatmul.mubr.bf16.gmra.mxu0 %v2594
    %v2734 = vpop.f32.mrf.mxu0
    %v2735 = vadd.f32 0.0, %v2734
    %v2736 = vpop.f32.mrf.mxu0
    %v2737 = vpop.f32.mrf.mxu0
    %v2738 = vadd.f32 0.0, %v2737
    %v2739 = vpop.f32.mrf.mxu0
    %2740 = vmatprep.mubr.bf16.mxu0 0
    %2741 = vmatmul.mubr.bf16.gmra.mxu0 %v2595
    %v2742 = vpop.f32.mrf.mxu0
    %v2743 = vadd.f32 0.0, %v2742
    %v2744 = vpop.f32.mrf.mxu0
    %v2745 = vpop.f32.mrf.mxu0
    %v2746 = vadd.f32 0.0, %v2745
    %v2747 = vpop.f32.mrf.mxu0
    %2748 = vmatprep.mubr.bf16.mxu0 0
    %2749 = vmatmul.mubr.bf16.gmra.mxu0 %v2596
    %v2750 = vpop.f32.mrf.mxu0
    %v2751 = vadd.f32 0.0, %v2750
    %v2752 = vpop.f32.mrf.mxu0
    %v2753 = vpop.f32.mrf.mxu0
    %v2754 = vadd.f32 0.0, %v2753
    %v2755 = vpop.f32.mrf.mxu0
    %2756 = vmatprep.mubr.bf16.mxu0 0
    %2757 = vmatmul.mubr.bf16.gmra.mxu0 %v2597
    %v2758 = vpop.f32.mrf.mxu0
    %v2759 = vadd.f32 0.0, %v2758
    %v2760 = vpop.f32.mrf.mxu0
    %v2761 = vpop.f32.mrf.mxu0
    %v2762 = vadd.f32 0.0, %v2761
    %v2763 = vpop.f32.mrf.mxu0
    %2764 = vmatprep.mubr.bf16.mxu0 0
    %2765 = vmatmul.mubr.bf16.gmra.mxu0 %v2598
    %v2766 = vpop.f32.mrf.mxu0
    %v2767 = vadd.f32 0.0, %v2766
    %v2768 = vpop.f32.mrf.mxu0
    %v2769 = vpop.f32.mrf.mxu0
    %v2770 = vadd.f32 0.0, %v2769
    %v2771 = vpop.f32.mrf.mxu0
    %2772 = vmatprep.mubr.bf16.mxu0 0
    %2773 = vmatmul.mubr.bf16.gmra.mxu0 %v2599
    %v2774 = vpop.f32.mrf.mxu0
    %v2775 = vadd.f32 0.0, %v2774
    %v2776 = vpop.f32.mrf.mxu0
    %v2777 = vpop.f32.mrf.mxu0
    %v2778 = vadd.f32 0.0, %v2777
    %v2779 = vpop.f32.mrf.mxu0
    %2780 = vmatprep.mubr.bf16.mxu0 0
    %2781 = vmatmul.mubr.bf16.gmra.mxu0 %v2600
    %v2782 = vpop.f32.mrf.mxu0
    %v2783 = vadd.f32 0.0, %v2782
    %v2784 = vpop.f32.mrf.mxu0
    %v2785 = vpop.f32.mrf.mxu0
    %v2786 = vadd.f32 0.0, %v2785
    %v2787 = vpop.f32.mrf.mxu0
    %2788 = vmatprep.mubr.bf16.mxu0 0
    %2789 = vmatmul.mubr.bf16.gmra.mxu0 %v2601
    %v2790 = vpop.f32.mrf.mxu0
    %v2791 = vadd.f32 0.0, %v2790
    %v2792 = vpop.f32.mrf.mxu0
    %v2793 = vpop.f32.mrf.mxu0
    %v2794 = vadd.f32 0.0, %v2793
    %v2795 = vpop.f32.mrf.mxu0
    %2796 = vmatprep.mubr.bf16.mxu0 0
    %2797 = vmatmul.mubr.bf16.gmra.mxu0 %v2602
    %v2798 = vpop.f32.mrf.mxu0
    %v2799 = vadd.f32 0.0, %v2798
    %v2800 = vpop.f32.mrf.mxu0
    %v2801 = vpop.f32.mrf.mxu0
    %v2802 = vadd.f32 0.0, %v2801
    %v2803 = vpop.f32.mrf.mxu0
    %2804 = vmatprep.mubr.bf16.mxu0 0
    %2805 = vmatmul.mubr.bf16.gmra.mxu0 %v2603
    %v2806 = vpop.f32.mrf.mxu0
    %v2807 = vadd.f32 0.0, %v2806
    %v2808 = vpop.f32.mrf.mxu0
    %v2809 = vpop.f32.mrf.mxu0
    %v2810 = vadd.f32 0.0, %v2809
    %v2811 = vpop.f32.mrf.mxu0
    %2812 = vdwg.mxu0
    %s2813 = scalar_lea.vmem [#allocation9], 64
    %v2814 = vld [vmem:[%s2813] sm:$0xf]
    %v2815 = vld [vmem:[%s2813 + $0x4] sm:$0xf]
    %v2816 = vld [vmem:[%s2813 + $0x8] sm:$0xf]
    %v2817 = vld [vmem:[%s2813 + $0xc] sm:$0xf]
    %v2818 = vld [vmem:[%s2813 + $0x10] sm:$0xf]
    %v2819 = vld [vmem:[%s2813 + $0x14] sm:$0xf]
    %v2820 = vld [vmem:[%s2813 + $0x18] sm:$0xf]
    %v2821 = vld [vmem:[%s2813 + $0x1c] sm:$0xf]
    %v2822 = vld [vmem:[%s2813 + $0x20] sm:$0xf]
    %v2823 = vld [vmem:[%s2813 + $0x24] sm:$0xf]
    %v2824 = vld [vmem:[%s2813 + $0x28] sm:$0xf]
    %v2825 = vld [vmem:[%s2813 + $0x2c] sm:$0xf]
    %v2826 = vld [vmem:[%s2813 + $0x30] sm:$0xf]
    %v2827 = vld [vmem:[%s2813 + $0x34] sm:$0xf]
    %v2828 = vld [vmem:[%s2813 + $0x38] sm:$0xf]
    %v2829 = vld [vmem:[%s2813 + $0x3c] sm:$0xf]
    %v2846 = vunpack.c.l.b16 %v2814
    %v2847 = vunpack.c.l.b16 %v2815
    %v2848 = vunpack.c.l.b16 %v2816
    %v2849 = vunpack.c.l.b16 %v2817
    %v2850 = vunpack.c.l.b16 %v2818
    %v2851 = vunpack.c.l.b16 %v2819
    %v2852 = vunpack.c.l.b16 %v2820
    %v2853 = vunpack.c.l.b16 %v2821
    %v2854 = vunpack.c.l.b16 %v2822
    %v2855 = vunpack.c.l.b16 %v2823
    %v2856 = vunpack.c.l.b16 %v2824
    %v2857 = vunpack.c.l.b16 %v2825
    %v2858 = vunpack.c.l.b16 %v2826
    %v2859 = vunpack.c.l.b16 %v2827
    %v2860 = vunpack.c.l.b16 %v2828
    %v2861 = vunpack.c.l.b16 %v2829
    %v2862 = vpack.c.b16 %v2847, %v2846
    %v2863 = vpack.c.b16 %v2849, %v2848
    %v2864 = vpack.c.b16 %v2851, %v2850
    %v2865 = vpack.c.b16 %v2853, %v2852
    %v2866 = vpack.c.b16 %v2855, %v2854
    %v2867 = vpack.c.b16 %v2857, %v2856
    %v2868 = vpack.c.b16 %v2859, %v2858
    %v2869 = vpack.c.b16 %v2861, %v2860
    %2878 = vmatprep.subr.bf16.mxu0 0
    %2879 = vmatpush1.bf16.msra.mxu0 %v2869
    %2880 = vmatprep.subr.bf16.mxu0 0
    %2881 = vmatpush1.bf16.msra.mxu0 %v2868
    %2882 = vmatprep.subr.bf16.mxu0 0
    %2883 = vmatpush1.bf16.msra.mxu0 %v2867
    %2884 = vmatprep.subr.bf16.mxu0 0
    %2885 = vmatpush1.bf16.msra.mxu0 %v2866
    %2886 = vmatprep.subr.bf16.mxu0 0
    %2887 = vmatpush1.bf16.msra.mxu0 %v2865
    %2888 = vmatprep.subr.bf16.mxu0 0
    %2889 = vmatpush1.bf16.msra.mxu0 %v2864
    %2890 = vmatprep.subr.bf16.mxu0 0
    %2891 = vmatpush1.bf16.msra.mxu0 %v2863
    %2892 = vmatprep.subr.bf16.mxu0 0
    %2893 = vmatpush1.bf16.msra.mxu0 %v2862
    %2894 = vmatprep.subr.bf16.mxu0 0
    %2895 = vmatpush2.bf16.msra.mxu0 0
    %2896 = vmatprep.subr.bf16.mxu0 0
    %2897 = vmatpush2.bf16.msra.mxu0 0
    %2898 = vmatprep.subr.bf16.mxu0 0
    %2899 = vmatpush2.bf16.msra.mxu0 0
    %2900 = vmatprep.subr.bf16.mxu0 0
    %2901 = vmatpush2.bf16.msra.mxu0 0
    %2902 = vmatprep.subr.bf16.mxu0 0
    %2903 = vmatpush2.bf16.msra.mxu0 0
    %2904 = vmatprep.subr.bf16.mxu0 0
    %2905 = vmatpush2.bf16.msra.mxu0 0
    %2906 = vmatprep.subr.bf16.mxu0 0
    %2907 = vmatpush2.bf16.msra.mxu0 0
    %2908 = vmatprep.subr.bf16.mxu0 0
    %2909 = vmatpush2.bf16.msra.mxu0 0
    %2910 = vmatprep.mubr.bf16.mxu0 0
    %2911 = vmatmul.mubr.bf16.gmra.mxu0 %v2590
    %v2912 = vpop.f32.mrf.mxu0
    %v2913 = vadd.f32 0.0, %v2912
    %v2914 = vpop.f32.mrf.mxu0
    %v2915 = vpop.f32.mrf.mxu0
    %v2916 = vadd.f32 0.0, %v2915
    %v2917 = vpop.f32.mrf.mxu0
    %2918 = vmatprep.mubr.bf16.mxu0 0
    %2919 = vmatmul.mubr.bf16.gmra.mxu0 %v2591
    %v2920 = vpop.f32.mrf.mxu0
    %v2921 = vadd.f32 0.0, %v2920
    %v2922 = vpop.f32.mrf.mxu0
    %v2923 = vpop.f32.mrf.mxu0
    %v2924 = vadd.f32 0.0, %v2923
    %v2925 = vpop.f32.mrf.mxu0
    %2926 = vmatprep.mubr.bf16.mxu0 0
    %2927 = vmatmul.mubr.bf16.gmra.mxu0 %v2592
    %v2928 = vpop.f32.mrf.mxu0
    %v2929 = vadd.f32 0.0, %v2928
    %v2930 = vpop.f32.mrf.mxu0
    %v2931 = vpop.f32.mrf.mxu0
    %v2932 = vadd.f32 0.0, %v2931
    %v2933 = vpop.f32.mrf.mxu0
    %2934 = vmatprep.mubr.bf16.mxu0 0
    %2935 = vmatmul.mubr.bf16.gmra.mxu0 %v2593
    %v2936 = vpop.f32.mrf.mxu0
    %v2937 = vadd.f32 0.0, %v2936
    %v2938 = vpop.f32.mrf.mxu0
    %v2939 = vpop.f32.mrf.mxu0
    %v2940 = vadd.f32 0.0, %v2939
    %v2941 = vpop.f32.mrf.mxu0
    %2942 = vmatprep.mubr.bf16.mxu0 0
    %2943 = vmatmul.mubr.bf16.gmra.mxu0 %v2594
    %v2944 = vpop.f32.mrf.mxu0
    %v2945 = vadd.f32 0.0, %v2944
    %v2946 = vpop.f32.mrf.mxu0
    %v2947 = vpop.f32.mrf.mxu0
    %v2948 = vadd.f32 0.0, %v2947
    %v2949 = vpop.f32.mrf.mxu0
    %2950 = vmatprep.mubr.bf16.mxu0 0
    %2951 = vmatmul.mubr.bf16.gmra.mxu0 %v2595
    %v2952 = vpop.f32.mrf.mxu0
    %v2953 = vadd.f32 0.0, %v2952
    %v2954 = vpop.f32.mrf.mxu0
    %v2955 = vpop.f32.mrf.mxu0
    %v2956 = vadd.f32 0.0, %v2955
    %v2957 = vpop.f32.mrf.mxu0
    %2958 = vmatprep.mubr.bf16.mxu0 0
    %2959 = vmatmul.mubr.bf16.gmra.mxu0 %v2596
    %v2960 = vpop.f32.mrf.mxu0
    %v2961 = vadd.f32 0.0, %v2960
    %v2962 = vpop.f32.mrf.mxu0
    %v2963 = vpop.f32.mrf.mxu0
    %v2964 = vadd.f32 0.0, %v2963
    %v2965 = vpop.f32.mrf.mxu0
    %2966 = vmatprep.mubr.bf16.mxu0 0
    %2967 = vmatmul.mubr.bf16.gmra.mxu0 %v2597
    %v2968 = vpop.f32.mrf.mxu0
    %v2969 = vadd.f32 0.0, %v2968
    %v2970 = vpop.f32.mrf.mxu0
    %v2971 = vpop.f32.mrf.mxu0
    %v2972 = vadd.f32 0.0, %v2971
    %v2973 = vpop.f32.mrf.mxu0
    %2974 = vmatprep.mubr.bf16.mxu0 0
    %2975 = vmatmul.mubr.bf16.gmra.mxu0 %v2598
    %v2976 = vpop.f32.mrf.mxu0
    %v2977 = vadd.f32 0.0, %v2976
    %v2978 = vpop.f32.mrf.mxu0
    %v2979 = vpop.f32.mrf.mxu0
    %v2980 = vadd.f32 0.0, %v2979
    %v2981 = vpop.f32.mrf.mxu0
    %2982 = vmatprep.mubr.bf16.mxu0 0
    %2983 = vmatmul.mubr.bf16.gmra.mxu0 %v2599
    %v2984 = vpop.f32.mrf.mxu0
    %v2985 = vadd.f32 0.0, %v2984
    %v2986 = vpop.f32.mrf.mxu0
    %v2987 = vpop.f32.mrf.mxu0
    %v2988 = vadd.f32 0.0, %v2987
    %v2989 = vpop.f32.mrf.mxu0
    %2990 = vmatprep.mubr.bf16.mxu0 0
    %2991 = vmatmul.mubr.bf16.gmra.mxu0 %v2600
    %v2992 = vpop.f32.mrf.mxu0
    %v2993 = vadd.f32 0.0, %v2992
    %v2994 = vpop.f32.mrf.mxu0
    %v2995 = vpop.f32.mrf.mxu0
    %v2996 = vadd.f32 0.0, %v2995
    %v2997 = vpop.f32.mrf.mxu0
    %2998 = vmatprep.mubr.bf16.mxu0 0
    %2999 = vmatmul.mubr.bf16.gmra.mxu0 %v2601
    %v3000 = vpop.f32.mrf.mxu0
    %v3001 = vadd.f32 0.0, %v3000
    %v3002 = vpop.f32.mrf.mxu0
    %v3003 = vpop.f32.mrf.mxu0
    %v3004 = vadd.f32 0.0, %v3003
    %v3005 = vpop.f32.mrf.mxu0
    %3006 = vmatprep.mubr.bf16.mxu0 0
    %3007 = vmatmul.mubr.bf16.gmra.mxu0 %v2602
    %v3008 = vpop.f32.mrf.mxu0
    %v3009 = vadd.f32 0.0, %v3008
    %v3010 = vpop.f32.mrf.mxu0
    %v3011 = vpop.f32.mrf.mxu0
    %v3012 = vadd.f32 0.0, %v3011
    %v3013 = vpop.f32.mrf.mxu0
    %3014 = vmatprep.mubr.bf16.mxu0 0
    %3015 = vmatmul.mubr.bf16.gmra.mxu0 %v2603
    %v3016 = vpop.f32.mrf.mxu0
    %v3017 = vadd.f32 0.0, %v3016
    %v3018 = vpop.f32.mrf.mxu0
    %v3019 = vpop.f32.mrf.mxu0
    %v3020 = vadd.f32 0.0, %v3019
    %v3021 = vpop.f32.mrf.mxu0
    %3022 = vdwg.mxu0
    %s3023 = scalar_lea.vmem [#allocation9], 128
    %v3024 = vld [vmem:[%s3023] sm:$0xf]
    %v3025 = vld [vmem:[%s3023 + $0x4] sm:$0xf]
    %v3026 = vld [vmem:[%s3023 + $0x8] sm:$0xf]
    %v3027 = vld [vmem:[%s3023 + $0xc] sm:$0xf]
    %v3028 = vld [vmem:[%s3023 + $0x10] sm:$0xf]
    %v3029 = vld [vmem:[%s3023 + $0x14] sm:$0xf]
    %v3030 = vld [vmem:[%s3023 + $0x18] sm:$0xf]
    %v3031 = vld [vmem:[%s3023 + $0x1c] sm:$0xf]
    %v3032 = vld [vmem:[%s3023 + $0x20] sm:$0xf]
    %v3033 = vld [vmem:[%s3023 + $0x24] sm:$0xf]
    %v3034 = vld [vmem:[%s3023 + $0x28] sm:$0xf]
    %v3035 = vld [vmem:[%s3023 + $0x2c] sm:$0xf]
    %v3036 = vld [vmem:[%s3023 + $0x30] sm:$0xf]
    %v3037 = vld [vmem:[%s3023 + $0x34] sm:$0xf]
    %v3038 = vld [vmem:[%s3023 + $0x38] sm:$0xf]
    %v3039 = vld [vmem:[%s3023 + $0x3c] sm:$0xf]
    %v3056 = vunpack.c.l.b16 %v3024
    %v3057 = vunpack.c.l.b16 %v3025
    %v3058 = vunpack.c.l.b16 %v3026
    %v3059 = vunpack.c.l.b16 %v3027
    %v3060 = vunpack.c.l.b16 %v3028
    %v3061 = vunpack.c.l.b16 %v3029
    %v3062 = vunpack.c.l.b16 %v3030
    %v3063 = vunpack.c.l.b16 %v3031
    %v3064 = vunpack.c.l.b16 %v3032
    %v3065 = vunpack.c.l.b16 %v3033
    %v3066 = vunpack.c.l.b16 %v3034
    %v3067 = vunpack.c.l.b16 %v3035
    %v3068 = vunpack.c.l.b16 %v3036
    %v3069 = vunpack.c.l.b16 %v3037
    %v3070 = vunpack.c.l.b16 %v3038
    %v3071 = vunpack.c.l.b16 %v3039
    %v3072 = vpack.c.b16 %v3057, %v3056
    %v3073 = vpack.c.b16 %v3059, %v3058
    %v3074 = vpack.c.b16 %v3061, %v3060
    %v3075 = vpack.c.b16 %v3063, %v3062
    %v3076 = vpack.c.b16 %v3065, %v3064
    %v3077 = vpack.c.b16 %v3067, %v3066
    %v3078 = vpack.c.b16 %v3069, %v3068
    %v3079 = vpack.c.b16 %v3071, %v3070
    %3088 = vmatprep.subr.bf16.mxu0 0
    %3089 = vmatpush1.bf16.msra.mxu0 %v3079
    %3090 = vmatprep.subr.bf16.mxu0 0
    %3091 = vmatpush1.bf16.msra.mxu0 %v3078
    %3092 = vmatprep.subr.bf16.mxu0 0
    %3093 = vmatpush1.bf16.msra.mxu0 %v3077
    %3094 = vmatprep.subr.bf16.mxu0 0
    %3095 = vmatpush1.bf16.msra.mxu0 %v3076
    %3096 = vmatprep.subr.bf16.mxu0 0
    %3097 = vmatpush1.bf16.msra.mxu0 %v3075
    %3098 = vmatprep.subr.bf16.mxu0 0
    %3099 = vmatpush1.bf16.msra.mxu0 %v3074
    %3100 = vmatprep.subr.bf16.mxu0 0
    %3101 = vmatpush1.bf16.msra.mxu0 %v3073
    %3102 = vmatprep.subr.bf16.mxu0 0
    %3103 = vmatpush1.bf16.msra.mxu0 %v3072
    %3104 = vmatprep.subr.bf16.mxu0 0
    %3105 = vmatpush2.bf16.msra.mxu0 0
    %3106 = vmatprep.subr.bf16.mxu0 0
    %3107 = vmatpush2.bf16.msra.mxu0 0
    %3108 = vmatprep.subr.bf16.mxu0 0
    %3109 = vmatpush2.bf16.msra.mxu0 0
    %3110 = vmatprep.subr.bf16.mxu0 0
    %3111 = vmatpush2.bf16.msra.mxu0 0
    %3112 = vmatprep.subr.bf16.mxu0 0
    %3113 = vmatpush2.bf16.msra.mxu0 0
    %3114 = vmatprep.subr.bf16.mxu0 0
    %3115 = vmatpush2.bf16.msra.mxu0 0
    %3116 = vmatprep.subr.bf16.mxu0 0
    %3117 = vmatpush2.bf16.msra.mxu0 0
    %3118 = vmatprep.subr.bf16.mxu0 0
    %3119 = vmatpush2.bf16.msra.mxu0 0
    %3120 = vmatprep.mubr.bf16.mxu0 0
    %3121 = vmatmul.mubr.bf16.gmra.mxu0 %v2590
    %v3122 = vpop.f32.mrf.mxu0
    %v3123 = vadd.f32 0.0, %v3122
    %v3124 = vpop.f32.mrf.mxu0
    %v3125 = vpop.f32.mrf.mxu0
    %v3126 = vadd.f32 0.0, %v3125
    %v3127 = vpop.f32.mrf.mxu0
    %3128 = vmatprep.mubr.bf16.mxu0 0
    %3129 = vmatmul.mubr.bf16.gmra.mxu0 %v2591
    %v3130 = vpop.f32.mrf.mxu0
    %v3131 = vadd.f32 0.0, %v3130
    %v3132 = vpop.f32.mrf.mxu0
    %v3133 = vpop.f32.mrf.mxu0
    %v3134 = vadd.f32 0.0, %v3133
    %v3135 = vpop.f32.mrf.mxu0
    %3136 = vmatprep.mubr.bf16.mxu0 0
    %3137 = vmatmul.mubr.bf16.gmra.mxu0 %v2592
    %v3138 = vpop.f32.mrf.mxu0
    %v3139 = vadd.f32 0.0, %v3138
    %v3140 = vpop.f32.mrf.mxu0
    %v3141 = vpop.f32.mrf.mxu0
    %v3142 = vadd.f32 0.0, %v3141
    %v3143 = vpop.f32.mrf.mxu0
    %3144 = vmatprep.mubr.bf16.mxu0 0
    %3145 = vmatmul.mubr.bf16.gmra.mxu0 %v2593
    %v3146 = vpop.f32.mrf.mxu0
    %v3147 = vadd.f32 0.0, %v3146
    %v3148 = vpop.f32.mrf.mxu0
    %v3149 = vpop.f32.mrf.mxu0
    %v3150 = vadd.f32 0.0, %v3149
    %v3151 = vpop.f32.mrf.mxu0
    %3152 = vmatprep.mubr.bf16.mxu0 0
    %3153 = vmatmul.mubr.bf16.gmra.mxu0 %v2594
    %v3154 = vpop.f32.mrf.mxu0
    %v3155 = vadd.f32 0.0, %v3154
    %v3156 = vpop.f32.mrf.mxu0
    %v3157 = vpop.f32.mrf.mxu0
    %v3158 = vadd.f32 0.0, %v3157
    %v3159 = vpop.f32.mrf.mxu0
    %3160 = vmatprep.mubr.bf16.mxu0 0
    %3161 = vmatmul.mubr.bf16.gmra.mxu0 %v2595
    %v3162 = vpop.f32.mrf.mxu0
    %v3163 = vadd.f32 0.0, %v3162
    %v3164 = vpop.f32.mrf.mxu0
    %v3165 = vpop.f32.mrf.mxu0
    %v3166 = vadd.f32 0.0, %v3165
    %v3167 = vpop.f32.mrf.mxu0
    %3168 = vmatprep.mubr.bf16.mxu0 0
    %3169 = vmatmul.mubr.bf16.gmra.mxu0 %v2596
    %v3170 = vpop.f32.mrf.mxu0
    %v3171 = vadd.f32 0.0, %v3170
    %v3172 = vpop.f32.mrf.mxu0
    %v3173 = vpop.f32.mrf.mxu0
    %v3174 = vadd.f32 0.0, %v3173
    %v3175 = vpop.f32.mrf.mxu0
    %3176 = vmatprep.mubr.bf16.mxu0 0
    %3177 = vmatmul.mubr.bf16.gmra.mxu0 %v2597
    %v3178 = vpop.f32.mrf.mxu0
    %v3179 = vadd.f32 0.0, %v3178
    %v3180 = vpop.f32.mrf.mxu0
    %v3181 = vpop.f32.mrf.mxu0
    %v3182 = vadd.f32 0.0, %v3181
    %v3183 = vpop.f32.mrf.mxu0
    %3184 = vmatprep.mubr.bf16.mxu0 0
    %3185 = vmatmul.mubr.bf16.gmra.mxu0 %v2598
    %v3186 = vpop.f32.mrf.mxu0
    %v3187 = vadd.f32 0.0, %v3186
    %v3188 = vpop.f32.mrf.mxu0
    %v3189 = vpop.f32.mrf.mxu0
    %v3190 = vadd.f32 0.0, %v3189
    %v3191 = vpop.f32.mrf.mxu0
    %3192 = vmatprep.mubr.bf16.mxu0 0
    %3193 = vmatmul.mubr.bf16.gmra.mxu0 %v2599
    %v3194 = vpop.f32.mrf.mxu0
    %v3195 = vadd.f32 0.0, %v3194
    %v3196 = vpop.f32.mrf.mxu0
    %v3197 = vpop.f32.mrf.mxu0
    %v3198 = vadd.f32 0.0, %v3197
    %v3199 = vpop.f32.mrf.mxu0
    %3200 = vmatprep.mubr.bf16.mxu0 0
    %3201 = vmatmul.mubr.bf16.gmra.mxu0 %v2600
    %v3202 = vpop.f32.mrf.mxu0
    %v3203 = vadd.f32 0.0, %v3202
    %v3204 = vpop.f32.mrf.mxu0
    %v3205 = vpop.f32.mrf.mxu0
    %v3206 = vadd.f32 0.0, %v3205
    %v3207 = vpop.f32.mrf.mxu0
    %3208 = vmatprep.mubr.bf16.mxu0 0
    %3209 = vmatmul.mubr.bf16.gmra.mxu0 %v2601
    %v3210 = vpop.f32.mrf.mxu0
    %v3211 = vadd.f32 0.0, %v3210
    %v3212 = vpop.f32.mrf.mxu0
    %v3213 = vpop.f32.mrf.mxu0
    %v3214 = vadd.f32 0.0, %v3213
    %v3215 = vpop.f32.mrf.mxu0
    %3216 = vmatprep.mubr.bf16.mxu0 0
    %3217 = vmatmul.mubr.bf16.gmra.mxu0 %v2602
    %v3218 = vpop.f32.mrf.mxu0
    %v3219 = vadd.f32 0.0, %v3218
    %v3220 = vpop.f32.mrf.mxu0
    %v3221 = vpop.f32.mrf.mxu0
    %v3222 = vadd.f32 0.0, %v3221
    %v3223 = vpop.f32.mrf.mxu0
    %3224 = vmatprep.mubr.bf16.mxu0 0
    %3225 = vmatmul.mubr.bf16.gmra.mxu0 %v2603
    %v3226 = vpop.f32.mrf.mxu0
    %v3227 = vadd.f32 0.0, %v3226
    %v3228 = vpop.f32.mrf.mxu0
    %v3229 = vpop.f32.mrf.mxu0
    %v3230 = vadd.f32 0.0, %v3229
    %v3231 = vpop.f32.mrf.mxu0
    %3232 = vdwg.mxu0
    %v3261 = vrot.slane %v2913, 1
    %v3262 = vrot.slane %v2916, 1
    %v3263 = vsel %vm1354, %v3261, %v3262
    %v3264 = vrot.slane %v2921, 1
    %v3265 = vsel %vm1354, %v3262, %v3264
    %v3266 = vrot.slane %v2924, 1
    %v3267 = vsel %vm1354, %v3264, %v3266
    %v3268 = vrot.slane %v2929, 1
    %v3269 = vsel %vm1354, %v3266, %v3268
    %v3270 = vrot.slane %v2932, 1
    %v3271 = vsel %vm1354, %v3268, %v3270
    %v3272 = vrot.slane %v2937, 1
    %v3273 = vsel %vm1354, %v3270, %v3272
    %v3274 = vrot.slane %v2940, 1
    %v3275 = vsel %vm1354, %v3272, %v3274
    %v3276 = vrot.slane %v2945, 1
    %v3277 = vsel %vm1354, %v3274, %v3276
    %v3278 = vrot.slane %v2948, 1
    %v3279 = vsel %vm1354, %v3276, %v3278
    %v3280 = vrot.slane %v2953, 1
    %v3281 = vsel %vm1354, %v3278, %v3280
    %v3282 = vrot.slane %v2956, 1
    %v3283 = vsel %vm1354, %v3280, %v3282
    %v3284 = vrot.slane %v2961, 1
    %v3285 = vsel %vm1354, %v3282, %v3284
    %v3286 = vrot.slane %v2964, 1
    %v3287 = vsel %vm1354, %v3284, %v3286
    %v3288 = vrot.slane %v2969, 1
    %v3289 = vsel %vm1354, %v3286, %v3288
    %v3290 = vrot.slane %v2972, 1
    %v3291 = vsel %vm1354, %v3288, %v3290
    %v3292 = vrot.slane %v2977, 1
    %v3293 = vsel %vm1354, %v3290, %v3292
    %v3294 = vrot.slane %v2980, 1
    %v3295 = vsel %vm1354, %v3292, %v3294
    %v3296 = vrot.slane %v2985, 1
    %v3297 = vsel %vm1354, %v3294, %v3296
    %v3298 = vrot.slane %v2988, 1
    %v3299 = vsel %vm1354, %v3296, %v3298
    %v3300 = vrot.slane %v2993, 1
    %v3301 = vsel %vm1354, %v3298, %v3300
    %v3302 = vrot.slane %v2996, 1
    %v3303 = vsel %vm1354, %v3300, %v3302
    %v3304 = vrot.slane %v3001, 1
    %v3305 = vsel %vm1354, %v3302, %v3304
    %v3306 = vrot.slane %v3004, 1
    %v3307 = vsel %vm1354, %v3304, %v3306
    %v3308 = vrot.slane %v3009, 1
    %v3309 = vsel %vm1354, %v3306, %v3308
    %v3310 = vrot.slane %v3012, 1
    %v3311 = vsel %vm1354, %v3308, %v3310
    %v3312 = vrot.slane %v3017, 1
    %v3313 = vsel %vm1354, %v3310, %v3312
    %v3314 = vrot.slane %v3020, 1
    %v3315 = vsel %vm1354, %v3312, %v3314
    %v3344 = vadd.f32 %v2703, %v3263
    %v3345 = vadd.f32 %v2706, %v3265
    %v3346 = vadd.f32 %v2711, %v3267
    %v3347 = vadd.f32 %v2714, %v3269
    %v3348 = vadd.f32 %v2719, %v3271
    %v3349 = vadd.f32 %v2722, %v3273
    %v3350 = vadd.f32 %v2727, %v3275
    %v3351 = vadd.f32 %v2730, %v3277
    %v3352 = vadd.f32 %v2735, %v3279
    %v3353 = vadd.f32 %v2738, %v3281
    %v3354 = vadd.f32 %v2743, %v3283
    %v3355 = vadd.f32 %v2746, %v3285
    %v3356 = vadd.f32 %v2751, %v3287
    %v3357 = vadd.f32 %v2754, %v3289
    %v3358 = vadd.f32 %v2759, %v3291
    %v3359 = vadd.f32 %v2762, %v3293
    %v3360 = vadd.f32 %v2767, %v3295
    %v3361 = vadd.f32 %v2770, %v3297
    %v3362 = vadd.f32 %v2775, %v3299
    %v3363 = vadd.f32 %v2778, %v3301
    %v3364 = vadd.f32 %v2783, %v3303
    %v3365 = vadd.f32 %v2786, %v3305
    %v3366 = vadd.f32 %v2791, %v3307
    %v3367 = vadd.f32 %v2794, %v3309
    %v3368 = vadd.f32 %v2799, %v3311
    %v3369 = vadd.f32 %v2802, %v3313
    %v3370 = vadd.f32 %v2807, %v3315
    %v3371 = vadd.f32 %v2810, %v3314
    %v3400 = vrot.slane %v3123, 2
    %v3401 = vrot.slane %v3126, 2
    %v3402 = vsel %vm1634, %v3400, %v3401
    %v3403 = vrot.slane %v3131, 2
    %v3404 = vsel %vm1634, %v3401, %v3403
    %v3405 = vrot.slane %v3134, 2
    %v3406 = vsel %vm1634, %v3403, %v3405
    %v3407 = vrot.slane %v3139, 2
    %v3408 = vsel %vm1634, %v3405, %v3407
    %v3409 = vrot.slane %v3142, 2
    %v3410 = vsel %vm1634, %v3407, %v3409
    %v3411 = vrot.slane %v3147, 2
    %v3412 = vsel %vm1634, %v3409, %v3411
    %v3413 = vrot.slane %v3150, 2
    %v3414 = vsel %vm1634, %v3411, %v3413
    %v3415 = vrot.slane %v3155, 2
    %v3416 = vsel %vm1634, %v3413, %v3415
    %v3417 = vrot.slane %v3158, 2
    %v3418 = vsel %vm1634, %v3415, %v3417
    %v3419 = vrot.slane %v3163, 2
    %v3420 = vsel %vm1634, %v3417, %v3419
    %v3421 = vrot.slane %v3166, 2
    %v3422 = vsel %vm1634, %v3419, %v3421
    %v3423 = vrot.slane %v3171, 2
    %v3424 = vsel %vm1634, %v3421, %v3423
    %v3425 = vrot.slane %v3174, 2
    %v3426 = vsel %vm1634, %v3423, %v3425
    %v3427 = vrot.slane %v3179, 2
    %v3428 = vsel %vm1634, %v3425, %v3427
    %v3429 = vrot.slane %v3182, 2
    %v3430 = vsel %vm1634, %v3427, %v3429
    %v3431 = vrot.slane %v3187, 2
    %v3432 = vsel %vm1634, %v3429, %v3431
    %v3433 = vrot.slane %v3190, 2
    %v3434 = vsel %vm1634, %v3431, %v3433
    %v3435 = vrot.slane %v3195, 2
    %v3436 = vsel %vm1634, %v3433, %v3435
    %v3437 = vrot.slane %v3198, 2
    %v3438 = vsel %vm1634, %v3435, %v3437
    %v3439 = vrot.slane %v3203, 2
    %v3440 = vsel %vm1634, %v3437, %v3439
    %v3441 = vrot.slane %v3206, 2
    %v3442 = vsel %vm1634, %v3439, %v3441
    %v3443 = vrot.slane %v3211, 2
    %v3444 = vsel %vm1634, %v3441, %v3443
    %v3445 = vrot.slane %v3214, 2
    %v3446 = vsel %vm1634, %v3443, %v3445
    %v3447 = vrot.slane %v3219, 2
    %v3448 = vsel %vm1634, %v3445, %v3447
    %v3449 = vrot.slane %v3222, 2
    %v3450 = vsel %vm1634, %v3447, %v3449
    %v3451 = vrot.slane %v3227, 2
    %v3452 = vsel %vm1634, %v3449, %v3451
    %v3453 = vrot.slane %v3230, 2
    %v3454 = vsel %vm1634, %v3451, %v3453
    %v3483 = vadd.f32 %v3344, %v3402
    %v3484 = vadd.f32 %v3345, %v3404
    %v3485 = vadd.f32 %v3346, %v3406
    %v3486 = vadd.f32 %v3347, %v3408
    %v3487 = vadd.f32 %v3348, %v3410
    %v3488 = vadd.f32 %v3349, %v3412
    %v3489 = vadd.f32 %v3350, %v3414
    %v3490 = vadd.f32 %v3351, %v3416
    %v3491 = vadd.f32 %v3352, %v3418
    %v3492 = vadd.f32 %v3353, %v3420
    %v3493 = vadd.f32 %v3354, %v3422
    %v3494 = vadd.f32 %v3355, %v3424
    %v3495 = vadd.f32 %v3356, %v3426
    %v3496 = vadd.f32 %v3357, %v3428
    %v3497 = vadd.f32 %v3358, %v3430
    %v3498 = vadd.f32 %v3359, %v3432
    %v3499 = vadd.f32 %v3360, %v3434
    %v3500 = vadd.f32 %v3361, %v3436
    %v3501 = vadd.f32 %v3362, %v3438
    %v3502 = vadd.f32 %v3363, %v3440
    %v3503 = vadd.f32 %v3364, %v3442
    %v3504 = vadd.f32 %v3365, %v3444
    %v3505 = vadd.f32 %v3366, %v3446
    %v3506 = vadd.f32 %v3367, %v3448
    %v3507 = vadd.f32 %v3368, %v3450
    %v3508 = vadd.f32 %v3369, %v3452
    %v3509 = vadd.f32 %v3370, %v3454
    %v3510 = vadd.f32 %v3371, %v3453
    %v3511 = vld [vmem:[%s4] sm:$0x1]
    %v3513 = vlaneseq
    %v3514 = vshrl.u32 %v3513, 7
    %v3515 = vsub.s32 0, %v3514
    %v3516 = vrot.slane %v3511, %v3515
    %v3518 = vadd.f32 %v3483, %v3516
    %v3519 = vadd.f32 %v3484, %v3516
    %v3520 = vadd.f32 %v3485, %v3516
    %v3521 = vadd.f32 %v3486, %v3516
    %v3522 = vadd.f32 %v3487, %v3516
    %v3523 = vadd.f32 %v3488, %v3516
    %v3524 = vadd.f32 %v3489, %v3516
    %v3525 = vadd.f32 %v3490, %v3516
    %v3526 = vadd.f32 %v3491, %v3516
    %v3527 = vadd.f32 %v3492, %v3516
    %v3528 = vadd.f32 %v3493, %v3516
    %v3529 = vadd.f32 %v3494, %v3516
    %v3530 = vadd.f32 %v3495, %v3516
    %v3531 = vadd.f32 %v3496, %v3516
    %v3532 = vadd.f32 %v3497, %v3516
    %v3533 = vadd.f32 %v3498, %v3516
    %v3534 = vadd.f32 %v3499, %v3516
    %v3535 = vadd.f32 %v3500, %v3516
    %v3536 = vadd.f32 %v3501, %v3516
    %v3537 = vadd.f32 %v3502, %v3516
    %v3538 = vadd.f32 %v3503, %v3516
    %v3539 = vadd.f32 %v3504, %v3516
    %v3540 = vadd.f32 %v3505, %v3516
    %v3541 = vadd.f32 %v3506, %v3516
    %v3542 = vadd.f32 %v3507, %v3516
    %v3543 = vadd.f32 %v3508, %v3516
    %v3544 = vadd.f32 %v3509, %v3516
    %v3545 = vadd.f32 %v3510, %v3516
    %v3546 = vmax.f32 %v3518, 0.0
    %v3547 = vmax.f32 %v3519, 0.0
    %v3548 = vmax.f32 %v3520, 0.0
    %v3549 = vmax.f32 %v3521, 0.0
    %v3550 = vmax.f32 %v3522, 0.0
    %v3551 = vmax.f32 %v3523, 0.0
    %v3552 = vmax.f32 %v3524, 0.0
    %v3553 = vmax.f32 %v3525, 0.0
    %v3554 = vmax.f32 %v3526, 0.0
    %v3555 = vmax.f32 %v3527, 0.0
    %v3556 = vmax.f32 %v3528, 0.0
    %v3557 = vmax.f32 %v3529, 0.0
    %v3558 = vmax.f32 %v3530, 0.0
    %v3559 = vmax.f32 %v3531, 0.0
    %v3560 = vmax.f32 %v3532, 0.0
    %v3561 = vmax.f32 %v3533, 0.0
    %v3562 = vmax.f32 %v3534, 0.0
    %v3563 = vmax.f32 %v3535, 0.0
    %v3564 = vmax.f32 %v3536, 0.0
    %v3565 = vmax.f32 %v3537, 0.0
    %v3566 = vmax.f32 %v3538, 0.0
    %v3567 = vmax.f32 %v3539, 0.0
    %v3568 = vmax.f32 %v3540, 0.0
    %v3569 = vmax.f32 %v3541, 0.0
    %v3570 = vmax.f32 %v3542, 0.0
    %v3571 = vmax.f32 %v3543, 0.0
    %v3572 = vmax.f32 %v3544, 0.0
    %v3573 = vmax.f32 %v3545, 0.0
    %v3602 = vrot.slane %v3546, 1
    %v3603 = vrot.slane %v3547, 1
    %v3604 = vsel %vm1354, %v3602, %v3603
    %v3605 = vrot.slane %v3548, 1
    %v3606 = vsel %vm1354, %v3603, %v3605
    %v3607 = vrot.slane %v3549, 1
    %v3608 = vsel %vm1354, %v3605, %v3607
    %v3609 = vrot.slane %v3550, 1
    %v3610 = vsel %vm1354, %v3607, %v3609
    %v3611 = vrot.slane %v3551, 1
    %v3612 = vsel %vm1354, %v3609, %v3611
    %v3613 = vrot.slane %v3552, 1
    %v3614 = vsel %vm1354, %v3611, %v3613
    %v3615 = vrot.slane %v3553, 1
    %v3616 = vsel %vm1354, %v3613, %v3615
    %v3617 = vrot.slane %v3554, 1
    %v3618 = vsel %vm1354, %v3615, %v3617
    %v3619 = vrot.slane %v3555, 1
    %v3620 = vsel %vm1354, %v3617, %v3619
    %v3621 = vrot.slane %v3556, 1
    %v3622 = vsel %vm1354, %v3619, %v3621
    %v3623 = vrot.slane %v3557, 1
    %v3624 = vsel %vm1354, %v3621, %v3623
    %v3625 = vrot.slane %v3558, 1
    %v3626 = vsel %vm1354, %v3623, %v3625
    %v3627 = vrot.slane %v3559, 1
    %v3628 = vsel %vm1354, %v3625, %v3627
    %v3629 = vrot.slane %v3560, 1
    %v3630 = vsel %vm1354, %v3627, %v3629
    %v3631 = vrot.slane %v3561, 1
    %v3632 = vsel %vm1354, %v3629, %v3631
    %v3633 = vrot.slane %v3562, 1
    %v3634 = vsel %vm1354, %v3631, %v3633
    %v3635 = vrot.slane %v3563, 1
    %v3636 = vsel %vm1354, %v3633, %v3635
    %v3637 = vrot.slane %v3564, 1
    %v3638 = vsel %vm1354, %v3635, %v3637
    %v3639 = vrot.slane %v3565, 1
    %v3640 = vsel %vm1354, %v3637, %v3639
    %v3641 = vrot.slane %v3566, 1
    %v3642 = vsel %vm1354, %v3639, %v3641
    %v3643 = vrot.slane %v3567, 1
    %v3644 = vsel %vm1354, %v3641, %v3643
    %v3645 = vrot.slane %v3568, 1
    %v3646 = vsel %vm1354, %v3643, %v3645
    %v3647 = vrot.slane %v3569, 1
    %v3648 = vsel %vm1354, %v3645, %v3647
    %v3649 = vrot.slane %v3570, 1
    %v3650 = vsel %vm1354, %v3647, %v3649
    %v3651 = vrot.slane %v3571, 1
    %v3652 = vsel %vm1354, %v3649, %v3651
    %v3653 = vrot.slane %v3572, 1
    %v3654 = vsel %vm1354, %v3651, %v3653
    %v3655 = vrot.slane %v3573, 1
    %v3656 = vsel %vm1354, %v3653, %v3655
    %v3685 = vmax.f32 %v3546, %v3604
    %v3686 = vmax.f32 %v3547, %v3606
    %v3687 = vmax.f32 %v3548, %v3608
    %v3688 = vmax.f32 %v3549, %v3610
    %v3689 = vmax.f32 %v3550, %v3612
    %v3690 = vmax.f32 %v3551, %v3614
    %v3691 = vmax.f32 %v3552, %v3616
    %v3692 = vmax.f32 %v3553, %v3618
    %v3693 = vmax.f32 %v3554, %v3620
    %v3694 = vmax.f32 %v3555, %v3622
    %v3695 = vmax.f32 %v3556, %v3624
    %v3696 = vmax.f32 %v3557, %v3626
    %v3697 = vmax.f32 %v3558, %v3628
    %v3698 = vmax.f32 %v3559, %v3630
    %v3699 = vmax.f32 %v3560, %v3632
    %v3700 = vmax.f32 %v3561, %v3634
    %v3701 = vmax.f32 %v3562, %v3636
    %v3702 = vmax.f32 %v3563, %v3638
    %v3703 = vmax.f32 %v3564, %v3640
    %v3704 = vmax.f32 %v3565, %v3642
    %v3705 = vmax.f32 %v3566, %v3644
    %v3706 = vmax.f32 %v3567, %v3646
    %v3707 = vmax.f32 %v3568, %v3648
    %v3708 = vmax.f32 %v3569, %v3650
    %v3709 = vmax.f32 %v3570, %v3652
    %v3710 = vmax.f32 %v3571, %v3654
    %v3711 = vmax.f32 %v3572, %v3656
    %v3712 = vmax.f32 %v3573, %v3655
    %v3713 = vrot.slane %v3546, 2
    %v3714 = vrot.slane %v3547, 2
    %v3715 = vsel %vm1634, %v3713, %v3714
    %v3716 = vrot.slane %v3548, 2
    %v3717 = vsel %vm1634, %v3714, %v3716
    %v3718 = vrot.slane %v3549, 2
    %v3719 = vsel %vm1634, %v3716, %v3718
    %v3720 = vrot.slane %v3550, 2
    %v3721 = vsel %vm1634, %v3718, %v3720
    %v3722 = vrot.slane %v3551, 2
    %v3723 = vsel %vm1634, %v3720, %v3722
    %v3724 = vrot.slane %v3552, 2
    %v3725 = vsel %vm1634, %v3722, %v3724
    %v3726 = vrot.slane %v3553, 2
    %v3727 = vsel %vm1634, %v3724, %v3726
    %v3728 = vrot.slane %v3554, 2
    %v3729 = vsel %vm1634, %v3726, %v3728
    %v3730 = vrot.slane %v3555, 2
    %v3731 = vsel %vm1634, %v3728, %v3730
    %v3732 = vrot.slane %v3556, 2
    %v3733 = vsel %vm1634, %v3730, %v3732
    %v3734 = vrot.slane %v3557, 2
    %v3735 = vsel %vm1634, %v3732, %v3734
    %v3736 = vrot.slane %v3558, 2
    %v3737 = vsel %vm1634, %v3734, %v3736
    %v3738 = vrot.slane %v3559, 2
    %v3739 = vsel %vm1634, %v3736, %v3738
    %v3740 = vrot.slane %v3560, 2
    %v3741 = vsel %vm1634, %v3738, %v3740
    %v3742 = vrot.slane %v3561, 2
    %v3743 = vsel %vm1634, %v3740, %v3742
    %v3744 = vrot.slane %v3562, 2
    %v3745 = vsel %vm1634, %v3742, %v3744
    %v3746 = vrot.slane %v3563, 2
    %v3747 = vsel %vm1634, %v3744, %v3746
    %v3748 = vrot.slane %v3564, 2
    %v3749 = vsel %vm1634, %v3746, %v3748
    %v3750 = vrot.slane %v3565, 2
    %v3751 = vsel %vm1634, %v3748, %v3750
    %v3752 = vrot.slane %v3566, 2
    %v3753 = vsel %vm1634, %v3750, %v3752
    %v3754 = vrot.slane %v3567, 2
    %v3755 = vsel %vm1634, %v3752, %v3754
    %v3756 = vrot.slane %v3568, 2
    %v3757 = vsel %vm1634, %v3754, %v3756
    %v3758 = vrot.slane %v3569, 2
    %v3759 = vsel %vm1634, %v3756, %v3758
    %v3760 = vrot.slane %v3570, 2
    %v3761 = vsel %vm1634, %v3758, %v3760
    %v3762 = vrot.slane %v3571, 2
    %v3763 = vsel %vm1634, %v3760, %v3762
    %v3764 = vrot.slane %v3572, 2
    %v3765 = vsel %vm1634, %v3762, %v3764
    %v3766 = vrot.slane %v3573, 2
    %v3767 = vsel %vm1634, %v3764, %v3766
    %v3796 = vmax.f32 %v3685, %v3715
    %v3797 = vmax.f32 %v3686, %v3717
    %v3798 = vmax.f32 %v3687, %v3719
    %v3799 = vmax.f32 %v3688, %v3721
    %v3800 = vmax.f32 %v3689, %v3723
    %v3801 = vmax.f32 %v3690, %v3725
    %v3802 = vmax.f32 %v3691, %v3727
    %v3803 = vmax.f32 %v3692, %v3729
    %v3804 = vmax.f32 %v3693, %v3731
    %v3805 = vmax.f32 %v3694, %v3733
    %v3806 = vmax.f32 %v3695, %v3735
    %v3807 = vmax.f32 %v3696, %v3737
    %v3808 = vmax.f32 %v3697, %v3739
    %v3809 = vmax.f32 %v3698, %v3741
    %v3810 = vmax.f32 %v3699, %v3743
    %v3811 = vmax.f32 %v3700, %v3745
    %v3812 = vmax.f32 %v3701, %v3747
    %v3813 = vmax.f32 %v3702, %v3749
    %v3814 = vmax.f32 %v3703, %v3751
    %v3815 = vmax.f32 %v3704, %v3753
    %v3816 = vmax.f32 %v3705, %v3755
    %v3817 = vmax.f32 %v3706, %v3757
    %v3818 = vmax.f32 %v3707, %v3759
    %v3819 = vmax.f32 %v3708, %v3761
    %v3820 = vmax.f32 %v3709, %v3763
    %v3821 = vmax.f32 %v3710, %v3765
    %v3822 = vmax.f32 %v3711, %v3767
    %v3823 = vmax.f32 %v3712, %v3766
    %3824 = vst [vmem:[#allocation3] sm:$0xff] %v3796
    %3825 = vst [vmem:[#allocation3 + $0x8] sm:$0xff] %v3797
    %3826 = vst [vmem:[#allocation3 + $0x10] sm:$0xff] %v3798
    %3827 = vst [vmem:[#allocation3 + $0x18] sm:$0xff] %v3799
    %3828 = vst [vmem:[#allocation3 + $0x20] sm:$0xff] %v3800
    %3829 = vst [vmem:[#allocation3 + $0x28] sm:$0xff] %v3801
    %3830 = vst [vmem:[#allocation3 + $0x30] sm:$0xff] %v3802
    %3831 = vst [vmem:[#allocation3 + $0x38] sm:$0xff] %v3803
    %3832 = vst [vmem:[#allocation3 + $0x40] sm:$0xff] %v3804
    %3833 = vst [vmem:[#allocation3 + $0x48] sm:$0xff] %v3805
    %3834 = vst [vmem:[#allocation3 + $0x50] sm:$0xff] %v3806
    %3835 = vst [vmem:[#allocation3 + $0x58] sm:$0xff] %v3807
    %3836 = vst [vmem:[#allocation3 + $0x60] sm:$0xff] %v3808
    %3837 = vst [vmem:[#allocation3 + $0x68] sm:$0xff] %v3809
    %3838 = vst [vmem:[#allocation3 + $0x70] sm:$0xff] %v3810
    %3839 = vst [vmem:[#allocation3 + $0x78] sm:$0xff] %v3811
    %3840 = vst [vmem:[#allocation3 + $0x80] sm:$0xff] %v3812
    %3841 = vst [vmem:[#allocation3 + $0x88] sm:$0xff] %v3813
    %3842 = vst [vmem:[#allocation3 + $0x90] sm:$0xff] %v3814
    %3843 = vst [vmem:[#allocation3 + $0x98] sm:$0xff] %v3815
    %3844 = vst [vmem:[#allocation3 + $0xa0] sm:$0xff] %v3816
    %3845 = vst [vmem:[#allocation3 + $0xa8] sm:$0xff] %v3817
    %3846 = vst [vmem:[#allocation3 + $0xb0] sm:$0xff] %v3818
    %3847 = vst [vmem:[#allocation3 + $0xb8] sm:$0xff] %v3819
    %3848 = vst [vmem:[#allocation3 + $0xc0] sm:$0xff] %v3820
    %3849 = vst [vmem:[#allocation3 + $0xc8] sm:$0xff] %v3821
    %3850 = vst [vmem:[#allocation3 + $0xd0] sm:$0xff] %v3822
    %3851 = vst [vmem:[#allocation3 + $0xd8] sm:$0xf] %v3823
    %v3852 = vld [vmem:[#allocation3] ss:$2 sm:$0xff]
    %s3853 = scalar_lea.vmem [#allocation3], 16
    %v3854 = vld [vmem:[%s3853] ss:$2 sm:$0xff]
    %s3855 = scalar_lea.vmem [#allocation3], 32
    %v3856 = vld [vmem:[%s3855] ss:$2 sm:$0xff]
    %s3857 = scalar_lea.vmem [#allocation3], 48
    %v3858 = vld [vmem:[%s3857] ss:$2 sm:$0xff]
    %s3859 = scalar_lea.vmem [#allocation3], 64
    %v3860 = vld [vmem:[%s3859] ss:$2 sm:$0xff]
    %s3861 = scalar_lea.vmem [#allocation3], 80
    %v3862 = vld [vmem:[%s3861] ss:$2 sm:$0xff]
    %s3863 = scalar_lea.vmem [#allocation3], 96
    %v3864 = vld [vmem:[%s3863] ss:$2 sm:$0xff]
    %s3865 = scalar_lea.vmem [#allocation3], 112
    %v3866 = vld [vmem:[%s3865] ss:$2 sm:$0xff]
    %s3867 = scalar_lea.vmem [#allocation3], 128
    %v3868 = vld [vmem:[%s3867] ss:$2 sm:$0xff]
    %s3869 = scalar_lea.vmem [#allocation3], 144
    %v3870 = vld [vmem:[%s3869] ss:$2 sm:$0xff]
    %s3871 = scalar_lea.vmem [#allocation3], 160
    %v3872 = vld [vmem:[%s3871] ss:$2 sm:$0xff]
    %s3873 = scalar_lea.vmem [#allocation3], 176
    %v3874 = vld [vmem:[%s3873] ss:$2 sm:$0xff]
    %s3875 = scalar_lea.vmem [#allocation3], 192
    %v3876 = vld [vmem:[%s3875] ss:$2 sm:$0xff]
    %s3877 = scalar_lea.vmem [#allocation3], 208
    %v3878 = vld [vmem:[%s3877] ss:$2 sm:$0xff]
    %v3879 = vpack.c.bf16 %v3854, %v3852
    %v3880 = vpack.c.bf16 %v3858, %v3856
    %v3881 = vpack.c.bf16 %v3862, %v3860
    %v3882 = vpack.c.bf16 %v3866, %v3864
    %v3883 = vpack.c.bf16 %v3870, %v3868
    %v3884 = vpack.c.bf16 %v3874, %v3872
    %v3885 = vpack.c.bf16 %v3878, %v3876
    %v3886 = vld [vmem:[#allocation10] sm:$0xf]
    %v3887 = vld [vmem:[#allocation10 + $0x4] sm:$0xf]
    %v3888 = vld [vmem:[#allocation10 + $0x8] sm:$0xf]
    %v3889 = vld [vmem:[#allocation10 + $0xc] sm:$0xf]
    %v3890 = vld [vmem:[#allocation10 + $0x10] sm:$0xf]
    %v3891 = vld [vmem:[#allocation10 + $0x14] sm:$0xf]
    %v3892 = vld [vmem:[#allocation10 + $0x18] sm:$0xf]
    %v3893 = vld [vmem:[#allocation10 + $0x1c] sm:$0xf]
    %v3894 = vld [vmem:[#allocation10 + $0x20] sm:$0xf]
    %v3895 = vld [vmem:[#allocation10 + $0x24] sm:$0xf]
    %v3896 = vld [vmem:[#allocation10 + $0x28] sm:$0xf]
    %v3897 = vld [vmem:[#allocation10 + $0x2c] sm:$0xf]
    %v3898 = vld [vmem:[#allocation10 + $0x30] sm:$0xf]
    %v3899 = vld [vmem:[#allocation10 + $0x34] sm:$0xf]
    %v3900 = vld [vmem:[#allocation10 + $0x38] sm:$0xf]
    %v3901 = vld [vmem:[#allocation10 + $0x3c] sm:$0xf]
    %v3918 = vunpack.c.l.b16 %v3886
    %v3919 = vunpack.c.l.b16 %v3887
    %v3920 = vunpack.c.l.b16 %v3888
    %v3921 = vunpack.c.l.b16 %v3889
    %v3922 = vunpack.c.l.b16 %v3890
    %v3923 = vunpack.c.l.b16 %v3891
    %v3924 = vunpack.c.l.b16 %v3892
    %v3925 = vunpack.c.l.b16 %v3893
    %v3926 = vunpack.c.l.b16 %v3894
    %v3927 = vunpack.c.l.b16 %v3895
    %v3928 = vunpack.c.l.b16 %v3896
    %v3929 = vunpack.c.l.b16 %v3897
    %v3930 = vunpack.c.l.b16 %v3898
    %v3931 = vunpack.c.l.b16 %v3899
    %v3932 = vunpack.c.l.b16 %v3900
    %v3933 = vunpack.c.l.b16 %v3901
    %v3934 = vpack.c.b16 %v3919, %v3918
    %v3935 = vpack.c.b16 %v3921, %v3920
    %v3936 = vpack.c.b16 %v3923, %v3922
    %v3937 = vpack.c.b16 %v3925, %v3924
    %v3938 = vpack.c.b16 %v3927, %v3926
    %v3939 = vpack.c.b16 %v3929, %v3928
    %v3940 = vpack.c.b16 %v3931, %v3930
    %v3941 = vpack.c.b16 %v3933, %v3932
    %3950 = vmatprep.subr.bf16.mxu0 0
    %3951 = vmatpush1.bf16.msra.mxu0 %v3941
    %3952 = vmatprep.subr.bf16.mxu0 0
    %3953 = vmatpush1.bf16.msra.mxu0 %v3940
    %3954 = vmatprep.subr.bf16.mxu0 0
    %3955 = vmatpush1.bf16.msra.mxu0 %v3939
    %3956 = vmatprep.subr.bf16.mxu0 0
    %3957 = vmatpush1.bf16.msra.mxu0 %v3938
    %3958 = vmatprep.subr.bf16.mxu0 0
    %3959 = vmatpush1.bf16.msra.mxu0 %v3937
    %3960 = vmatprep.subr.bf16.mxu0 0
    %3961 = vmatpush1.bf16.msra.mxu0 %v3936
    %3962 = vmatprep.subr.bf16.mxu0 0
    %3963 = vmatpush1.bf16.msra.mxu0 %v3935
    %3964 = vmatprep.subr.bf16.mxu0 0
    %3965 = vmatpush1.bf16.msra.mxu0 %v3934
    %3966 = vmatprep.subr.bf16.mxu0 0
    %3967 = vmatpush2.bf16.msra.mxu0 0
    %3968 = vmatprep.subr.bf16.mxu0 0
    %3969 = vmatpush2.bf16.msra.mxu0 0
    %3970 = vmatprep.subr.bf16.mxu0 0
    %3971 = vmatpush2.bf16.msra.mxu0 0
    %3972 = vmatprep.subr.bf16.mxu0 0
    %3973 = vmatpush2.bf16.msra.mxu0 0
    %3974 = vmatprep.subr.bf16.mxu0 0
    %3975 = vmatpush2.bf16.msra.mxu0 0
    %3976 = vmatprep.subr.bf16.mxu0 0
    %3977 = vmatpush2.bf16.msra.mxu0 0
    %3978 = vmatprep.subr.bf16.mxu0 0
    %3979 = vmatpush2.bf16.msra.mxu0 0
    %3980 = vmatprep.subr.bf16.mxu0 0
    %3981 = vmatpush2.bf16.msra.mxu0 0
    %3982 = vmatprep.mubr.bf16.mxu0 0
    %3983 = vmatmul.mubr.bf16.gmra.mxu0 %v3879
    %v3984 = vpop.f32.mrf.mxu0
    %v3985 = vadd.f32 0.0, %v3984
    %v3986 = vpop.f32.mrf.mxu0
    %v3987 = vpop.f32.mrf.mxu0
    %v3988 = vadd.f32 0.0, %v3987
    %v3989 = vpop.f32.mrf.mxu0
    %3990 = vmatprep.mubr.bf16.mxu0 0
    %3991 = vmatmul.mubr.bf16.gmra.mxu0 %v3880
    %v3992 = vpop.f32.mrf.mxu0
    %v3993 = vadd.f32 0.0, %v3992
    %v3994 = vpop.f32.mrf.mxu0
    %v3995 = vpop.f32.mrf.mxu0
    %v3996 = vadd.f32 0.0, %v3995
    %v3997 = vpop.f32.mrf.mxu0
    %3998 = vmatprep.mubr.bf16.mxu0 0
    %3999 = vmatmul.mubr.bf16.gmra.mxu0 %v3881
    %v4000 = vpop.f32.mrf.mxu0
    %v4001 = vadd.f32 0.0, %v4000
    %v4002 = vpop.f32.mrf.mxu0
    %v4003 = vpop.f32.mrf.mxu0
    %v4004 = vadd.f32 0.0, %v4003
    %v4005 = vpop.f32.mrf.mxu0
    %4006 = vmatprep.mubr.bf16.mxu0 0
    %4007 = vmatmul.mubr.bf16.gmra.mxu0 %v3882
    %v4008 = vpop.f32.mrf.mxu0
    %v4009 = vadd.f32 0.0, %v4008
    %v4010 = vpop.f32.mrf.mxu0
    %v4011 = vpop.f32.mrf.mxu0
    %v4012 = vadd.f32 0.0, %v4011
    %v4013 = vpop.f32.mrf.mxu0
    %4014 = vmatprep.mubr.bf16.mxu0 0
    %4015 = vmatmul.mubr.bf16.gmra.mxu0 %v3883
    %v4016 = vpop.f32.mrf.mxu0
    %v4017 = vadd.f32 0.0, %v4016
    %v4018 = vpop.f32.mrf.mxu0
    %v4019 = vpop.f32.mrf.mxu0
    %v4020 = vadd.f32 0.0, %v4019
    %v4021 = vpop.f32.mrf.mxu0
    %4022 = vmatprep.mubr.bf16.mxu0 0
    %4023 = vmatmul.mubr.bf16.gmra.mxu0 %v3884
    %v4024 = vpop.f32.mrf.mxu0
    %v4025 = vadd.f32 0.0, %v4024
    %v4026 = vpop.f32.mrf.mxu0
    %v4027 = vpop.f32.mrf.mxu0
    %v4028 = vadd.f32 0.0, %v4027
    %v4029 = vpop.f32.mrf.mxu0
    %4030 = vmatprep.mubr.bf16.mxu0 0
    %4031 = vmatmul.mubr.bf16.gmra.mxu0 %v3885
    %v4032 = vpop.f32.mrf.mxu0
    %v4033 = vadd.f32 0.0, %v4032
    %v4034 = vpop.f32.mrf.mxu0
    %v4035 = vpop.f32.mrf.mxu0
    %v4036 = vadd.f32 0.0, %v4035
    %v4037 = vpop.f32.mrf.mxu0
    %4038 = vdwg.mxu0
    %s4039 = scalar_lea.vmem [#allocation10], 64
    %v4040 = vld [vmem:[%s4039] sm:$0xf]
    %v4041 = vld [vmem:[%s4039 + $0x4] sm:$0xf]
    %v4042 = vld [vmem:[%s4039 + $0x8] sm:$0xf]
    %v4043 = vld [vmem:[%s4039 + $0xc] sm:$0xf]
    %v4044 = vld [vmem:[%s4039 + $0x10] sm:$0xf]
    %v4045 = vld [vmem:[%s4039 + $0x14] sm:$0xf]
    %v4046 = vld [vmem:[%s4039 + $0x18] sm:$0xf]
    %v4047 = vld [vmem:[%s4039 + $0x1c] sm:$0xf]
    %v4048 = vld [vmem:[%s4039 + $0x20] sm:$0xf]
    %v4049 = vld [vmem:[%s4039 + $0x24] sm:$0xf]
    %v4050 = vld [vmem:[%s4039 + $0x28] sm:$0xf]
    %v4051 = vld [vmem:[%s4039 + $0x2c] sm:$0xf]
    %v4052 = vld [vmem:[%s4039 + $0x30] sm:$0xf]
    %v4053 = vld [vmem:[%s4039 + $0x34] sm:$0xf]
    %v4054 = vld [vmem:[%s4039 + $0x38] sm:$0xf]
    %v4055 = vld [vmem:[%s4039 + $0x3c] sm:$0xf]
    %v4072 = vunpack.c.l.b16 %v4040
    %v4073 = vunpack.c.l.b16 %v4041
    %v4074 = vunpack.c.l.b16 %v4042
    %v4075 = vunpack.c.l.b16 %v4043
    %v4076 = vunpack.c.l.b16 %v4044
    %v4077 = vunpack.c.l.b16 %v4045
    %v4078 = vunpack.c.l.b16 %v4046
    %v4079 = vunpack.c.l.b16 %v4047
    %v4080 = vunpack.c.l.b16 %v4048
    %v4081 = vunpack.c.l.b16 %v4049
    %v4082 = vunpack.c.l.b16 %v4050
    %v4083 = vunpack.c.l.b16 %v4051
    %v4084 = vunpack.c.l.b16 %v4052
    %v4085 = vunpack.c.l.b16 %v4053
    %v4086 = vunpack.c.l.b16 %v4054
    %v4087 = vunpack.c.l.b16 %v4055
    %v4088 = vpack.c.b16 %v4073, %v4072
    %v4089 = vpack.c.b16 %v4075, %v4074
    %v4090 = vpack.c.b16 %v4077, %v4076
    %v4091 = vpack.c.b16 %v4079, %v4078
    %v4092 = vpack.c.b16 %v4081, %v4080
    %v4093 = vpack.c.b16 %v4083, %v4082
    %v4094 = vpack.c.b16 %v4085, %v4084
    %v4095 = vpack.c.b16 %v4087, %v4086
    %4104 = vmatprep.subr.bf16.mxu0 0
    %4105 = vmatpush1.bf16.msra.mxu0 %v4095
    %4106 = vmatprep.subr.bf16.mxu0 0
    %4107 = vmatpush1.bf16.msra.mxu0 %v4094
    %4108 = vmatprep.subr.bf16.mxu0 0
    %4109 = vmatpush1.bf16.msra.mxu0 %v4093
    %4110 = vmatprep.subr.bf16.mxu0 0
    %4111 = vmatpush1.bf16.msra.mxu0 %v4092
    %4112 = vmatprep.subr.bf16.mxu0 0
    %4113 = vmatpush1.bf16.msra.mxu0 %v4091
    %4114 = vmatprep.subr.bf16.mxu0 0
    %4115 = vmatpush1.bf16.msra.mxu0 %v4090
    %4116 = vmatprep.subr.bf16.mxu0 0
    %4117 = vmatpush1.bf16.msra.mxu0 %v4089
    %4118 = vmatprep.subr.bf16.mxu0 0
    %4119 = vmatpush1.bf16.msra.mxu0 %v4088
    %4120 = vmatprep.subr.bf16.mxu0 0
    %4121 = vmatpush2.bf16.msra.mxu0 0
    %4122 = vmatprep.subr.bf16.mxu0 0
    %4123 = vmatpush2.bf16.msra.mxu0 0
    %4124 = vmatprep.subr.bf16.mxu0 0
    %4125 = vmatpush2.bf16.msra.mxu0 0
    %4126 = vmatprep.subr.bf16.mxu0 0
    %4127 = vmatpush2.bf16.msra.mxu0 0
    %4128 = vmatprep.subr.bf16.mxu0 0
    %4129 = vmatpush2.bf16.msra.mxu0 0
    %4130 = vmatprep.subr.bf16.mxu0 0
    %4131 = vmatpush2.bf16.msra.mxu0 0
    %4132 = vmatprep.subr.bf16.mxu0 0
    %4133 = vmatpush2.bf16.msra.mxu0 0
    %4134 = vmatprep.subr.bf16.mxu0 0
    %4135 = vmatpush2.bf16.msra.mxu0 0
    %4136 = vmatprep.mubr.bf16.mxu0 0
    %4137 = vmatmul.mubr.bf16.gmra.mxu0 %v3879
    %v4138 = vpop.f32.mrf.mxu0
    %v4139 = vadd.f32 0.0, %v4138
    %v4140 = vpop.f32.mrf.mxu0
    %v4141 = vpop.f32.mrf.mxu0
    %v4142 = vadd.f32 0.0, %v4141
    %v4143 = vpop.f32.mrf.mxu0
    %4144 = vmatprep.mubr.bf16.mxu0 0
    %4145 = vmatmul.mubr.bf16.gmra.mxu0 %v3880
    %v4146 = vpop.f32.mrf.mxu0
    %v4147 = vadd.f32 0.0, %v4146
    %v4148 = vpop.f32.mrf.mxu0
    %v4149 = vpop.f32.mrf.mxu0
    %v4150 = vadd.f32 0.0, %v4149
    %v4151 = vpop.f32.mrf.mxu0
    %4152 = vmatprep.mubr.bf16.mxu0 0
    %4153 = vmatmul.mubr.bf16.gmra.mxu0 %v3881
    %v4154 = vpop.f32.mrf.mxu0
    %v4155 = vadd.f32 0.0, %v4154
    %v4156 = vpop.f32.mrf.mxu0
    %v4157 = vpop.f32.mrf.mxu0
    %v4158 = vadd.f32 0.0, %v4157
    %v4159 = vpop.f32.mrf.mxu0
    %4160 = vmatprep.mubr.bf16.mxu0 0
    %4161 = vmatmul.mubr.bf16.gmra.mxu0 %v3882
    %v4162 = vpop.f32.mrf.mxu0
    %v4163 = vadd.f32 0.0, %v4162
    %v4164 = vpop.f32.mrf.mxu0
    %v4165 = vpop.f32.mrf.mxu0
    %v4166 = vadd.f32 0.0, %v4165
    %v4167 = vpop.f32.mrf.mxu0
    %4168 = vmatprep.mubr.bf16.mxu0 0
    %4169 = vmatmul.mubr.bf16.gmra.mxu0 %v3883
    %v4170 = vpop.f32.mrf.mxu0
    %v4171 = vadd.f32 0.0, %v4170
    %v4172 = vpop.f32.mrf.mxu0
    %v4173 = vpop.f32.mrf.mxu0
    %v4174 = vadd.f32 0.0, %v4173
    %v4175 = vpop.f32.mrf.mxu0
    %4176 = vmatprep.mubr.bf16.mxu0 0
    %4177 = vmatmul.mubr.bf16.gmra.mxu0 %v3884
    %v4178 = vpop.f32.mrf.mxu0
    %v4179 = vadd.f32 0.0, %v4178
    %v4180 = vpop.f32.mrf.mxu0
    %v4181 = vpop.f32.mrf.mxu0
    %v4182 = vadd.f32 0.0, %v4181
    %v4183 = vpop.f32.mrf.mxu0
    %4184 = vmatprep.mubr.bf16.mxu0 0
    %4185 = vmatmul.mubr.bf16.gmra.mxu0 %v3885
    %v4186 = vpop.f32.mrf.mxu0
    %v4187 = vadd.f32 0.0, %v4186
    %v4188 = vpop.f32.mrf.mxu0
    %v4189 = vpop.f32.mrf.mxu0
    %v4190 = vadd.f32 0.0, %v4189
    %v4191 = vpop.f32.mrf.mxu0
    %4192 = vdwg.mxu0
    %s4193 = scalar_lea.vmem [#allocation10], 128
    %v4194 = vld [vmem:[%s4193] sm:$0xf]
    %v4195 = vld [vmem:[%s4193 + $0x4] sm:$0xf]
    %v4196 = vld [vmem:[%s4193 + $0x8] sm:$0xf]
    %v4197 = vld [vmem:[%s4193 + $0xc] sm:$0xf]
    %v4198 = vld [vmem:[%s4193 + $0x10] sm:$0xf]
    %v4199 = vld [vmem:[%s4193 + $0x14] sm:$0xf]
    %v4200 = vld [vmem:[%s4193 + $0x18] sm:$0xf]
    %v4201 = vld [vmem:[%s4193 + $0x1c] sm:$0xf]
    %v4202 = vld [vmem:[%s4193 + $0x20] sm:$0xf]
    %v4203 = vld [vmem:[%s4193 + $0x24] sm:$0xf]
    %v4204 = vld [vmem:[%s4193 + $0x28] sm:$0xf]
    %v4205 = vld [vmem:[%s4193 + $0x2c] sm:$0xf]
    %v4206 = vld [vmem:[%s4193 + $0x30] sm:$0xf]
    %v4207 = vld [vmem:[%s4193 + $0x34] sm:$0xf]
    %v4208 = vld [vmem:[%s4193 + $0x38] sm:$0xf]
    %v4209 = vld [vmem:[%s4193 + $0x3c] sm:$0xf]
    %v4226 = vunpack.c.l.b16 %v4194
    %v4227 = vunpack.c.l.b16 %v4195
    %v4228 = vunpack.c.l.b16 %v4196
    %v4229 = vunpack.c.l.b16 %v4197
    %v4230 = vunpack.c.l.b16 %v4198
    %v4231 = vunpack.c.l.b16 %v4199
    %v4232 = vunpack.c.l.b16 %v4200
    %v4233 = vunpack.c.l.b16 %v4201
    %v4234 = vunpack.c.l.b16 %v4202
    %v4235 = vunpack.c.l.b16 %v4203
    %v4236 = vunpack.c.l.b16 %v4204
    %v4237 = vunpack.c.l.b16 %v4205
    %v4238 = vunpack.c.l.b16 %v4206
    %v4239 = vunpack.c.l.b16 %v4207
    %v4240 = vunpack.c.l.b16 %v4208
    %v4241 = vunpack.c.l.b16 %v4209
    %v4242 = vpack.c.b16 %v4227, %v4226
    %v4243 = vpack.c.b16 %v4229, %v4228
    %v4244 = vpack.c.b16 %v4231, %v4230
    %v4245 = vpack.c.b16 %v4233, %v4232
    %v4246 = vpack.c.b16 %v4235, %v4234
    %v4247 = vpack.c.b16 %v4237, %v4236
    %v4248 = vpack.c.b16 %v4239, %v4238
    %v4249 = vpack.c.b16 %v4241, %v4240
    %4258 = vmatprep.subr.bf16.mxu0 0
    %4259 = vmatpush1.bf16.msra.mxu0 %v4249
    %4260 = vmatprep.subr.bf16.mxu0 0
    %4261 = vmatpush1.bf16.msra.mxu0 %v4248
    %4262 = vmatprep.subr.bf16.mxu0 0
    %4263 = vmatpush1.bf16.msra.mxu0 %v4247
    %4264 = vmatprep.subr.bf16.mxu0 0
    %4265 = vmatpush1.bf16.msra.mxu0 %v4246
    %4266 = vmatprep.subr.bf16.mxu0 0
    %4267 = vmatpush1.bf16.msra.mxu0 %v4245
    %4268 = vmatprep.subr.bf16.mxu0 0
    %4269 = vmatpush1.bf16.msra.mxu0 %v4244
    %4270 = vmatprep.subr.bf16.mxu0 0
    %4271 = vmatpush1.bf16.msra.mxu0 %v4243
    %4272 = vmatprep.subr.bf16.mxu0 0
    %4273 = vmatpush1.bf16.msra.mxu0 %v4242
    %4274 = vmatprep.subr.bf16.mxu0 0
    %4275 = vmatpush2.bf16.msra.mxu0 0
    %4276 = vmatprep.subr.bf16.mxu0 0
    %4277 = vmatpush2.bf16.msra.mxu0 0
    %4278 = vmatprep.subr.bf16.mxu0 0
    %4279 = vmatpush2.bf16.msra.mxu0 0
    %4280 = vmatprep.subr.bf16.mxu0 0
    %4281 = vmatpush2.bf16.msra.mxu0 0
    %4282 = vmatprep.subr.bf16.mxu0 0
    %4283 = vmatpush2.bf16.msra.mxu0 0
    %4284 = vmatprep.subr.bf16.mxu0 0
    %4285 = vmatpush2.bf16.msra.mxu0 0
    %4286 = vmatprep.subr.bf16.mxu0 0
    %4287 = vmatpush2.bf16.msra.mxu0 0
    %4288 = vmatprep.subr.bf16.mxu0 0
    %4289 = vmatpush2.bf16.msra.mxu0 0
    %4290 = vmatprep.mubr.bf16.mxu0 0
    %4291 = vmatmul.mubr.bf16.gmra.mxu0 %v3879
    %v4292 = vpop.f32.mrf.mxu0
    %v4293 = vadd.f32 0.0, %v4292
    %v4294 = vpop.f32.mrf.mxu0
    %v4295 = vpop.f32.mrf.mxu0
    %v4296 = vadd.f32 0.0, %v4295
    %v4297 = vpop.f32.mrf.mxu0
    %4298 = vmatprep.mubr.bf16.mxu0 0
    %4299 = vmatmul.mubr.bf16.gmra.mxu0 %v3880
    %v4300 = vpop.f32.mrf.mxu0
    %v4301 = vadd.f32 0.0, %v4300
    %v4302 = vpop.f32.mrf.mxu0
    %v4303 = vpop.f32.mrf.mxu0
    %v4304 = vadd.f32 0.0, %v4303
    %v4305 = vpop.f32.mrf.mxu0
    %4306 = vmatprep.mubr.bf16.mxu0 0
    %4307 = vmatmul.mubr.bf16.gmra.mxu0 %v3881
    %v4308 = vpop.f32.mrf.mxu0
    %v4309 = vadd.f32 0.0, %v4308
    %v4310 = vpop.f32.mrf.mxu0
    %v4311 = vpop.f32.mrf.mxu0
    %v4312 = vadd.f32 0.0, %v4311
    %v4313 = vpop.f32.mrf.mxu0
    %4314 = vmatprep.mubr.bf16.mxu0 0
    %4315 = vmatmul.mubr.bf16.gmra.mxu0 %v3882
    %v4316 = vpop.f32.mrf.mxu0
    %v4317 = vadd.f32 0.0, %v4316
    %v4318 = vpop.f32.mrf.mxu0
    %v4319 = vpop.f32.mrf.mxu0
    %v4320 = vadd.f32 0.0, %v4319
    %v4321 = vpop.f32.mrf.mxu0
    %4322 = vmatprep.mubr.bf16.mxu0 0
    %4323 = vmatmul.mubr.bf16.gmra.mxu0 %v3883
    %v4324 = vpop.f32.mrf.mxu0
    %v4325 = vadd.f32 0.0, %v4324
    %v4326 = vpop.f32.mrf.mxu0
    %v4327 = vpop.f32.mrf.mxu0
    %v4328 = vadd.f32 0.0, %v4327
    %v4329 = vpop.f32.mrf.mxu0
    %4330 = vmatprep.mubr.bf16.mxu0 0
    %4331 = vmatmul.mubr.bf16.gmra.mxu0 %v3884
    %v4332 = vpop.f32.mrf.mxu0
    %v4333 = vadd.f32 0.0, %v4332
    %v4334 = vpop.f32.mrf.mxu0
    %v4335 = vpop.f32.mrf.mxu0
    %v4336 = vadd.f32 0.0, %v4335
    %v4337 = vpop.f32.mrf.mxu0
    %4338 = vmatprep.mubr.bf16.mxu0 0
    %4339 = vmatmul.mubr.bf16.gmra.mxu0 %v3885
    %v4340 = vpop.f32.mrf.mxu0
    %v4341 = vadd.f32 0.0, %v4340
    %v4342 = vpop.f32.mrf.mxu0
    %v4343 = vpop.f32.mrf.mxu0
    %v4344 = vadd.f32 0.0, %v4343
    %v4345 = vpop.f32.mrf.mxu0
    %4346 = vdwg.mxu0
    %v4361 = vrot.slane %v4139, 1
    %v4362 = vrot.slane %v4142, 1
    %v4363 = vsel %vm1354, %v4361, %v4362
    %v4364 = vrot.slane %v4147, 1
    %v4365 = vsel %vm1354, %v4362, %v4364
    %v4366 = vrot.slane %v4150, 1
    %v4367 = vsel %vm1354, %v4364, %v4366
    %v4368 = vrot.slane %v4155, 1
    %v4369 = vsel %vm1354, %v4366, %v4368
    %v4370 = vrot.slane %v4158, 1
    %v4371 = vsel %vm1354, %v4368, %v4370
    %v4372 = vrot.slane %v4163, 1
    %v4373 = vsel %vm1354, %v4370, %v4372
    %v4374 = vrot.slane %v4166, 1
    %v4375 = vsel %vm1354, %v4372, %v4374
    %v4376 = vrot.slane %v4171, 1
    %v4377 = vsel %vm1354, %v4374, %v4376
    %v4378 = vrot.slane %v4174, 1
    %v4379 = vsel %vm1354, %v4376, %v4378
    %v4380 = vrot.slane %v4179, 1
    %v4381 = vsel %vm1354, %v4378, %v4380
    %v4382 = vrot.slane %v4182, 1
    %v4383 = vsel %vm1354, %v4380, %v4382
    %v4384 = vrot.slane %v4187, 1
    %v4385 = vsel %vm1354, %v4382, %v4384
    %v4386 = vrot.slane %v4190, 1
    %v4387 = vsel %vm1354, %v4384, %v4386
    %v4402 = vadd.f32 %v3985, %v4363
    %v4403 = vadd.f32 %v3988, %v4365
    %v4404 = vadd.f32 %v3993, %v4367
    %v4405 = vadd.f32 %v3996, %v4369
    %v4406 = vadd.f32 %v4001, %v4371
    %v4407 = vadd.f32 %v4004, %v4373
    %v4408 = vadd.f32 %v4009, %v4375
    %v4409 = vadd.f32 %v4012, %v4377
    %v4410 = vadd.f32 %v4017, %v4379
    %v4411 = vadd.f32 %v4020, %v4381
    %v4412 = vadd.f32 %v4025, %v4383
    %v4413 = vadd.f32 %v4028, %v4385
    %v4414 = vadd.f32 %v4033, %v4387
    %v4415 = vadd.f32 %v4036, %v4386
    %v4430 = vrot.slane %v4293, 2
    %v4431 = vrot.slane %v4296, 2
    %v4432 = vsel %vm1634, %v4430, %v4431
    %v4433 = vrot.slane %v4301, 2
    %v4434 = vsel %vm1634, %v4431, %v4433
    %v4435 = vrot.slane %v4304, 2
    %v4436 = vsel %vm1634, %v4433, %v4435
    %v4437 = vrot.slane %v4309, 2
    %v4438 = vsel %vm1634, %v4435, %v4437
    %v4439 = vrot.slane %v4312, 2
    %v4440 = vsel %vm1634, %v4437, %v4439
    %v4441 = vrot.slane %v4317, 2
    %v4442 = vsel %vm1634, %v4439, %v4441
    %v4443 = vrot.slane %v4320, 2
    %v4444 = vsel %vm1634, %v4441, %v4443
    %v4445 = vrot.slane %v4325, 2
    %v4446 = vsel %vm1634, %v4443, %v4445
    %v4447 = vrot.slane %v4328, 2
    %v4448 = vsel %vm1634, %v4445, %v4447
    %v4449 = vrot.slane %v4333, 2
    %v4450 = vsel %vm1634, %v4447, %v4449
    %v4451 = vrot.slane %v4336, 2
    %v4452 = vsel %vm1634, %v4449, %v4451
    %v4453 = vrot.slane %v4341, 2
    %v4454 = vsel %vm1634, %v4451, %v4453
    %v4455 = vrot.slane %v4344, 2
    %v4456 = vsel %vm1634, %v4453, %v4455
    %v4471 = vadd.f32 %v4402, %v4432
    %v4472 = vadd.f32 %v4403, %v4434
    %v4473 = vadd.f32 %v4404, %v4436
    %v4474 = vadd.f32 %v4405, %v4438
    %v4475 = vadd.f32 %v4406, %v4440
    %v4476 = vadd.f32 %v4407, %v4442
    %v4477 = vadd.f32 %v4408, %v4444
    %v4478 = vadd.f32 %v4409, %v4446
    %v4479 = vadd.f32 %v4410, %v4448
    %v4480 = vadd.f32 %v4411, %v4450
    %v4481 = vadd.f32 %v4412, %v4452
    %v4482 = vadd.f32 %v4413, %v4454
    %v4483 = vadd.f32 %v4414, %v4456
    %v4484 = vadd.f32 %v4415, %v4455
    %v4485 = vld [vmem:[%s6] sm:$0x1]
    %v4487 = vlaneseq
    %v4488 = vshrl.u32 %v4487, 7
    %v4489 = vsub.s32 0, %v4488
    %v4490 = vrot.slane %v4485, %v4489
    %v4492 = vadd.f32 %v4471, %v4490
    %v4493 = vadd.f32 %v4472, %v4490
    %v4494 = vadd.f32 %v4473, %v4490
    %v4495 = vadd.f32 %v4474, %v4490
    %v4496 = vadd.f32 %v4475, %v4490
    %v4497 = vadd.f32 %v4476, %v4490
    %v4498 = vadd.f32 %v4477, %v4490
    %v4499 = vadd.f32 %v4478, %v4490
    %v4500 = vadd.f32 %v4479, %v4490
    %v4501 = vadd.f32 %v4480, %v4490
    %v4502 = vadd.f32 %v4481, %v4490
    %v4503 = vadd.f32 %v4482, %v4490
    %v4504 = vadd.f32 %v4483, %v4490
    %v4505 = vadd.f32 %v4484, %v4490
    %v4506 = vmax.f32 %v4492, 0.0
    %v4507 = vmax.f32 %v4493, 0.0
    %v4508 = vmax.f32 %v4494, 0.0
    %v4509 = vmax.f32 %v4495, 0.0
    %v4510 = vmax.f32 %v4496, 0.0
    %v4511 = vmax.f32 %v4497, 0.0
    %v4512 = vmax.f32 %v4498, 0.0
    %v4513 = vmax.f32 %v4499, 0.0
    %v4514 = vmax.f32 %v4500, 0.0
    %v4515 = vmax.f32 %v4501, 0.0
    %v4516 = vmax.f32 %v4502, 0.0
    %v4517 = vmax.f32 %v4503, 0.0
    %v4518 = vmax.f32 %v4504, 0.0
    %v4519 = vmax.f32 %v4505, 0.0
    %v4534 = vrot.slane %v4506, 1
    %v4535 = vrot.slane %v4507, 1
    %v4536 = vsel %vm1354, %v4534, %v4535
    %v4537 = vrot.slane %v4508, 1
    %v4538 = vsel %vm1354, %v4535, %v4537
    %v4539 = vrot.slane %v4509, 1
    %v4540 = vsel %vm1354, %v4537, %v4539
    %v4541 = vrot.slane %v4510, 1
    %v4542 = vsel %vm1354, %v4539, %v4541
    %v4543 = vrot.slane %v4511, 1
    %v4544 = vsel %vm1354, %v4541, %v4543
    %v4545 = vrot.slane %v4512, 1
    %v4546 = vsel %vm1354, %v4543, %v4545
    %v4547 = vrot.slane %v4513, 1
    %v4548 = vsel %vm1354, %v4545, %v4547
    %v4549 = vrot.slane %v4514, 1
    %v4550 = vsel %vm1354, %v4547, %v4549
    %v4551 = vrot.slane %v4515, 1
    %v4552 = vsel %vm1354, %v4549, %v4551
    %v4553 = vrot.slane %v4516, 1
    %v4554 = vsel %vm1354, %v4551, %v4553
    %v4555 = vrot.slane %v4517, 1
    %v4556 = vsel %vm1354, %v4553, %v4555
    %v4557 = vrot.slane %v4518, 1
    %v4558 = vsel %vm1354, %v4555, %v4557
    %v4559 = vrot.slane %v4519, 1
    %v4560 = vsel %vm1354, %v4557, %v4559
    %v4575 = vmax.f32 %v4506, %v4536
    %v4576 = vmax.f32 %v4507, %v4538
    %v4577 = vmax.f32 %v4508, %v4540
    %v4578 = vmax.f32 %v4509, %v4542
    %v4579 = vmax.f32 %v4510, %v4544
    %v4580 = vmax.f32 %v4511, %v4546
    %v4581 = vmax.f32 %v4512, %v4548
    %v4582 = vmax.f32 %v4513, %v4550
    %v4583 = vmax.f32 %v4514, %v4552
    %v4584 = vmax.f32 %v4515, %v4554
    %v4585 = vmax.f32 %v4516, %v4556
    %v4586 = vmax.f32 %v4517, %v4558
    %v4587 = vmax.f32 %v4518, %v4560
    %v4588 = vmax.f32 %v4519, %v4559
    %v4589 = vrot.slane %v4506, 2
    %v4590 = vrot.slane %v4507, 2
    %v4591 = vsel %vm1634, %v4589, %v4590
    %v4592 = vrot.slane %v4508, 2
    %v4593 = vsel %vm1634, %v4590, %v4592
    %v4594 = vrot.slane %v4509, 2
    %v4595 = vsel %vm1634, %v4592, %v4594
    %v4596 = vrot.slane %v4510, 2
    %v4597 = vsel %vm1634, %v4594, %v4596
    %v4598 = vrot.slane %v4511, 2
    %v4599 = vsel %vm1634, %v4596, %v4598
    %v4600 = vrot.slane %v4512, 2
    %v4601 = vsel %vm1634, %v4598, %v4600
    %v4602 = vrot.slane %v4513, 2
    %v4603 = vsel %vm1634, %v4600, %v4602
    %v4604 = vrot.slane %v4514, 2
    %v4605 = vsel %vm1634, %v4602, %v4604
    %v4606 = vrot.slane %v4515, 2
    %v4607 = vsel %vm1634, %v4604, %v4606
    %v4608 = vrot.slane %v4516, 2
    %v4609 = vsel %vm1634, %v4606, %v4608
    %v4610 = vrot.slane %v4517, 2
    %v4611 = vsel %vm1634, %v4608, %v4610
    %v4612 = vrot.slane %v4518, 2
    %v4613 = vsel %vm1634, %v4610, %v4612
    %v4614 = vrot.slane %v4519, 2
    %v4615 = vsel %vm1634, %v4612, %v4614
    %v4630 = vmax.f32 %v4575, %v4591
    %v4631 = vmax.f32 %v4576, %v4593
    %v4632 = vmax.f32 %v4577, %v4595
    %v4633 = vmax.f32 %v4578, %v4597
    %v4634 = vmax.f32 %v4579, %v4599
    %v4635 = vmax.f32 %v4580, %v4601
    %v4636 = vmax.f32 %v4581, %v4603
    %v4637 = vmax.f32 %v4582, %v4605
    %v4638 = vmax.f32 %v4583, %v4607
    %v4639 = vmax.f32 %v4584, %v4609
    %v4640 = vmax.f32 %v4585, %v4611
    %v4641 = vmax.f32 %v4586, %v4613
    %v4642 = vmax.f32 %v4587, %v4615
    %v4643 = vmax.f32 %v4588, %v4614
    %4644 = vst [vmem:[#allocation2] sm:$0xff] %v4630
    %4645 = vst [vmem:[#allocation2 + $0x8] sm:$0xff] %v4631
    %4646 = vst [vmem:[#allocation2 + $0x10] sm:$0xff] %v4632
    %4647 = vst [vmem:[#allocation2 + $0x18] sm:$0xff] %v4633
    %4648 = vst [vmem:[#allocation2 + $0x20] sm:$0xff] %v4634
    %4649 = vst [vmem:[#allocation2 + $0x28] sm:$0xff] %v4635
    %4650 = vst [vmem:[#allocation2 + $0x30] sm:$0xff] %v4636
    %4651 = vst [vmem:[#allocation2 + $0x38] sm:$0xff] %v4637
    %4652 = vst [vmem:[#allocation2 + $0x40] sm:$0xff] %v4638
    %4653 = vst [vmem:[#allocation2 + $0x48] sm:$0xff] %v4639
    %4654 = vst [vmem:[#allocation2 + $0x50] sm:$0xff] %v4640
    %4655 = vst [vmem:[#allocation2 + $0x58] sm:$0xff] %v4641
    %4656 = vst [vmem:[#allocation2 + $0x60] sm:$0xff] %v4642
    %4657 = vst [vmem:[#allocation2 + $0x68] sm:$0xf] %v4643
    %v4658 = vld [vmem:[#allocation2] ss:$14 sm:$0xff]
    %v4659 = vpack.c.bf16 %v4658, %v4658
    %v4660 = vld [vmem:[#allocation12] sm:$0xf]
    %v4661 = vld [vmem:[#allocation12 + $0x4] sm:$0xf]
    %v4662 = vld [vmem:[#allocation12 + $0x8] sm:$0xf]
    %v4663 = vld [vmem:[#allocation12 + $0xc] sm:$0xf]
    %v4664 = vld [vmem:[#allocation12 + $0x10] sm:$0xf]
    %v4665 = vld [vmem:[#allocation12 + $0x14] sm:$0xf]
    %v4666 = vld [vmem:[#allocation12 + $0x18] sm:$0xf]
    %v4667 = vld [vmem:[#allocation12 + $0x1c] sm:$0xf]
    %v4668 = vld [vmem:[#allocation12 + $0x20] sm:$0xf]
    %v4669 = vld [vmem:[#allocation12 + $0x24] sm:$0xf]
    %v4670 = vld [vmem:[#allocation12 + $0x28] sm:$0xf]
    %v4671 = vld [vmem:[#allocation12 + $0x2c] sm:$0xf]
    %v4672 = vld [vmem:[#allocation12 + $0x30] sm:$0xf]
    %v4673 = vld [vmem:[#allocation12 + $0x34] sm:$0xf]
    %v4674 = vld [vmem:[#allocation12 + $0x38] sm:$0xf]
    %v4675 = vld [vmem:[#allocation12 + $0x3c] sm:$0xf]
    %s4676 = scalar_lea.vmem [#allocation2], 2
    %v4677 = vld [vmem:[%s4676] ss:$14 sm:$0xff]
    %v4678 = vpack.c.bf16 %v4677, %v4677
    %s4679 = scalar_lea.vmem [#allocation12], 64
    %v4680 = vld [vmem:[%s4679] sm:$0xf]
    %v4681 = vld [vmem:[%s4679 + $0x4] sm:$0xf]
    %v4682 = vld [vmem:[%s4679 + $0x8] sm:$0xf]
    %v4683 = vld [vmem:[%s4679 + $0xc] sm:$0xf]
    %v4684 = vld [vmem:[%s4679 + $0x10] sm:$0xf]
    %v4685 = vld [vmem:[%s4679 + $0x14] sm:$0xf]
    %v4686 = vld [vmem:[%s4679 + $0x18] sm:$0xf]
    %v4687 = vld [vmem:[%s4679 + $0x1c] sm:$0xf]
    %v4688 = vld [vmem:[%s4679 + $0x20] sm:$0xf]
    %v4689 = vld [vmem:[%s4679 + $0x24] sm:$0xf]
    %v4690 = vld [vmem:[%s4679 + $0x28] sm:$0xf]
    %v4691 = vld [vmem:[%s4679 + $0x2c] sm:$0xf]
    %v4692 = vld [vmem:[%s4679 + $0x30] sm:$0xf]
    %v4693 = vld [vmem:[%s4679 + $0x34] sm:$0xf]
    %v4694 = vld [vmem:[%s4679 + $0x38] sm:$0xf]
    %v4695 = vld [vmem:[%s4679 + $0x3c] sm:$0xf]
    %v4712 = vunpack.c.l.b16 %v4680
    %v4713 = vunpack.c.l.b16 %v4681
    %v4714 = vunpack.c.l.b16 %v4682
    %v4715 = vunpack.c.l.b16 %v4683
    %v4716 = vunpack.c.l.b16 %v4684
    %v4717 = vunpack.c.l.b16 %v4685
    %v4718 = vunpack.c.l.b16 %v4686
    %v4719 = vunpack.c.l.b16 %v4687
    %v4720 = vunpack.c.l.b16 %v4688
    %v4721 = vunpack.c.l.b16 %v4689
    %v4722 = vunpack.c.l.b16 %v4690
    %v4723 = vunpack.c.l.b16 %v4691
    %v4724 = vunpack.c.l.b16 %v4692
    %v4725 = vunpack.c.l.b16 %v4693
    %v4726 = vunpack.c.l.b16 %v4694
    %v4727 = vunpack.c.l.b16 %v4695
    %v4728 = vpack.c.b16 %v4713, %v4712
    %v4729 = vpack.c.b16 %v4715, %v4714
    %v4730 = vpack.c.b16 %v4717, %v4716
    %v4731 = vpack.c.b16 %v4719, %v4718
    %v4732 = vpack.c.b16 %v4721, %v4720
    %v4733 = vpack.c.b16 %v4723, %v4722
    %v4734 = vpack.c.b16 %v4725, %v4724
    %v4735 = vpack.c.b16 %v4727, %v4726
    %4744 = vmatprep.subr.bf16.mxu0 0
    %4745 = vmatpush1.bf16.msra.mxu0 %v4735
    %4746 = vmatprep.subr.bf16.mxu0 0
    %4747 = vmatpush1.bf16.msra.mxu0 %v4734
    %4748 = vmatprep.subr.bf16.mxu0 0
    %4749 = vmatpush1.bf16.msra.mxu0 %v4733
    %4750 = vmatprep.subr.bf16.mxu0 0
    %4751 = vmatpush1.bf16.msra.mxu0 %v4732
    %4752 = vmatprep.subr.bf16.mxu0 0
    %4753 = vmatpush1.bf16.msra.mxu0 %v4731
    %4754 = vmatprep.subr.bf16.mxu0 0
    %4755 = vmatpush1.bf16.msra.mxu0 %v4730
    %4756 = vmatprep.subr.bf16.mxu0 0
    %4757 = vmatpush1.bf16.msra.mxu0 %v4729
    %4758 = vmatprep.subr.bf16.mxu0 0
    %4759 = vmatpush1.bf16.msra.mxu0 %v4728
    %4760 = vmatprep.subr.bf16.mxu0 0
    %4761 = vmatpush2.bf16.msra.mxu0 0
    %4762 = vmatprep.subr.bf16.mxu0 0
    %4763 = vmatpush2.bf16.msra.mxu0 0
    %4764 = vmatprep.subr.bf16.mxu0 0
    %4765 = vmatpush2.bf16.msra.mxu0 0
    %4766 = vmatprep.subr.bf16.mxu0 0
    %4767 = vmatpush2.bf16.msra.mxu0 0
    %4768 = vmatprep.subr.bf16.mxu0 0
    %4769 = vmatpush2.bf16.msra.mxu0 0
    %4770 = vmatprep.subr.bf16.mxu0 0
    %4771 = vmatpush2.bf16.msra.mxu0 0
    %4772 = vmatprep.subr.bf16.mxu0 0
    %4773 = vmatpush2.bf16.msra.mxu0 0
    %4774 = vmatprep.subr.bf16.mxu0 0
    %4775 = vmatpush2.bf16.msra.mxu0 0
    %4776 = vmatprep.mubr.bf16.mxu0 0
    %4777 = vmatmul.mubr.bf16.gmra.mxu0 %v4678
    %v4778 = vpop.f32.mrf.mxu0
    %v4779 = vadd.f32 0.0, %v4778
    %v4780 = vpop.f32.mrf.mxu0
    %v4781 = vpop.f32.mrf.mxu0
    %v4782 = vpop.f32.mrf.mxu0
    %4783 = vdwg.mxu0
    %v4800 = vunpack.c.l.b16 %v4660
    %v4801 = vunpack.c.l.b16 %v4661
    %v4802 = vunpack.c.l.b16 %v4662
    %v4803 = vunpack.c.l.b16 %v4663
    %v4804 = vunpack.c.l.b16 %v4664
    %v4805 = vunpack.c.l.b16 %v4665
    %v4806 = vunpack.c.l.b16 %v4666
    %v4807 = vunpack.c.l.b16 %v4667
    %v4808 = vunpack.c.l.b16 %v4668
    %v4809 = vunpack.c.l.b16 %v4669
    %v4810 = vunpack.c.l.b16 %v4670
    %v4811 = vunpack.c.l.b16 %v4671
    %v4812 = vunpack.c.l.b16 %v4672
    %v4813 = vunpack.c.l.b16 %v4673
    %v4814 = vunpack.c.l.b16 %v4674
    %v4815 = vunpack.c.l.b16 %v4675
    %v4816 = vpack.c.b16 %v4801, %v4800
    %v4817 = vpack.c.b16 %v4803, %v4802
    %v4818 = vpack.c.b16 %v4805, %v4804
    %v4819 = vpack.c.b16 %v4807, %v4806
    %v4820 = vpack.c.b16 %v4809, %v4808
    %v4821 = vpack.c.b16 %v4811, %v4810
    %v4822 = vpack.c.b16 %v4813, %v4812
    %v4823 = vpack.c.b16 %v4815, %v4814
    %4832 = vmatprep.subr.bf16.mxu0 0
    %4833 = vmatpush1.bf16.msra.mxu0 %v4823
    %4834 = vmatprep.subr.bf16.mxu0 0
    %4835 = vmatpush1.bf16.msra.mxu0 %v4822
    %4836 = vmatprep.subr.bf16.mxu0 0
    %4837 = vmatpush1.bf16.msra.mxu0 %v4821
    %4838 = vmatprep.subr.bf16.mxu0 0
    %4839 = vmatpush1.bf16.msra.mxu0 %v4820
    %4840 = vmatprep.subr.bf16.mxu0 0
    %4841 = vmatpush1.bf16.msra.mxu0 %v4819
    %4842 = vmatprep.subr.bf16.mxu0 0
    %4843 = vmatpush1.bf16.msra.mxu0 %v4818
    %4844 = vmatprep.subr.bf16.mxu0 0
    %4845 = vmatpush1.bf16.msra.mxu0 %v4817
    %4846 = vmatprep.subr.bf16.mxu0 0
    %4847 = vmatpush1.bf16.msra.mxu0 %v4816
    %4848 = vmatprep.subr.bf16.mxu0 0
    %4849 = vmatpush2.bf16.msra.mxu0 0
    %4850 = vmatprep.subr.bf16.mxu0 0
    %4851 = vmatpush2.bf16.msra.mxu0 0
    %4852 = vmatprep.subr.bf16.mxu0 0
    %4853 = vmatpush2.bf16.msra.mxu0 0
    %4854 = vmatprep.subr.bf16.mxu0 0
    %4855 = vmatpush2.bf16.msra.mxu0 0
    %4856 = vmatprep.subr.bf16.mxu0 0
    %4857 = vmatpush2.bf16.msra.mxu0 0
    %4858 = vmatprep.subr.bf16.mxu0 0
    %4859 = vmatpush2.bf16.msra.mxu0 0
    %4860 = vmatprep.subr.bf16.mxu0 0
    %4861 = vmatpush2.bf16.msra.mxu0 0
    %4862 = vmatprep.subr.bf16.mxu0 0
    %4863 = vmatpush2.bf16.msra.mxu0 0
    %4864 = vmatprep.mubr.bf16.mxu0 0
    %4865 = vmatmul.mubr.bf16.gmra.mxu0 %v4659
    %v4866 = vpop.f32.mrf.mxu0
    %v4867 = vadd.f32 %v4779, %v4866
    %v4868 = vpop.f32.mrf.mxu0
    %v4869 = vpop.f32.mrf.mxu0
    %v4870 = vpop.f32.mrf.mxu0
    %4871 = vdwg.mxu0
    %s4872 = scalar_lea.vmem [#allocation2], 4
    %v4873 = vld [vmem:[%s4872] ss:$14 sm:$0xff]
    %v4874 = vpack.c.bf16 %v4873, %v4873
    %s4875 = scalar_lea.vmem [#allocation12], 128
    %v4876 = vld [vmem:[%s4875] sm:$0xf]
    %v4877 = vld [vmem:[%s4875 + $0x4] sm:$0xf]
    %v4878 = vld [vmem:[%s4875 + $0x8] sm:$0xf]
    %v4879 = vld [vmem:[%s4875 + $0xc] sm:$0xf]
    %v4880 = vld [vmem:[%s4875 + $0x10] sm:$0xf]
    %v4881 = vld [vmem:[%s4875 + $0x14] sm:$0xf]
    %v4882 = vld [vmem:[%s4875 + $0x18] sm:$0xf]
    %v4883 = vld [vmem:[%s4875 + $0x1c] sm:$0xf]
    %v4884 = vld [vmem:[%s4875 + $0x20] sm:$0xf]
    %v4885 = vld [vmem:[%s4875 + $0x24] sm:$0xf]
    %v4886 = vld [vmem:[%s4875 + $0x28] sm:$0xf]
    %v4887 = vld [vmem:[%s4875 + $0x2c] sm:$0xf]
    %v4888 = vld [vmem:[%s4875 + $0x30] sm:$0xf]
    %v4889 = vld [vmem:[%s4875 + $0x34] sm:$0xf]
    %v4890 = vld [vmem:[%s4875 + $0x38] sm:$0xf]
    %v4891 = vld [vmem:[%s4875 + $0x3c] sm:$0xf]
    %v4908 = vunpack.c.l.b16 %v4876
    %v4909 = vunpack.c.l.b16 %v4877
    %v4910 = vunpack.c.l.b16 %v4878
    %v4911 = vunpack.c.l.b16 %v4879
    %v4912 = vunpack.c.l.b16 %v4880
    %v4913 = vunpack.c.l.b16 %v4881
    %v4914 = vunpack.c.l.b16 %v4882
    %v4915 = vunpack.c.l.b16 %v4883
    %v4916 = vunpack.c.l.b16 %v4884
    %v4917 = vunpack.c.l.b16 %v4885
    %v4918 = vunpack.c.l.b16 %v4886
    %v4919 = vunpack.c.l.b16 %v4887
    %v4920 = vunpack.c.l.b16 %v4888
    %v4921 = vunpack.c.l.b16 %v4889
    %v4922 = vunpack.c.l.b16 %v4890
    %v4923 = vunpack.c.l.b16 %v4891
    %v4924 = vpack.c.b16 %v4909, %v4908
    %v4925 = vpack.c.b16 %v4911, %v4910
    %v4926 = vpack.c.b16 %v4913, %v4912
    %v4927 = vpack.c.b16 %v4915, %v4914
    %v4928 = vpack.c.b16 %v4917, %v4916
    %v4929 = vpack.c.b16 %v4919, %v4918
    %v4930 = vpack.c.b16 %v4921, %v4920
    %v4931 = vpack.c.b16 %v4923, %v4922
    %4940 = vmatprep.subr.bf16.mxu0 0
    %4941 = vmatpush1.bf16.msra.mxu0 %v4931
    %4942 = vmatprep.subr.bf16.mxu0 0
    %4943 = vmatpush1.bf16.msra.mxu0 %v4930
    %4944 = vmatprep.subr.bf16.mxu0 0
    %4945 = vmatpush1.bf16.msra.mxu0 %v4929
    %4946 = vmatprep.subr.bf16.mxu0 0
    %4947 = vmatpush1.bf16.msra.mxu0 %v4928
    %4948 = vmatprep.subr.bf16.mxu0 0
    %4949 = vmatpush1.bf16.msra.mxu0 %v4927
    %4950 = vmatprep.subr.bf16.mxu0 0
    %4951 = vmatpush1.bf16.msra.mxu0 %v4926
    %4952 = vmatprep.subr.bf16.mxu0 0
    %4953 = vmatpush1.bf16.msra.mxu0 %v4925
    %4954 = vmatprep.subr.bf16.mxu0 0
    %4955 = vmatpush1.bf16.msra.mxu0 %v4924
    %4956 = vmatprep.subr.bf16.mxu0 0
    %4957 = vmatpush2.bf16.msra.mxu0 0
    %4958 = vmatprep.subr.bf16.mxu0 0
    %4959 = vmatpush2.bf16.msra.mxu0 0
    %4960 = vmatprep.subr.bf16.mxu0 0
    %4961 = vmatpush2.bf16.msra.mxu0 0
    %4962 = vmatprep.subr.bf16.mxu0 0
    %4963 = vmatpush2.bf16.msra.mxu0 0
    %4964 = vmatprep.subr.bf16.mxu0 0
    %4965 = vmatpush2.bf16.msra.mxu0 0
    %4966 = vmatprep.subr.bf16.mxu0 0
    %4967 = vmatpush2.bf16.msra.mxu0 0
    %4968 = vmatprep.subr.bf16.mxu0 0
    %4969 = vmatpush2.bf16.msra.mxu0 0
    %4970 = vmatprep.subr.bf16.mxu0 0
    %4971 = vmatpush2.bf16.msra.mxu0 0
    %4972 = vmatprep.mubr.bf16.mxu0 0
    %4973 = vmatmul.mubr.bf16.gmra.mxu0 %v4874
    %v4974 = vpop.f32.mrf.mxu0
    %v4975 = vadd.f32 0.0, %v4974
    %v4976 = vpop.f32.mrf.mxu0
    %v4977 = vpop.f32.mrf.mxu0
    %v4978 = vpop.f32.mrf.mxu0
    %4979 = vdwg.mxu0
    %v4980 = vadd.f32 %v4867, %v4975
    %v4981 = vld [vmem:[%s8] sm:$0x1]
    %v4983 = vlaneseq
    %v4984 = vshrl.u32 %v4983, 7
    %v4985 = vsub.s32 0, %v4984
    %v4986 = vrot.slane %v4981, %v4985
    %v4988 = vadd.f32 %v4980, %v4986
    %v4989 = vmax.f32 %v4988, 0.0
    %v4990 = vld [vmem:[%s9] sm:$0x1]
    %v4992 = vlaneseq
    %v4993 = vshrl.u32 %v4992, 7
    %v4994 = vsub.s32 0, %v4993
    %v4995 = vrot.slane %v4990, %v4994
    %v4997 = vmul.f32 %v4989, %v4995
    %4998 = vadd.xlane.f32.xlu0 %v4997
    %v4999 = vpop.xlane.xlu0 %4998
    %v5000 = vld [vmem:[#allocation4] sm:$0x1]
    %v5002 = vlaneseq
    %v5003 = vshrl.u32 %v5002, 7
    %v5004 = vsub.s32 0, %v5003
    %v5005 = vrot.slane %v5000, %v5004
    %v5007 = vadd.f32 %v4999, %v5005
    %vm5008 = vcmask 7168
    %5009 = vst.msk [vmem:[%s11] sm:$0xff] %vm5008, %v5007
    // Predicated region
    $region66: #{tpu_custom_call.1} parent=1 // pred_check
      _
    $region67: #{tpu_custom_call.1} parent=1 // pred_check_branch
      %5011 = sbr.rel (0) target = $region69
    $region68: #{tpu_custom_call.1} parent=1 // pred_region
      _
    $region69: #{tpu_custom_call.1} parent=1 // pred_fallthru
      _
    // Predicated region
    $region70: #{tpu_custom_call.1} parent=1 // pred_check
      _
    $region71: #{tpu_custom_call.1} parent=1 // pred_check_branch
      %5013 = sbr.rel (0) target = $region73
    $region72: #{tpu_custom_call.1} parent=1 // pred_region
      _
    $region73: #{tpu_custom_call.1} parent=1 // pred_fallthru
      _
    %5014 = vsyncpa [#allocation6], 1
    %5015 = vsyncpa [#allocation8], 1
    %5016 = vsyncpa [#allocation11], 1

</llo_original>
